<compile_context>
chip_gen: v7x
topology: tpu7x:2x2x1
jax: 0.10.0
libtpu: 0.0.40
codegen_flags: <defaults>
</compile_context>

<pallas_src>
import functools
import math

import jax
import jax.numpy as jnp
from jax.experimental import pallas as pl
from jax.experimental.pallas import tpu as pltpu

LN_EPS = 1e-5  # torch.nn.LayerNorm default

# Set to jnp.bfloat16 for ~2x MXU throughput and half the weight DMA bytes on
# v5e/v6e/v7x (accumulation stays f32 either way).  Default f32 to preserve the
# PyTorch reference numerics.
MATMUL_DTYPE = jnp.float32

PARAM_NAMES = (
    # masked self-attention + LayerNorm1
    "sa_wq", "sa_bq", "sa_wk", "sa_bk", "sa_wv", "sa_bv", "sa_wo", "sa_bo",
    "ln1_g", "ln1_b",
    # cross-attention (over encoder states) + LayerNorm2
    "ca_wq", "ca_bq", "ca_wk", "ca_bk", "ca_wv", "ca_bv", "ca_wo", "ca_bo",
    "ln2_g", "ln2_b",
    # feed-forward + LayerNorm3
    "ff_w1", "ff_b1", "ff_w2", "ff_b2", "ln3_g", "ln3_b",
)


# ---------------------------------------------------------------------------
# In-kernel helpers
# ---------------------------------------------------------------------------
def _mm(a, b):
    """2-D matmul on the MXU with f32 accumulation."""
    return jnp.dot(a.astype(MATMUL_DTYPE), b.astype(MATMUL_DTYPE),
                   preferred_element_type=jnp.float32)


def _bmm(eq, a, b):
    """Head-batched matmul (leading batch dim) with f32 accumulation."""
    return jnp.einsum(eq, a.astype(MATMUL_DTYPE), b.astype(MATMUL_DTYPE),
                      preferred_element_type=jnp.float32)


def _layernorm(x, gamma, beta):
    mean = jnp.mean(x, axis=-1, keepdims=True)
    var = jnp.mean(jnp.square(x - mean), axis=-1, keepdims=True)
    return (x - mean) * jax.lax.rsqrt(var + LN_EPS) * gamma + beta


def _split_heads(x, num_heads):
    """(T, D) -> (H, T, D // H)."""
    t, d = x.shape
    dk = d // num_heads
    return pltpu.einshape("thd->htd", x.reshape(t, num_heads, dk))


def _attention(x_q, x_kv, bias, wq, bq, wk, bk, wv, bv, wo, bo, num_heads):
    """Multi-head attention.  `bias` is an additive mask (0 / -1e9) of shape
    (1 or Tq, Tk).  The 1/sqrt(d_k) scale is pre-folded into wq / bq."""
    q = _mm(x_q, wq) + bq            # (Tq, D)   (already scaled by 1/sqrt(dk))
    k = _mm(x_kv, wk) + bk           # (Tk, D)
    v = _mm(x_kv, wv) + bv           # (Tk, D)

    qh = _split_heads(q, num_heads)  # (H, Tq, dk)
    kh = _split_heads(k, num_heads)  # (H, Tk, dk)
    vh = _split_heads(v, num_heads)  # (H, Tk, dk)

    s = _bmm("hqd,hkd->hqk", qh, kh) + bias[None, :, :]      # (H, Tq, Tk)
    m = jnp.max(s, axis=-1, keepdims=True)
    p = jnp.exp(s - m)
    p = p * pl.reciprocal(jnp.sum(p, axis=-1, keepdims=True), approx=True)
    # TODO(synk): attention dropout treated as identity (eval mode).

    ctx = _bmm("hqk,hkd->hqd", p, vh)                        # (H, Tq, dk)
    tq, d = x_q.shape[0], q.shape[1]
    ctx = pltpu.einshape("hqd->qhd", ctx).reshape(tq, d)     # (Tq, D)
    return _mm(ctx, wo) + bo


# ---------------------------------------------------------------------------
# Fused whole-decoder kernel: one grid step = one (batch element, layer)
# ---------------------------------------------------------------------------
def decoder_kernel(x_dec_ref, x_enc_ref, bias_dec_ref, bias_enc_ref, *refs,
                   num_heads):
    n = len(PARAM_NAMES)
    w = {name: refs[i] for i, name in enumerate(PARAM_NAMES)}
    out_ref = refs[n]

    layer = pl.program_id(1)

    # Layer 0: load the decoder input into the VMEM-resident output block,
    # which then carries the activation across the layer grid axis.
    @pl.when(layer == 0)
    def _():
        out_ref[0] = x_dec_ref[0]

    x = out_ref[0]          # (T2, D) carried decoder activation
    x_enc = x_enc_ref[0]    # (T1, D)

    # --- masked self-attention + residual + LayerNorm1 ----------------------
    attn = _attention(x, x, bias_dec_ref[0],
                      w["sa_wq"][0], w["sa_bq"][0], w["sa_wk"][0], w["sa_bk"][0],
                      w["sa_wv"][0], w["sa_bv"][0], w["sa_wo"][0], w["sa_bo"][0],
                      num_heads)
    x = _layernorm(x + attn, w["ln1_g"][0], w["ln1_b"][0])

    # --- cross-attention over encoder states + residual + LayerNorm2 --------
    attn = _attention(x, x_enc, bias_enc_ref[0],
                      w["ca_wq"][0], w["ca_bq"][0], w["ca_wk"][0], w["ca_bk"][0],
                      w["ca_wv"][0], w["ca_bv"][0], w["ca_wo"][0], w["ca_bo"][0],
                      num_heads)
    x = _layernorm(x + attn, w["ln2_g"][0], w["ln2_b"][0])

    # --- feed-forward + residual + LayerNorm3 -------------------------------
    h = jnp.maximum(_mm(x, w["ff_w1"][0]) + w["ff_b1"][0], 0.0)   # ReLU
    y = _mm(h, w["ff_w2"][0]) + w["ff_b2"][0]
    x = _layernorm(x + y, w["ln3_g"][0], w["ln3_b"][0])

    out_ref[0] = x


# ---------------------------------------------------------------------------
# Wrapper
# ---------------------------------------------------------------------------
def decoder_forward(params, x_enc, x_dec, mask_enc, mask_dec, num_heads):
    """params: dict of per-layer-stacked arrays (leading dim = num_layers).
    Masks follow the torch module: mask_enc (B,1,1|T2,T1), mask_dec
    (B,1,1|T2,T2), bool, True = attend."""
    B, T1, D = x_enc.shape
    T2 = x_dec.shape[1]
    L = params["sa_wq"].shape[0]
    d_k = D // num_heads

    # Fold the 1/sqrt(d_k) score scale into the Q projections (free, one-time).
    p = dict(params)
    scale = 1.0 / math.sqrt(d_k)
    for name in ("sa_wq", "sa_bq", "ca_wq", "ca_bq"):
        p[name] = params[name] * scale

    # Boolean masks -> additive biases: 0 where attended, -1e9 where masked.
    bias_dec = (mask_dec[:, 0].astype(jnp.float32) - 1.0) * 1e9   # (B, 1|T2, T2)
    bias_enc = (mask_enc[:, 0].astype(jnp.float32) - 1.0) * 1e9   # (B, 1|T2, T1)

    def batch_spec(a):   # arrays indexed by the batch grid axis only
        return pl.BlockSpec((1,) + a.shape[1:], lambda b, l: (b, 0, 0))

    def layer_spec(a):   # per-layer stacked weights, indexed by the layer axis
        return pl.BlockSpec((1,) + a.shape[1:], lambda b, l: (l, 0, 0))

    kern = functools.partial(decoder_kernel, num_heads=num_heads)

    return pl.pallas_call(
        kern,
        out_shape=jax.ShapeDtypeStruct((B, T2, D), jnp.float32),
        grid=(B, L),
        in_specs=[batch_spec(x_dec), batch_spec(x_enc),
                  batch_spec(bias_dec), batch_spec(bias_enc)]
                 + [layer_spec(p[name]) for name in PARAM_NAMES],
        out_specs=pl.BlockSpec((1, T2, D), lambda b, l: (b, 0, 0)),
        compiler_params=pltpu.CompilerParams(
            dimension_semantics=("parallel", "arbitrary")),
    )(x_dec, x_enc, bias_dec, bias_enc, *[p[name] for name in PARAM_NAMES])


# ---------------------------------------------------------------------------
# Deterministic parameter init (synthetic; mirrors the module's shapes,
# stacked across layers: leading dim = num_layers)
# ---------------------------------------------------------------------------
def init_decoder_params(key, num_layers, d_model, d_ff):
    s = 0.05
    trailing = {
        "sa_wq": (d_model, d_model), "sa_bq": (1, d_model),
        "sa_wk": (d_model, d_model), "sa_bk": (1, d_model),
        "sa_wv": (d_model, d_model), "sa_bv": (1, d_model),
        "sa_wo": (d_model, d_model), "sa_bo": (1, d_model),
        "ln1_g": (1, d_model), "ln1_b": (1, d_model),
        "ca_wq": (d_model, d_model), "ca_bq": (1, d_model),
        "ca_wk": (d_model, d_model), "ca_bk": (1, d_model),
        "ca_wv": (d_model, d_model), "ca_bv": (1, d_model),
        "ca_wo": (d_model, d_model), "ca_bo": (1, d_model),
        "ln2_g": (1, d_model), "ln2_b": (1, d_model),
        "ff_w1": (d_model, d_ff), "ff_b1": (1, d_ff),
        "ff_w2": (d_ff, d_model), "ff_b2": (1, d_model),
        "ln3_g": (1, d_model), "ln3_b": (1, d_model),
    }
    keys = jax.random.split(key, len(PARAM_NAMES))
    params = {}
    for k, name in zip(keys, PARAM_NAMES):
        shape = (num_layers,) + trailing[name]
        if name.startswith("ln"):
            params[name] = (jnp.ones(shape, jnp.float32) if name.endswith("_g")
                            else jnp.zeros(shape, jnp.float32))
        else:
            params[name] = s * jax.random.normal(k, shape, jnp.float32)
    return params


if __name__ == "__main__":
    B, T1, T2 = 2, 8, 8          # batch, encoder time, decoder time
    D_MODEL, N_HEADS, D_FF, N_LAYERS = 32, 4, 64, 2

    key = jax.random.PRNGKey(0)
    key, kx1, kx2, kp = jax.random.split(key, 4)

    x_enc = jax.random.normal(kx1, (B, T1, D_MODEL), jnp.float32)
    x_dec = jax.random.normal(kx2, (B, T2, D_MODEL), jnp.float32)
    mask_enc = jnp.ones((B, 1, 1, T1), dtype=bool)                         # full attention
    mask_dec = jnp.broadcast_to(jnp.tril(jnp.ones((T2, T2), dtype=bool)),
                                (B, 1, T2, T2))                            # causal

    params = init_decoder_params(kp, N_LAYERS, D_MODEL, D_FF)

    out = decoder_forward(params, x_enc, x_dec, mask_enc, mask_dec, N_HEADS)
    out = jax.block_until_ready(out)

    assert out.shape == (B, T2, D_MODEL)
    assert bool(jnp.all(jnp.isfinite(out)))
    print("KERNEL_OK")
</pallas_src>

<mosaic_0001>
module attributes {stable_mosaic.version = 11 : i64} {
  func.func @decoder_kernel(%arg0: i32, %arg1: i32, %arg2: memref<1x8x32xf32, #tpu.memory_space<vmem>>, %arg3: memref<1x8x32xf32, #tpu.memory_space<vmem>>, %arg4: memref<1x8x8xf32, #tpu.memory_space<vmem>>, %arg5: memref<1x1x8xf32, #tpu.memory_space<vmem>>, %arg6: memref<1x32x32xf32, #tpu.memory_space<vmem>>, %arg7: memref<1x1x32xf32, #tpu.memory_space<vmem>>, %arg8: memref<1x32x32xf32, #tpu.memory_space<vmem>>, %arg9: memref<1x1x32xf32, #tpu.memory_space<vmem>>, %arg10: memref<1x32x32xf32, #tpu.memory_space<vmem>>, %arg11: memref<1x1x32xf32, #tpu.memory_space<vmem>>, %arg12: memref<1x32x32xf32, #tpu.memory_space<vmem>>, %arg13: memref<1x1x32xf32, #tpu.memory_space<vmem>>, %arg14: memref<1x1x32xf32, #tpu.memory_space<vmem>>, %arg15: memref<1x1x32xf32, #tpu.memory_space<vmem>>, %arg16: memref<1x32x32xf32, #tpu.memory_space<vmem>>, %arg17: memref<1x1x32xf32, #tpu.memory_space<vmem>>, %arg18: memref<1x32x32xf32, #tpu.memory_space<vmem>>, %arg19: memref<1x1x32xf32, #tpu.memory_space<vmem>>, %arg20: memref<1x32x32xf32, #tpu.memory_space<vmem>>, %arg21: memref<1x1x32xf32, #tpu.memory_space<vmem>>, %arg22: memref<1x32x32xf32, #tpu.memory_space<vmem>>, %arg23: memref<1x1x32xf32, #tpu.memory_space<vmem>>, %arg24: memref<1x1x32xf32, #tpu.memory_space<vmem>>, %arg25: memref<1x1x32xf32, #tpu.memory_space<vmem>>, %arg26: memref<1x32x64xf32, #tpu.memory_space<vmem>>, %arg27: memref<1x1x64xf32, #tpu.memory_space<vmem>>, %arg28: memref<1x64x32xf32, #tpu.memory_space<vmem>>, %arg29: memref<1x1x32xf32, #tpu.memory_space<vmem>>, %arg30: memref<1x1x32xf32, #tpu.memory_space<vmem>>, %arg31: memref<1x1x32xf32, #tpu.memory_space<vmem>>, %arg32: memref<1x8x32xf32, #tpu.memory_space<vmem>>) attributes {dimension_semantics = [#tpu.dimension_semantics<parallel>, #tpu.dimension_semantics<arbitrary>], iteration_bounds = array<i64: 2, 2>, scalar_prefetch = 0 : i64, scratch_operands = 0 : i64, tpu.core_type = #tpu.core_type<tc>, window_params = [{transform_indices = @transform_0, window_bounds = array<i64: 1, 8, 32>}, {transform_indices = @transform_1, window_bounds = array<i64: 1, 8, 32>}, {transform_indices = @transform_2, window_bounds = array<i64: 1, 8, 8>}, {transform_indices = @transform_3, window_bounds = array<i64: 1, 1, 8>}, {transform_indices = @transform_4, window_bounds = array<i64: 1, 32, 32>}, {transform_indices = @transform_5, window_bounds = array<i64: 1, 1, 32>}, {transform_indices = @transform_6, window_bounds = array<i64: 1, 32, 32>}, {transform_indices = @transform_7, window_bounds = array<i64: 1, 1, 32>}, {transform_indices = @transform_8, window_bounds = array<i64: 1, 32, 32>}, {transform_indices = @transform_9, window_bounds = array<i64: 1, 1, 32>}, {transform_indices = @transform_10, window_bounds = array<i64: 1, 32, 32>}, {transform_indices = @transform_11, window_bounds = array<i64: 1, 1, 32>}, {transform_indices = @transform_12, window_bounds = array<i64: 1, 1, 32>}, {transform_indices = @transform_13, window_bounds = array<i64: 1, 1, 32>}, {transform_indices = @transform_14, window_bounds = array<i64: 1, 32, 32>}, {transform_indices = @transform_15, window_bounds = array<i64: 1, 1, 32>}, {transform_indices = @transform_16, window_bounds = array<i64: 1, 32, 32>}, {transform_indices = @transform_17, window_bounds = array<i64: 1, 1, 32>}, {transform_indices = @transform_18, window_bounds = array<i64: 1, 32, 32>}, {transform_indices = @transform_19, window_bounds = array<i64: 1, 1, 32>}, {transform_indices = @transform_20, window_bounds = array<i64: 1, 32, 32>}, {transform_indices = @transform_21, window_bounds = array<i64: 1, 1, 32>}, {transform_indices = @transform_22, window_bounds = array<i64: 1, 1, 32>}, {transform_indices = @transform_23, window_bounds = array<i64: 1, 1, 32>}, {transform_indices = @transform_24, window_bounds = array<i64: 1, 32, 64>}, {transform_indices = @transform_25, window_bounds = array<i64: 1, 1, 64>}, {transform_indices = @transform_26, window_bounds = array<i64: 1, 64, 32>}, {transform_indices = @transform_27, window_bounds = array<i64: 1, 1, 32>}, {transform_indices = @transform_28, window_bounds = array<i64: 1, 1, 32>}, {transform_indices = @transform_29, window_bounds = array<i64: 1, 1, 32>}, {transform_indices = @transform_30, window_bounds = array<i64: 1, 8, 32>}]} {
    %c0_i32 = arith.constant 0 : i32
    %0 = arith.cmpi eq, %arg1, %c0_i32 : i32
    %1 = arith.extui %0 : i1 to i32
    %c0_i32_0 = arith.constant 0 : i32
    %2 = arith.cmpi ne, %1, %c0_i32_0 : i32
    scf.if %2 {
      %c0_126 = arith.constant 0 : index
      %c0_127 = arith.constant 0 : index
      %c0_128 = arith.constant 0 : index
      %213 = vector.load %arg2[%c0_126, %c0_127, %c0_128] : memref<1x8x32xf32, #tpu.memory_space<vmem>>, vector<1x8x32xf32>
      %214 = vector.shape_cast %213 : vector<1x8x32xf32> to vector<8x32xf32>
      %c0_129 = arith.constant 0 : index
      %c0_130 = arith.constant 0 : index
      %c0_131 = arith.constant 0 : index
      %215 = vector.load %arg32[%c0_129, %c0_130, %c0_131] : memref<1x8x32xf32, #tpu.memory_space<vmem>>, vector<1x8x32xf32>
      %216 = vector.shape_cast %215 : vector<1x8x32xf32> to vector<8x32xf32>
      %217 = vector.shape_cast %214 : vector<8x32xf32> to vector<1x8x32xf32>
      tpu.vector_store %arg32[%c0_129, %c0_130, %c0_131], %217 {strides = array<i32>} : memref<1x8x32xf32, #tpu.memory_space<vmem>>, vector<1x8x32xf32>,
    } else {
    }
    %c0 = arith.constant 0 : index
    %c0_1 = arith.constant 0 : index
    %c0_2 = arith.constant 0 : index
    %3 = vector.load %arg32[%c0, %c0_1, %c0_2] : memref<1x8x32xf32, #tpu.memory_space<vmem>>, vector<1x8x32xf32>
    %4 = vector.shape_cast %3 : vector<1x8x32xf32> to vector<8x32xf32>
    %c0_3 = arith.constant 0 : index
    %c0_4 = arith.constant 0 : index
    %c0_5 = arith.constant 0 : index
    %5 = vector.load %arg3[%c0_3, %c0_4, %c0_5] : memref<1x8x32xf32, #tpu.memory_space<vmem>>, vector<1x8x32xf32>
    %6 = vector.shape_cast %5 : vector<1x8x32xf32> to vector<8x32xf32>
    %c0_6 = arith.constant 0 : index
    %c0_7 = arith.constant 0 : index
    %c0_8 = arith.constant 0 : index
    %7 = vector.load %arg4[%c0_6, %c0_7, %c0_8] : memref<1x8x8xf32, #tpu.memory_space<vmem>>, vector<1x8x8xf32>
    %8 = vector.shape_cast %7 : vector<1x8x8xf32> to vector<8x8xf32>
    %c0_9 = arith.constant 0 : index
    %c0_10 = arith.constant 0 : index
    %c0_11 = arith.constant 0 : index
    %9 = vector.load %arg6[%c0_9, %c0_10, %c0_11] : memref<1x32x32xf32, #tpu.memory_space<vmem>>, vector<1x32x32xf32>
    %10 = vector.shape_cast %9 : vector<1x32x32xf32> to vector<32x32xf32>
    %c0_12 = arith.constant 0 : index
    %c0_13 = arith.constant 0 : index
    %c0_14 = arith.constant 0 : index
    %11 = vector.load %arg7[%c0_12, %c0_13, %c0_14] : memref<1x1x32xf32, #tpu.memory_space<vmem>>, vector<1x1x32xf32>
    %12 = vector.shape_cast %11 : vector<1x1x32xf32> to vector<1x32xf32>
    %c0_15 = arith.constant 0 : index
    %c0_16 = arith.constant 0 : index
    %c0_17 = arith.constant 0 : index
    %13 = vector.load %arg8[%c0_15, %c0_16, %c0_17] : memref<1x32x32xf32, #tpu.memory_space<vmem>>, vector<1x32x32xf32>
    %14 = vector.shape_cast %13 : vector<1x32x32xf32> to vector<32x32xf32>
    %c0_18 = arith.constant 0 : index
    %c0_19 = arith.constant 0 : index
    %c0_20 = arith.constant 0 : index
    %15 = vector.load %arg9[%c0_18, %c0_19, %c0_20] : memref<1x1x32xf32, #tpu.memory_space<vmem>>, vector<1x1x32xf32>
    %16 = vector.shape_cast %15 : vector<1x1x32xf32> to vector<1x32xf32>
    %c0_21 = arith.constant 0 : index
    %c0_22 = arith.constant 0 : index
    %c0_23 = arith.constant 0 : index
    %17 = vector.load %arg10[%c0_21, %c0_22, %c0_23] : memref<1x32x32xf32, #tpu.memory_space<vmem>>, vector<1x32x32xf32>
    %18 = vector.shape_cast %17 : vector<1x32x32xf32> to vector<32x32xf32>
    %c0_24 = arith.constant 0 : index
    %c0_25 = arith.constant 0 : index
    %c0_26 = arith.constant 0 : index
    %19 = vector.load %arg11[%c0_24, %c0_25, %c0_26] : memref<1x1x32xf32, #tpu.memory_space<vmem>>, vector<1x1x32xf32>
    %20 = vector.shape_cast %19 : vector<1x1x32xf32> to vector<1x32xf32>
    %c0_27 = arith.constant 0 : index
    %c0_28 = arith.constant 0 : index
    %c0_29 = arith.constant 0 : index
    %21 = vector.load %arg12[%c0_27, %c0_28, %c0_29] : memref<1x32x32xf32, #tpu.memory_space<vmem>>, vector<1x32x32xf32>
    %22 = vector.shape_cast %21 : vector<1x32x32xf32> to vector<32x32xf32>
    %c0_30 = arith.constant 0 : index
    %c0_31 = arith.constant 0 : index
    %c0_32 = arith.constant 0 : index
    %23 = vector.load %arg13[%c0_30, %c0_31, %c0_32] : memref<1x1x32xf32, #tpu.memory_space<vmem>>, vector<1x1x32xf32>
    %24 = vector.shape_cast %23 : vector<1x1x32xf32> to vector<1x32xf32>
    %cst = arith.constant dense<0.000000e+00> : vector<8x32xf32>
    %25 = tpu.matmul %4, %10, %cst {dimension_numbers = #tpu.dot_dimension_numbers<[1], [0], [0], [1], [0, 0, 1, 1], [], []>} : vector<8x32xf32>, vector<32x32xf32>, vector<8x32xf32> -> vector<8x32xf32>
    %26 = vector.broadcast %12 : vector<1x32xf32> to vector<8x32xf32>
    %27 = arith.addf %25, %26 : vector<8x32xf32>
    %cst_33 = arith.constant dense<0.000000e+00> : vector<8x32xf32>
    %28 = tpu.matmul %4, %14, %cst_33 {dimension_numbers = #tpu.dot_dimension_numbers<[1], [0], [0], [1], [0, 0, 1, 1], [], []>} : vector<8x32xf32>, vector<32x32xf32>, vector<8x32xf32> -> vector<8x32xf32>
    %29 = vector.broadcast %16 : vector<1x32xf32> to vector<8x32xf32>
    %30 = arith.addf %28, %29 : vector<8x32xf32>
    %cst_34 = arith.constant dense<0.000000e+00> : vector<8x32xf32>
    %31 = tpu.matmul %4, %18, %cst_34 {dimension_numbers = #tpu.dot_dimension_numbers<[1], [0], [0], [1], [0, 0, 1, 1], [], []>} : vector<8x32xf32>, vector<32x32xf32>, vector<8x32xf32> -> vector<8x32xf32>
    %32 = vector.broadcast %20 : vector<1x32xf32> to vector<8x32xf32>
    %33 = arith.addf %31, %32 : vector<8x32xf32>
    %34 = vector.shape_cast %27 : vector<8x32xf32> to vector<8x4x8xf32>
    %35 = tpu.transpose %34, [1, 0, 2] : vector<8x4x8xf32> -> vector<4x8x8xf32>
    %36 = vector.shape_cast %30 : vector<8x32xf32> to vector<8x4x8xf32>
    %37 = tpu.transpose %36, [1, 0, 2] : vector<8x4x8xf32> -> vector<4x8x8xf32>
    %38 = vector.shape_cast %33 : vector<8x32xf32> to vector<8x4x8xf32>
    %39 = tpu.transpose %38, [1, 0, 2] : vector<8x4x8xf32> -> vector<4x8x8xf32>
    "tpu.trace_start"() <{level = 10 : i32, message = "hqd,hkd->hqk"}> : () -> ()
    %cst_35 = arith.constant dense<0.000000e+00> : vector<4x8x8xf32>
    %40 = tpu.matmul %35, %37, %cst_35 {dimension_numbers = #tpu.dot_dimension_numbers<[2], [2], [1], [1], [0, 0, 0, 1, 1, 1], [0], [0]>} : vector<4x8x8xf32>, vector<4x8x8xf32>, vector<4x8x8xf32> -> vector<4x8x8xf32>
    "tpu.trace_stop"() : () -> ()
    %41 = vector.shape_cast %8 : vector<8x8xf32> to vector<1x8x8xf32>
    %42 = vector.broadcast %41 : vector<1x8x8xf32> to vector<4x8x8xf32>
    %43 = arith.addf %40, %42 : vector<4x8x8xf32>
    %cst_36 = arith.constant dense<0xFF800000> : vector<4x8xf32>
    %44 = vector.multi_reduction <maximumf>, %43, %cst_36 [2] : vector<4x8x8xf32> to vector<4x8xf32>
    %45 = vector.shape_cast %44 : vector<4x8xf32> to vector<4x8x1xf32>
    %46 = vector.broadcast %45 : vector<4x8x1xf32> to vector<4x8x8xf32>
    %47 = arith.subf %43, %46 : vector<4x8x8xf32>
    %48 = math.exp %47 : vector<4x8x8xf32>
    %cst_37 = arith.constant dense<0.000000e+00> : vector<4x8xf32>
    %49 = vector.multi_reduction <add>, %48, %cst_37 [2] : vector<4x8x8xf32> to vector<4x8xf32>
    %50 = vector.shape_cast %49 : vector<4x8xf32> to vector<4x8x1xf32>
    %51 = tpu.reciprocal %50 {approx = true} : vector<4x8x1xf32> -> vector<4x8x1xf32>
    %52 = vector.broadcast %51 : vector<4x8x1xf32> to vector<4x8x8xf32>
    %53 = arith.mulf %48, %52 : vector<4x8x8xf32>
    "tpu.trace_start"() <{level = 10 : i32, message = "hqk,hkd->hqd"}> : () -> ()
    %cst_38 = arith.constant dense<0.000000e+00> : vector<4x8x8xf32>
    %54 = tpu.matmul %53, %39, %cst_38 {dimension_numbers = #tpu.dot_dimension_numbers<[2], [1], [1], [2], [0, 0, 0, 1, 1, 2], [0], [0]>} : vector<4x8x8xf32>, vector<4x8x8xf32>, vector<4x8x8xf32> -> vector<4x8x8xf32>
    "tpu.trace_stop"() : () -> ()
    %55 = tpu.transpose %54, [1, 0, 2] : vector<4x8x8xf32> -> vector<8x4x8xf32>
    %56 = vector.shape_cast %55 : vector<8x4x8xf32> to vector<8x32xf32>
    %cst_39 = arith.constant dense<0.000000e+00> : vector<8x32xf32>
    %57 = tpu.matmul %56, %22, %cst_39 {dimension_numbers = #tpu.dot_dimension_numbers<[1], [0], [0], [1], [0, 0, 1, 1], [], []>} : vector<8x32xf32>, vector<32x32xf32>, vector<8x32xf32> -> vector<8x32xf32>
    %58 = vector.broadcast %24 : vector<1x32xf32> to vector<8x32xf32>
    %59 = arith.addf %57, %58 : vector<8x32xf32>
    %60 = arith.addf %4, %59 : vector<8x32xf32>
    %c0_40 = arith.constant 0 : index
    %c0_41 = arith.constant 0 : index
    %c0_42 = arith.constant 0 : index
    %61 = vector.load %arg14[%c0_40, %c0_41, %c0_42] : memref<1x1x32xf32, #tpu.memory_space<vmem>>, vector<1x1x32xf32>
    %62 = vector.shape_cast %61 : vector<1x1x32xf32> to vector<1x32xf32>
    %c0_43 = arith.constant 0 : index
    %c0_44 = arith.constant 0 : index
    %c0_45 = arith.constant 0 : index
    %63 = vector.load %arg15[%c0_43, %c0_44, %c0_45] : memref<1x1x32xf32, #tpu.memory_space<vmem>>, vector<1x1x32xf32>
    %64 = vector.shape_cast %63 : vector<1x1x32xf32> to vector<1x32xf32>
    %cst_46 = arith.constant dense<0.000000e+00> : vector<8xf32>
    %65 = vector.multi_reduction <add>, %60, %cst_46 [1] : vector<8x32xf32> to vector<8xf32>
    %66 = vector.shape_cast %65 : vector<8xf32> to vector<8x1xf32>
    %cst_47 = arith.constant 3.200000e+01 : f32
    %67 = vector.broadcast %cst_47 : f32 to vector<8x1xf32>
    %68 = arith.divf %66, %67 : vector<8x1xf32>
    %69 = vector.broadcast %68 : vector<8x1xf32> to vector<8x32xf32>
    %70 = arith.subf %60, %69 : vector<8x32xf32>
    %71 = arith.mulf %70, %70 : vector<8x32xf32>
    %cst_48 = arith.constant dense<0.000000e+00> : vector<8xf32>
    %72 = vector.multi_reduction <add>, %71, %cst_48 [1] : vector<8x32xf32> to vector<8xf32>
    %73 = vector.shape_cast %72 : vector<8xf32> to vector<8x1xf32>
    %cst_49 = arith.constant 3.200000e+01 : f32
    %74 = vector.broadcast %cst_49 : f32 to vector<8x1xf32>
    %75 = arith.divf %73, %74 : vector<8x1xf32>
    %76 = vector.broadcast %68 : vector<8x1xf32> to vector<8x32xf32>
    %77 = arith.subf %60, %76 : vector<8x32xf32>
    %cst_50 = arith.constant 9.99999974E-6 : f32
    %78 = vector.broadcast %cst_50 : f32 to vector<8x1xf32>
    %79 = arith.addf %75, %78 : vector<8x1xf32>
    %80 = math.rsqrt %79 : vector<8x1xf32>
    %81 = vector.broadcast %80 : vector<8x1xf32> to vector<8x32xf32>
    %82 = arith.mulf %77, %81 : vector<8x32xf32>
    %83 = vector.broadcast %62 : vector<1x32xf32> to vector<8x32xf32>
    %84 = arith.mulf %82, %83 : vector<8x32xf32>
    %85 = vector.broadcast %64 : vector<1x32xf32> to vector<8x32xf32>
    %86 = arith.addf %84, %85 : vector<8x32xf32>
    %c0_51 = arith.constant 0 : index
    %c0_52 = arith.constant 0 : index
    %c0_53 = arith.constant 0 : index
    %87 = vector.load %arg5[%c0_51, %c0_52, %c0_53] : memref<1x1x8xf32, #tpu.memory_space<vmem>>, vector<1x1x8xf32>
    %88 = vector.shape_cast %87 : vector<1x1x8xf32> to vector<1x8xf32>
    %c0_54 = arith.constant 0 : index
    %c0_55 = arith.constant 0 : index
    %c0_56 = arith.constant 0 : index
    %89 = vector.load %arg16[%c0_54, %c0_55, %c0_56] : memref<1x32x32xf32, #tpu.memory_space<vmem>>, vector<1x32x32xf32>
    %90 = vector.shape_cast %89 : vector<1x32x32xf32> to vector<32x32xf32>
    %c0_57 = arith.constant 0 : index
    %c0_58 = arith.constant 0 : index
    %c0_59 = arith.constant 0 : index
    %91 = vector.load %arg17[%c0_57, %c0_58, %c0_59] : memref<1x1x32xf32, #tpu.memory_space<vmem>>, vector<1x1x32xf32>
    %92 = vector.shape_cast %91 : vector<1x1x32xf32> to vector<1x32xf32>
    %c0_60 = arith.constant 0 : index
    %c0_61 = arith.constant 0 : index
    %c0_62 = arith.constant 0 : index
    %93 = vector.load %arg18[%c0_60, %c0_61, %c0_62] : memref<1x32x32xf32, #tpu.memory_space<vmem>>, vector<1x32x32xf32>
    %94 = vector.shape_cast %93 : vector<1x32x32xf32> to vector<32x32xf32>
    %c0_63 = arith.constant 0 : index
    %c0_64 = arith.constant 0 : index
    %c0_65 = arith.constant 0 : index
    %95 = vector.load %arg19[%c0_63, %c0_64, %c0_65] : memref<1x1x32xf32, #tpu.memory_space<vmem>>, vector<1x1x32xf32>
    %96 = vector.shape_cast %95 : vector<1x1x32xf32> to vector<1x32xf32>
    %c0_66 = arith.constant 0 : index
    %c0_67 = arith.constant 0 : index
    %c0_68 = arith.constant 0 : index
    %97 = vector.load %arg20[%c0_66, %c0_67, %c0_68] : memref<1x32x32xf32, #tpu.memory_space<vmem>>, vector<1x32x32xf32>
    %98 = vector.shape_cast %97 : vector<1x32x32xf32> to vector<32x32xf32>
    %c0_69 = arith.constant 0 : index
    %c0_70 = arith.constant 0 : index
    %c0_71 = arith.constant 0 : index
    %99 = vector.load %arg21[%c0_69, %c0_70, %c0_71] : memref<1x1x32xf32, #tpu.memory_space<vmem>>, vector<1x1x32xf32>
    %100 = vector.shape_cast %99 : vector<1x1x32xf32> to vector<1x32xf32>
    %c0_72 = arith.constant 0 : index
    %c0_73 = arith.constant 0 : index
    %c0_74 = arith.constant 0 : index
    %101 = vector.load %arg22[%c0_72, %c0_73, %c0_74] : memref<1x32x32xf32, #tpu.memory_space<vmem>>, vector<1x32x32xf32>
    %102 = vector.shape_cast %101 : vector<1x32x32xf32> to vector<32x32xf32>
    %c0_75 = arith.constant 0 : index
    %c0_76 = arith.constant 0 : index
    %c0_77 = arith.constant 0 : index
    %103 = vector.load %arg23[%c0_75, %c0_76, %c0_77] : memref<1x1x32xf32, #tpu.memory_space<vmem>>, vector<1x1x32xf32>
    %104 = vector.shape_cast %103 : vector<1x1x32xf32> to vector<1x32xf32>
    %cst_78 = arith.constant dense<0.000000e+00> : vector<8x32xf32>
    %105 = tpu.matmul %86, %90, %cst_78 {dimension_numbers = #tpu.dot_dimension_numbers<[1], [0], [0], [1], [0, 0, 1, 1], [], []>} : vector<8x32xf32>, vector<32x32xf32>, vector<8x32xf32> -> vector<8x32xf32>
    %106 = vector.broadcast %92 : vector<1x32xf32> to vector<8x32xf32>
    %107 = arith.addf %105, %106 : vector<8x32xf32>
    %cst_79 = arith.constant dense<0.000000e+00> : vector<8x32xf32>
    %108 = tpu.matmul %6, %94, %cst_79 {dimension_numbers = #tpu.dot_dimension_numbers<[1], [0], [0], [1], [0, 0, 1, 1], [], []>} : vector<8x32xf32>, vector<32x32xf32>, vector<8x32xf32> -> vector<8x32xf32>
    %109 = vector.broadcast %96 : vector<1x32xf32> to vector<8x32xf32>
    %110 = arith.addf %108, %109 : vector<8x32xf32>
    %cst_80 = arith.constant dense<0.000000e+00> : vector<8x32xf32>
    %111 = tpu.matmul %6, %98, %cst_80 {dimension_numbers = #tpu.dot_dimension_numbers<[1], [0], [0], [1], [0, 0, 1, 1], [], []>} : vector<8x32xf32>, vector<32x32xf32>, vector<8x32xf32> -> vector<8x32xf32>
    %112 = vector.broadcast %100 : vector<1x32xf32> to vector<8x32xf32>
    %113 = arith.addf %111, %112 : vector<8x32xf32>
    %114 = vector.shape_cast %107 : vector<8x32xf32> to vector<8x4x8xf32>
    %115 = tpu.transpose %114, [1, 0, 2] : vector<8x4x8xf32> -> vector<4x8x8xf32>
    %116 = vector.shape_cast %110 : vector<8x32xf32> to vector<8x4x8xf32>
    %117 = tpu.transpose %116, [1, 0, 2] : vector<8x4x8xf32> -> vector<4x8x8xf32>
    %118 = vector.shape_cast %113 : vector<8x32xf32> to vector<8x4x8xf32>
    %119 = tpu.transpose %118, [1, 0, 2] : vector<8x4x8xf32> -> vector<4x8x8xf32>
    "tpu.trace_start"() <{level = 10 : i32, message = "hqd,hkd->hqk"}> : () -> ()
    %cst_81 = arith.constant dense<0.000000e+00> : vector<4x8x8xf32>
    %120 = tpu.matmul %115, %117, %cst_81 {dimension_numbers = #tpu.dot_dimension_numbers<[2], [2], [1], [1], [0, 0, 0, 1, 1, 1], [0], [0]>} : vector<4x8x8xf32>, vector<4x8x8xf32>, vector<4x8x8xf32> -> vector<4x8x8xf32>
    "tpu.trace_stop"() : () -> ()
    %121 = vector.shape_cast %88 : vector<1x8xf32> to vector<1x1x8xf32>
    %122 = vector.broadcast %121 : vector<1x1x8xf32> to vector<4x8x8xf32>
    %123 = arith.addf %120, %122 : vector<4x8x8xf32>
    %cst_82 = arith.constant dense<0xFF800000> : vector<4x8xf32>
    %124 = vector.multi_reduction <maximumf>, %123, %cst_82 [2] : vector<4x8x8xf32> to vector<4x8xf32>
    %125 = vector.shape_cast %124 : vector<4x8xf32> to vector<4x8x1xf32>
    %126 = vector.broadcast %125 : vector<4x8x1xf32> to vector<4x8x8xf32>
    %127 = arith.subf %123, %126 : vector<4x8x8xf32>
    %128 = math.exp %127 : vector<4x8x8xf32>
    %cst_83 = arith.constant dense<0.000000e+00> : vector<4x8xf32>
    %129 = vector.multi_reduction <add>, %128, %cst_83 [2] : vector<4x8x8xf32> to vector<4x8xf32>
    %130 = vector.shape_cast %129 : vector<4x8xf32> to vector<4x8x1xf32>
    %131 = tpu.reciprocal %130 {approx = true} : vector<4x8x1xf32> -> vector<4x8x1xf32>
    %132 = vector.broadcast %131 : vector<4x8x1xf32> to vector<4x8x8xf32>
    %133 = arith.mulf %128, %132 : vector<4x8x8xf32>
    "tpu.trace_start"() <{level = 10 : i32, message = "hqk,hkd->hqd"}> : () -> ()
    %cst_84 = arith.constant dense<0.000000e+00> : vector<4x8x8xf32>
    %134 = tpu.matmul %133, %119, %cst_84 {dimension_numbers = #tpu.dot_dimension_numbers<[2], [1], [1], [2], [0, 0, 0, 1, 1, 2], [0], [0]>} : vector<4x8x8xf32>, vector<4x8x8xf32>, vector<4x8x8xf32> -> vector<4x8x8xf32>
    "tpu.trace_stop"() : () -> ()
    %135 = tpu.transpose %134, [1, 0, 2] : vector<4x8x8xf32> -> vector<8x4x8xf32>
    %136 = vector.shape_cast %135 : vector<8x4x8xf32> to vector<8x32xf32>
    %cst_85 = arith.constant dense<0.000000e+00> : vector<8x32xf32>
    %137 = tpu.matmul %136, %102, %cst_85 {dimension_numbers = #tpu.dot_dimension_numbers<[1], [0], [0], [1], [0, 0, 1, 1], [], []>} : vector<8x32xf32>, vector<32x32xf32>, vector<8x32xf32> -> vector<8x32xf32>
    %138 = vector.broadcast %104 : vector<1x32xf32> to vector<8x32xf32>
    %139 = arith.addf %137, %138 : vector<8x32xf32>
    %140 = arith.addf %86, %139 : vector<8x32xf32>
    %c0_86 = arith.constant 0 : index
    %c0_87 = arith.constant 0 : index
    %c0_88 = arith.constant 0 : index
    %141 = vector.load %arg24[%c0_86, %c0_87, %c0_88] : memref<1x1x32xf32, #tpu.memory_space<vmem>>, vector<1x1x32xf32>
    %142 = vector.shape_cast %141 : vector<1x1x32xf32> to vector<1x32xf32>
    %c0_89 = arith.constant 0 : index
    %c0_90 = arith.constant 0 : index
    %c0_91 = arith.constant 0 : index
    %143 = vector.load %arg25[%c0_89, %c0_90, %c0_91] : memref<1x1x32xf32, #tpu.memory_space<vmem>>, vector<1x1x32xf32>
    %144 = vector.shape_cast %143 : vector<1x1x32xf32> to vector<1x32xf32>
    %cst_92 = arith.constant dense<0.000000e+00> : vector<8xf32>
    %145 = vector.multi_reduction <add>, %140, %cst_92 [1] : vector<8x32xf32> to vector<8xf32>
    %146 = vector.shape_cast %145 : vector<8xf32> to vector<8x1xf32>
    %cst_93 = arith.constant 3.200000e+01 : f32
    %147 = vector.broadcast %cst_93 : f32 to vector<8x1xf32>
    %148 = arith.divf %146, %147 : vector<8x1xf32>
    %149 = vector.broadcast %148 : vector<8x1xf32> to vector<8x32xf32>
    %150 = arith.subf %140, %149 : vector<8x32xf32>
    %151 = arith.mulf %150, %150 : vector<8x32xf32>
    %cst_94 = arith.constant dense<0.000000e+00> : vector<8xf32>
    %152 = vector.multi_reduction <add>, %151, %cst_94 [1] : vector<8x32xf32> to vector<8xf32>
    %153 = vector.shape_cast %152 : vector<8xf32> to vector<8x1xf32>
    %cst_95 = arith.constant 3.200000e+01 : f32
    %154 = vector.broadcast %cst_95 : f32 to vector<8x1xf32>
    %155 = arith.divf %153, %154 : vector<8x1xf32>
    %156 = vector.broadcast %148 : vector<8x1xf32> to vector<8x32xf32>
    %157 = arith.subf %140, %156 : vector<8x32xf32>
    %cst_96 = arith.constant 9.99999974E-6 : f32
    %158 = vector.broadcast %cst_96 : f32 to vector<8x1xf32>
    %159 = arith.addf %155, %158 : vector<8x1xf32>
    %160 = math.rsqrt %159 : vector<8x1xf32>
    %161 = vector.broadcast %160 : vector<8x1xf32> to vector<8x32xf32>
    %162 = arith.mulf %157, %161 : vector<8x32xf32>
    %163 = vector.broadcast %142 : vector<1x32xf32> to vector<8x32xf32>
    %164 = arith.mulf %162, %163 : vector<8x32xf32>
    %165 = vector.broadcast %144 : vector<1x32xf32> to vector<8x32xf32>
    %166 = arith.addf %164, %165 : vector<8x32xf32>
    %c0_97 = arith.constant 0 : index
    %c0_98 = arith.constant 0 : index
    %c0_99 = arith.constant 0 : index
    %167 = vector.load %arg26[%c0_97, %c0_98, %c0_99] : memref<1x32x64xf32, #tpu.memory_space<vmem>>, vector<1x32x64xf32>
    %168 = vector.shape_cast %167 : vector<1x32x64xf32> to vector<32x64xf32>
    %cst_100 = arith.constant dense<0.000000e+00> : vector<8x64xf32>
    %169 = tpu.matmul %166, %168, %cst_100 {dimension_numbers = #tpu.dot_dimension_numbers<[1], [0], [0], [1], [0, 0, 1, 1], [], []>} : vector<8x32xf32>, vector<32x64xf32>, vector<8x64xf32> -> vector<8x64xf32>
    %c0_101 = arith.constant 0 : index
    %c0_102 = arith.constant 0 : index
    %c0_103 = arith.constant 0 : index
    %170 = vector.load %arg27[%c0_101, %c0_102, %c0_103] : memref<1x1x64xf32, #tpu.memory_space<vmem>>, vector<1x1x64xf32>
    %171 = vector.shape_cast %170 : vector<1x1x64xf32> to vector<1x64xf32>
    %172 = vector.broadcast %171 : vector<1x64xf32> to vector<8x64xf32>
    %173 = arith.addf %169, %172 : vector<8x64xf32>
    %cst_104 = arith.constant 0.000000e+00 : f32
    %174 = vector.broadcast %cst_104 : f32 to vector<8x64xf32>
    %175 = arith.maximumf %173, %174 : vector<8x64xf32>
    %c0_105 = arith.constant 0 : index
    %c0_106 = arith.constant 0 : index
    %c0_107 = arith.constant 0 : index
    %176 = vector.load %arg28[%c0_105, %c0_106, %c0_107] : memref<1x64x32xf32, #tpu.memory_space<vmem>>, vector<1x64x32xf32>
    %177 = vector.shape_cast %176 : vector<1x64x32xf32> to vector<64x32xf32>
    %cst_108 = arith.constant dense<0.000000e+00> : vector<8x32xf32>
    %178 = tpu.matmul %175, %177, %cst_108 {dimension_numbers = #tpu.dot_dimension_numbers<[1], [0], [0], [1], [0, 0, 1, 1], [], []>} : vector<8x64xf32>, vector<64x32xf32>, vector<8x32xf32> -> vector<8x32xf32>
    %c0_109 = arith.constant 0 : index
    %c0_110 = arith.constant 0 : index
    %c0_111 = arith.constant 0 : index
    %179 = vector.load %arg29[%c0_109, %c0_110, %c0_111] : memref<1x1x32xf32, #tpu.memory_space<vmem>>, vector<1x1x32xf32>
    %180 = vector.shape_cast %179 : vector<1x1x32xf32> to vector<1x32xf32>
    %181 = vector.broadcast %180 : vector<1x32xf32> to vector<8x32xf32>
    %182 = arith.addf %178, %181 : vector<8x32xf32>
    %183 = arith.addf %166, %182 : vector<8x32xf32>
    %c0_112 = arith.constant 0 : index
    %c0_113 = arith.constant 0 : index
    %c0_114 = arith.constant 0 : index
    %184 = vector.load %arg30[%c0_112, %c0_113, %c0_114] : memref<1x1x32xf32, #tpu.memory_space<vmem>>, vector<1x1x32xf32>
    %185 = vector.shape_cast %184 : vector<1x1x32xf32> to vector<1x32xf32>
    %c0_115 = arith.constant 0 : index
    %c0_116 = arith.constant 0 : index
    %c0_117 = arith.constant 0 : index
    %186 = vector.load %arg31[%c0_115, %c0_116, %c0_117] : memref<1x1x32xf32, #tpu.memory_space<vmem>>, vector<1x1x32xf32>
    %187 = vector.shape_cast %186 : vector<1x1x32xf32> to vector<1x32xf32>
    %cst_118 = arith.constant dense<0.000000e+00> : vector<8xf32>
    %188 = vector.multi_reduction <add>, %183, %cst_118 [1] : vector<8x32xf32> to vector<8xf32>
    %189 = vector.shape_cast %188 : vector<8xf32> to vector<8x1xf32>
    %cst_119 = arith.constant 3.200000e+01 : f32
    %190 = vector.broadcast %cst_119 : f32 to vector<8x1xf32>
    %191 = arith.divf %189, %190 : vector<8x1xf32>
    %192 = vector.broadcast %191 : vector<8x1xf32> to vector<8x32xf32>
    %193 = arith.subf %183, %192 : vector<8x32xf32>
    %194 = arith.mulf %193, %193 : vector<8x32xf32>
    %cst_120 = arith.constant dense<0.000000e+00> : vector<8xf32>
    %195 = vector.multi_reduction <add>, %194, %cst_120 [1] : vector<8x32xf32> to vector<8xf32>
    %196 = vector.shape_cast %195 : vector<8xf32> to vector<8x1xf32>
    %cst_121 = arith.constant 3.200000e+01 : f32
    %197 = vector.broadcast %cst_121 : f32 to vector<8x1xf32>
    %198 = arith.divf %196, %197 : vector<8x1xf32>
    %199 = vector.broadcast %191 : vector<8x1xf32> to vector<8x32xf32>
    %200 = arith.subf %183, %199 : vector<8x32xf32>
    %cst_122 = arith.constant 9.99999974E-6 : f32
    %201 = vector.broadcast %cst_122 : f32 to vector<8x1xf32>
    %202 = arith.addf %198, %201 : vector<8x1xf32>
    %203 = math.rsqrt %202 : vector<8x1xf32>
    %204 = vector.broadcast %203 : vector<8x1xf32> to vector<8x32xf32>
    %205 = arith.mulf %200, %204 : vector<8x32xf32>
    %206 = vector.broadcast %185 : vector<1x32xf32> to vector<8x32xf32>
    %207 = arith.mulf %205, %206 : vector<8x32xf32>
    %208 = vector.broadcast %187 : vector<1x32xf32> to vector<8x32xf32>
    %209 = arith.addf %207, %208 : vector<8x32xf32>
    %c0_123 = arith.constant 0 : index
    %c0_124 = arith.constant 0 : index
    %c0_125 = arith.constant 0 : index
    %210 = vector.load %arg32[%c0_123, %c0_124, %c0_125] : memref<1x8x32xf32, #tpu.memory_space<vmem>>, vector<1x8x32xf32>
    %211 = vector.shape_cast %210 : vector<1x8x32xf32> to vector<8x32xf32>
    %212 = vector.shape_cast %209 : vector<8x32xf32> to vector<1x8x32xf32>
    tpu.vector_store %arg32[%c0_123, %c0_124, %c0_125], %212 {strides = array<i32>} : memref<1x8x32xf32, #tpu.memory_space<vmem>>, vector<1x8x32xf32>,
    return
  }
  func.func @transform_0(%arg0: i32, %arg1: i32) -> (i32, i32, i32) {
    %c0_i32 = arith.constant 0 : i32
    %c0_i32_0 = arith.constant 0 : i32
    %c0_i32_1 = arith.constant 0 : i32
    return %arg0, %c0_i32, %c0_i32_0 : i32, i32, i32
  }
  func.func @transform_1(%arg0: i32, %arg1: i32) -> (i32, i32, i32) {
    %c0_i32 = arith.constant 0 : i32
    %c0_i32_0 = arith.constant 0 : i32
    %c0_i32_1 = arith.constant 0 : i32
    return %arg0, %c0_i32, %c0_i32_0 : i32, i32, i32
  }
  func.func @transform_2(%arg0: i32, %arg1: i32) -> (i32, i32, i32) {
    %c0_i32 = arith.constant 0 : i32
    %c0_i32_0 = arith.constant 0 : i32
    %c0_i32_1 = arith.constant 0 : i32
    return %arg0, %c0_i32, %c0_i32_0 : i32, i32, i32
  }
  func.func @transform_3(%arg0: i32, %arg1: i32) -> (i32, i32, i32) {
    %c0_i32 = arith.constant 0 : i32
    %c0_i32_0 = arith.constant 0 : i32
    %c0_i32_1 = arith.constant 0 : i32
    return %arg0, %c0_i32, %c0_i32_0 : i32, i32, i32
  }
  func.func @transform_4(%arg0: i32, %arg1: i32) -> (i32, i32, i32) {
    %c0_i32 = arith.constant 0 : i32
    %c0_i32_0 = arith.constant 0 : i32
    %c0_i32_1 = arith.constant 0 : i32
    return %arg1, %c0_i32, %c0_i32_0 : i32, i32, i32
  }
  func.func @transform_5(%arg0: i32, %arg1: i32) -> (i32, i32, i32) {
    %c0_i32 = arith.constant 0 : i32
    %c0_i32_0 = arith.constant 0 : i32
    %c0_i32_1 = arith.constant 0 : i32
    return %arg1, %c0_i32, %c0_i32_0 : i32, i32, i32
  }
  func.func @transform_6(%arg0: i32, %arg1: i32) -> (i32, i32, i32) {
    %c0_i32 = arith.constant 0 : i32
    %c0_i32_0 = arith.constant 0 : i32
    %c0_i32_1 = arith.constant 0 : i32
    return %arg1, %c0_i32, %c0_i32_0 : i32, i32, i32
  }
  func.func @transform_7(%arg0: i32, %arg1: i32) -> (i32, i32, i32) {
    %c0_i32 = arith.constant 0 : i32
    %c0_i32_0 = arith.constant 0 : i32
    %c0_i32_1 = arith.constant 0 : i32
    return %arg1, %c0_i32, %c0_i32_0 : i32, i32, i32
  }
  func.func @transform_8(%arg0: i32, %arg1: i32) -> (i32, i32, i32) {
    %c0_i32 = arith.constant 0 : i32
    %c0_i32_0 = arith.constant 0 : i32
    %c0_i32_1 = arith.constant 0 : i32
    return %arg1, %c0_i32, %c0_i32_0 : i32, i32, i32
  }
  func.func @transform_9(%arg0: i32, %arg1: i32) -> (i32, i32, i32) {
    %c0_i32 = arith.constant 0 : i32
    %c0_i32_0 = arith.constant 0 : i32
    %c0_i32_1 = arith.constant 0 : i32
    return %arg1, %c0_i32, %c0_i32_0 : i32, i32, i32
  }
  func.func @transform_10(%arg0: i32, %arg1: i32) -> (i32, i32, i32) {
    %c0_i32 = arith.constant 0 : i32
    %c0_i32_0 = arith.constant 0 : i32
    %c0_i32_1 = arith.constant 0 : i32
    return %arg1, %c0_i32, %c0_i32_0 : i32, i32, i32
  }
  func.func @transform_11(%arg0: i32, %arg1: i32) -> (i32, i32, i32) {
    %c0_i32 = arith.constant 0 : i32
    %c0_i32_0 = arith.constant 0 : i32
    %c0_i32_1 = arith.constant 0 : i32
    return %arg1, %c0_i32, %c0_i32_0 : i32, i32, i32
  }
  func.func @transform_12(%arg0: i32, %arg1: i32) -> (i32, i32, i32) {
    %c0_i32 = arith.constant 0 : i32
    %c0_i32_0 = arith.constant 0 : i32
    %c0_i32_1 = arith.constant 0 : i32
    return %arg1, %c0_i32, %c0_i32_0 : i32, i32, i32
  }
  func.func @transform_13(%arg0: i32, %arg1: i32) -> (i32, i32, i32) {
    %c0_i32 = arith.constant 0 : i32
    %c0_i32_0 = arith.constant 0 : i32
    %c0_i32_1 = arith.constant 0 : i32
    return %arg1, %c0_i32, %c0_i32_0 : i32, i32, i32
  }
  func.func @transform_14(%arg0: i32, %arg1: i32) -> (i32, i32, i32) {
    %c0_i32 = arith.constant 0 : i32
    %c0_i32_0 = arith.constant 0 : i32
    %c0_i32_1 = arith.constant 0 : i32
    return %arg1, %c0_i32, %c0_i32_0 : i32, i32, i32
  }
  func.func @transform_15(%arg0: i32, %arg1: i32) -> (i32, i32, i32) {
    %c0_i32 = arith.constant 0 : i32
    %c0_i32_0 = arith.constant 0 : i32
    %c0_i32_1 = arith.constant 0 : i32
    return %arg1, %c0_i32, %c0_i32_0 : i32, i32, i32
  }
  func.func @transform_16(%arg0: i32, %arg1: i32) -> (i32, i32, i32) {
    %c0_i32 = arith.constant 0 : i32
    %c0_i32_0 = arith.constant 0 : i32
    %c0_i32_1 = arith.constant 0 : i32
    return %arg1, %c0_i32, %c0_i32_0 : i32, i32, i32
  }
  func.func @transform_17(%arg0: i32, %arg1: i32) -> (i32, i32, i32) {
    %c0_i32 = arith.constant 0 : i32
    %c0_i32_0 = arith.constant 0 : i32
    %c0_i32_1 = arith.constant 0 : i32
    return %arg1, %c0_i32, %c0_i32_0 : i32, i32, i32
  }
  func.func @transform_18(%arg0: i32, %arg1: i32) -> (i32, i32, i32) {
    %c0_i32 = arith.constant 0 : i32
    %c0_i32_0 = arith.constant 0 : i32
    %c0_i32_1 = arith.constant 0 : i32
    return %arg1, %c0_i32, %c0_i32_0 : i32, i32, i32
  }
  func.func @transform_19(%arg0: i32, %arg1: i32) -> (i32, i32, i32) {
    %c0_i32 = arith.constant 0 : i32
    %c0_i32_0 = arith.constant 0 : i32
    %c0_i32_1 = arith.constant 0 : i32
    return %arg1, %c0_i32, %c0_i32_0 : i32, i32, i32
  }
  func.func @transform_20(%arg0: i32, %arg1: i32) -> (i32, i32, i32) {
    %c0_i32 = arith.constant 0 : i32
    %c0_i32_0 = arith.constant 0 : i32
    %c0_i32_1 = arith.constant 0 : i32
    return %arg1, %c0_i32, %c0_i32_0 : i32, i32, i32
  }
  func.func @transform_21(%arg0: i32, %arg1: i32) -> (i32, i32, i32) {
    %c0_i32 = arith.constant 0 : i32
    %c0_i32_0 = arith.constant 0 : i32
    %c0_i32_1 = arith.constant 0 : i32
    return %arg1, %c0_i32, %c0_i32_0 : i32, i32, i32
  }
  func.func @transform_22(%arg0: i32, %arg1: i32) -> (i32, i32, i32) {
    %c0_i32 = arith.constant 0 : i32
    %c0_i32_0 = arith.constant 0 : i32
    %c0_i32_1 = arith.constant 0 : i32
    return %arg1, %c0_i32, %c0_i32_0 : i32, i32, i32
  }
  func.func @transform_23(%arg0: i32, %arg1: i32) -> (i32, i32, i32) {
    %c0_i32 = arith.constant 0 : i32
    %c0_i32_0 = arith.constant 0 : i32
    %c0_i32_1 = arith.constant 0 : i32
    return %arg1, %c0_i32, %c0_i32_0 : i32, i32, i32
  }
  func.func @transform_24(%arg0: i32, %arg1: i32) -> (i32, i32, i32) {
    %c0_i32 = arith.constant 0 : i32
    %c0_i32_0 = arith.constant 0 : i32
    %c0_i32_1 = arith.constant 0 : i32
    return %arg1, %c0_i32, %c0_i32_0 : i32, i32, i32
  }
  func.func @transform_25(%arg0: i32, %arg1: i32) -> (i32, i32, i32) {
    %c0_i32 = arith.constant 0 : i32
    %c0_i32_0 = arith.constant 0 : i32
    %c0_i32_1 = arith.constant 0 : i32
    return %arg1, %c0_i32, %c0_i32_0 : i32, i32, i32
  }
  func.func @transform_26(%arg0: i32, %arg1: i32) -> (i32, i32, i32) {
    %c0_i32 = arith.constant 0 : i32
    %c0_i32_0 = arith.constant 0 : i32
    %c0_i32_1 = arith.constant 0 : i32
    return %arg1, %c0_i32, %c0_i32_0 : i32, i32, i32
  }
  func.func @transform_27(%arg0: i32, %arg1: i32) -> (i32, i32, i32) {
    %c0_i32 = arith.constant 0 : i32
    %c0_i32_0 = arith.constant 0 : i32
    %c0_i32_1 = arith.constant 0 : i32
    return %arg1, %c0_i32, %c0_i32_0 : i32, i32, i32
  }
  func.func @transform_28(%arg0: i32, %arg1: i32) -> (i32, i32, i32) {
    %c0_i32 = arith.constant 0 : i32
    %c0_i32_0 = arith.constant 0 : i32
    %c0_i32_1 = arith.constant 0 : i32
    return %arg1, %c0_i32, %c0_i32_0 : i32, i32, i32
  }
  func.func @transform_29(%arg0: i32, %arg1: i32) -> (i32, i32, i32) {
    %c0_i32 = arith.constant 0 : i32
    %c0_i32_0 = arith.constant 0 : i32
    %c0_i32_1 = arith.constant 0 : i32
    return %arg1, %c0_i32, %c0_i32_0 : i32, i32, i32
  }
  func.func @transform_30(%arg0: i32, %arg1: i32) -> (i32, i32, i32) {
    %c0_i32 = arith.constant 0 : i32
    %c0_i32_0 = arith.constant 0 : i32
    %c0_i32_1 = arith.constant 0 : i32
    return %arg0, %c0_i32, %c0_i32_0 : i32, i32, i32
  }
}

</mosaic_0001>

<llo_original>
// kernel: tpu_custom_call.1
$region0: #{tpu_custom_call.1}
  #allocation0 [shape = 'u32[]', space=smem, size = 0x4, offset = 0x4, fixed_abs, tag = 'smem constant byte address 0x4 - core index']
  #allocation1 [shape = 'u32[144,128]{1,0:T(1,128)}', space=vmem, size = 0x12000, scoped, tag = 'internal scratch']
  %s0 = inlined_call_operand.smem [shape: u32[31], index: -1, kind: input, shape index: {}]
  %s1 = sld [smem:[%s0]]
  %s2 = scalar_lea.smem %s0, 1
  %s3 = sld [smem:[%s2]]
  %s4 = scalar_lea.smem %s0, 2
  %s5 = sld [smem:[%s4]]
  %s6 = scalar_lea.smem %s0, 3
  %s7 = sld [smem:[%s6]]
  %s8 = scalar_lea.smem %s0, 4
  %s9 = sld [smem:[%s8]]
  %s10 = scalar_lea.smem %s0, 5
  %s11 = sld [smem:[%s10]]
  %s12 = scalar_lea.smem %s0, 6
  %s13 = sld [smem:[%s12]]
  %s14 = scalar_lea.smem %s0, 7
  %s15 = sld [smem:[%s14]]
  %s16 = scalar_lea.smem %s0, 8
  %s17 = sld [smem:[%s16]]
  %s18 = scalar_lea.smem %s0, 9
  %s19 = sld [smem:[%s18]]
  %s20 = scalar_lea.smem %s0, 10
  %s21 = sld [smem:[%s20]]
  %s22 = scalar_lea.smem %s0, 11
  %s23 = sld [smem:[%s22]]
  %s24 = scalar_lea.smem %s0, 12
  %s25 = sld [smem:[%s24]]
  %s26 = scalar_lea.smem %s0, 13
  %s27 = sld [smem:[%s26]]
  %s28 = scalar_lea.smem %s0, 14
  %s29 = sld [smem:[%s28]]
  %s30 = scalar_lea.smem %s0, 15
  %s31 = sld [smem:[%s30]]
  %s32 = scalar_lea.smem %s0, 16
  %s33 = sld [smem:[%s32]]
  %s34 = scalar_lea.smem %s0, 17
  %s35 = sld [smem:[%s34]]
  %s36 = scalar_lea.smem %s0, 18
  %s37 = sld [smem:[%s36]]
  %s38 = scalar_lea.smem %s0, 19
  %s39 = sld [smem:[%s38]]
  %s40 = scalar_lea.smem %s0, 20
  %s41 = sld [smem:[%s40]]
  %s42 = scalar_lea.smem %s0, 21
  %s43 = sld [smem:[%s42]]
  %s44 = scalar_lea.smem %s0, 22
  %s45 = sld [smem:[%s44]]
  %s46 = scalar_lea.smem %s0, 23
  %s47 = sld [smem:[%s46]]
  %s48 = scalar_lea.smem %s0, 24
  %s49 = sld [smem:[%s48]]
  %s50 = scalar_lea.smem %s0, 25
  %s51 = sld [smem:[%s50]]
  %s52 = scalar_lea.smem %s0, 26
  %s53 = sld [smem:[%s52]]
  %s54 = scalar_lea.smem %s0, 27
  %s55 = sld [smem:[%s54]]
  %s56 = scalar_lea.smem %s0, 28
  %s57 = sld [smem:[%s56]]
  %s58 = scalar_lea.smem %s0, 29
  %s59 = sld [smem:[%s58]]
  %s60 = scalar_lea.smem %s0, 30
  %s61 = sld [smem:[%s60]]
  %s62 = sld [smem:[#allocation0]]
  $region193: #{tpu_custom_call.1} parent=0
    _
  %s64 = ssub.s32 1, %s62
  %s65 = scalar_select 0, %s64, %s62
  $region1: #{tpu_custom_call.1} parent=0
    #allocation2 [shape = 'u8[8192]{0}', space=vmem, size = 0x2000, scoped, tag = 'input window, operand 0']
    #allocation3 [shape = 's32[2]{0}', space=sflag, size = 0x8, scoped, tag = 'scoped memory for tpu_custom_call.1']
    #allocation4 [shape = 's32[2]{0}', space=sflag, size = 0x8, scoped, tag = 'scoped memory for tpu_custom_call.1']
    #allocation5 [shape = 'u8[8192]{0}', space=vmem, size = 0x2000, scoped, tag = 'input window, operand 1']
    #allocation6 [shape = 's32[2]{0}', space=sflag, size = 0x8, scoped, tag = 'scoped memory for tpu_custom_call.1']
    #allocation7 [shape = 'u8[8192]{0}', space=vmem, size = 0x2000, scoped, tag = 'input window, operand 2']
    #allocation8 [shape = 'u8[32768]{0}', space=vmem, size = 0x8000, scoped, tag = 'input window, operand 10']
    #allocation9 [shape = 's32[2]{0}', space=sflag, size = 0x8, scoped, tag = 'scoped memory for tpu_custom_call.1']
    #allocation10 [shape = 'u8[32768]{0}', space=vmem, size = 0x8000, scoped, tag = 'input window, operand 14']
    #allocation11 [shape = 'u8[32768]{0}', space=vmem, size = 0x8000, scoped, tag = 'input window, operand 16']
    #allocation12 [shape = 's32[2]{0}', space=sflag, size = 0x8, scoped, tag = 'scoped memory for tpu_custom_call.1']
    #allocation13 [shape = 'u8[32768]{0}', space=vmem, size = 0x8000, scoped, tag = 'input window, operand 18']
    #allocation14 [shape = 'u8[32768]{0}', space=vmem, size = 0x8000, scoped, tag = 'input window, operand 20']
    #allocation15 [shape = 's32[2]{0}', space=sflag, size = 0x8, scoped, tag = 'scoped memory for tpu_custom_call.1']
    #allocation16 [shape = 'u8[32768]{0}', space=vmem, size = 0x8000, scoped, tag = 'input window, operand 24']
    #allocation17 [shape = 'u8[8192]{0}', space=vmem, size = 0x2000, scoped, tag = 'output window, operand 0']
    %66 = vsyncpa [#allocation3], 0
    %s67 = scalar_lea.sflag [#allocation3], 1
    %68 = vsyncpa %s67, 0
    %69 = vsyncpa [#allocation6], 0
    %s70 = scalar_lea.sflag [#allocation6], 1
    %71 = vsyncpa %s70, 0
    %72 = vsyncpa [#allocation9], 0
    %s73 = scalar_lea.sflag [#allocation9], 1
    %74 = vsyncpa %s73, 0
    %75 = vsyncpa [#allocation12], 0
    %s76 = scalar_lea.sflag [#allocation12], 1
    %77 = vsyncpa %s76, 0
    %78 = vsyncpa [#allocation15], 0
    %s79 = scalar_lea.sflag [#allocation15], 1
    %80 = vsyncpa %s79, 0
    %81 = vsyncpa [#allocation4], 0
    %s82 = scalar_lea.sflag [#allocation4], 1
    %83 = vsyncpa %s82, 0
    loop: start=0, step=1, limit=6
    $region2: #{tpu_custom_call.1} parent=1 // loop_pre_header
      _
    $region3: #{tpu_custom_call.1} parent=1 // loop_header
      %s85 = sphi 0, %s89
      %p86 = scmp.ge.s32.totalorder %s85, 6
      %s92 = sphi 0, %s104
      %s93 = sphi 0, %s100
      %s94 = sphi 0, %s92
      %s95 = sphi 0, %s93
      %s96 = sphi 0, %s94
      %s97 = sphi 0, %s95
      %s107 = sphi 0, %s109
      %s110 = sphi 0, %s107
      %s111 = sphi 0, %s110
      %s127 = sphi 0, %s111
      %s133 = sphi 0, %s135
      %s136 = sphi 0, %s133
      %s137 = sphi 0, %s136
      %s153 = sphi 0, %s137
      %s159 = sphi 0, %s161
      %s162 = sphi 0, %s159
      %s163 = sphi 0, %s162
      %s179 = sphi 0, %s163
      %s185 = sphi 0, %s187
      %s188 = sphi 0, %s185
      %s189 = sphi 0, %s188
      %s205 = sphi 0, %s189
      %s211 = sphi 0, %s213
      %s214 = sphi 0, %s211
      %s215 = sphi 0, %s214
      %s231 = sphi 0, %s215
      %s237 = sphi 0, %s239
      %s240 = sphi 0, %s237
      %s241 = sphi 0, %s240
      %s257 = sphi 0, %s241
      %s263 = sphi 0, %s265
      %s266 = sphi 0, %s263
      %s267 = sphi 0, %s266
      %s283 = sphi 0, %s267
      %s289 = sphi 0, %s291
      %s292 = sphi 0, %s289
      %s293 = sphi 0, %s292
      %s309 = sphi 0, %s293
      %s315 = sphi 0, %s317
      %s318 = sphi 0, %s315
      %s319 = sphi 0, %s318
      %s335 = sphi 0, %s319
      %s341 = sphi 0, %s343
      %s344 = sphi 0, %s341
      %s345 = sphi 0, %s344
      %s361 = sphi 0, %s345
      %s367 = sphi 0, %s369
      %s370 = sphi 0, %s367
      %s371 = sphi 0, %s370
      %s387 = sphi 0, %s371
      %s393 = sphi 0, %s395
      %s396 = sphi 0, %s393
      %s397 = sphi 0, %s396
      %s413 = sphi 0, %s397
      %s419 = sphi 0, %s421
      %s422 = sphi 0, %s419
      %s423 = sphi 0, %s422
      %s439 = sphi 0, %s423
      %s445 = sphi 0, %s447
      %s448 = sphi 0, %s445
      %s449 = sphi 0, %s448
      %s465 = sphi 0, %s449
      %s471 = sphi 0, %s473
      %s474 = sphi 0, %s471
      %s475 = sphi 0, %s474
      %s491 = sphi 0, %s475
      %s497 = sphi 0, %s499
      %s500 = sphi 0, %s497
      %s501 = sphi 0, %s500
      %s517 = sphi 0, %s501
      %s523 = sphi 0, %s525
      %s526 = sphi 0, %s523
      %s527 = sphi 0, %s526
      %s543 = sphi 0, %s527
      %s549 = sphi 0, %s551
      %s552 = sphi 0, %s549
      %s553 = sphi 0, %s552
      %s569 = sphi 0, %s553
      %s575 = sphi 0, %s577
      %s578 = sphi 0, %s575
      %s579 = sphi 0, %s578
      %s595 = sphi 0, %s579
      %s601 = sphi 0, %s603
      %s604 = sphi 0, %s601
      %s605 = sphi 0, %s604
      %s621 = sphi 0, %s605
      %s627 = sphi 0, %s629
      %s630 = sphi 0, %s627
      %s631 = sphi 0, %s630
      %s647 = sphi 0, %s631
      %s653 = sphi 0, %s655
      %s656 = sphi 0, %s653
      %s657 = sphi 0, %s656
      %s673 = sphi 0, %s657
      %s679 = sphi 0, %s681
      %s682 = sphi 0, %s679
      %s683 = sphi 0, %s682
      %s699 = sphi 0, %s683
      %s705 = sphi 0, %s707
      %s708 = sphi 0, %s705
      %s709 = sphi 0, %s708
      %s725 = sphi 0, %s709
      %s731 = sphi 0, %s733
      %s734 = sphi 0, %s731
      %s735 = sphi 0, %s734
      %s751 = sphi 0, %s735
      %s757 = sphi 0, %s759
      %s760 = sphi 0, %s757
      %s761 = sphi 0, %s760
      %s777 = sphi 0, %s761
      %s783 = sphi 0, %s785
      %s786 = sphi 0, %s783
      %s787 = sphi 0, %s786
      %s803 = sphi 0, %s787
      %s809 = sphi 0, %s811
      %s812 = sphi 0, %s809
      %s813 = sphi 0, %s812
      %s829 = sphi 0, %s813
      %s835 = sphi 0, %s837
      %s838 = sphi 0, %s835
      %s839 = sphi 0, %s838
      %s855 = sphi 0, %s839
      %s861 = sphi 0, %s863
      %s864 = sphi 0, %s861
      %s865 = sphi 0, %s864
      %s881 = sphi 0, %s865
      %s887 = sphi 0, %s889
      %s890 = sphi 0, %s887
      %s891 = sphi 0, %s890
      %s907 = sphi 0, %s891
    $region4: #{tpu_custom_call.1} parent=1 // loop_header_branch
      %88 = sbr.rel (%p86) target = $region8
    $region5: #{tpu_custom_call.1} parent=1 // loop_body
      %s90 = ssub.s32 %s85, 1
      %s91 = ssub.s32 %s85, 2
      %s98 = sadd.s32 1, %s93
      %p99 = scmp.ge.s32.totalorder %s98, 2
      %s100 = scalar_select %p99, 0, %s98
      %s101 = sadd.s32 1, %s92
      %s102 = scalar_select %p99, %s101, %s92
      %p103 = scmp.ge.s32.totalorder %s102, 2
      %s104 = scalar_select %p103, 0, %s102
      %s105 = ssub.s32 %s92, %s104
      %p106 = scmp.eq.s32.totalorder %s105, 0
      %s108 = sadd.s32 %s107, 1
      %s109 = scalar_select %p106, %s107, %s108
      %p112 = pneg %p106
      %p113 = scmp.eq.s32.totalorder %s85, 3
      %p114 = por %p112, %p113
      %p115 = scmp.ne.s32.totalorder %s107, %s110
      %p116 = scmp.eq.s32.totalorder %s85, 0
      %p117 = por %p115, %p116
      %p118 = scmp.ne.s32.totalorder %s107, %s110
      %p119 = scmp.eq.s32.totalorder %s90, 3
      %p120 = por %p118, %p119
      %p121 = scmp.ne.s32.totalorder %s110, %s111
      %p122 = scmp.eq.s32.totalorder %s90, 0
      %p123 = por %p121, %p122
      %p124 = scmp.ne.s32.totalorder %s110, %s111
      %p125 = scmp.eq.s32.totalorder %s91, 3
      %p126 = por %p124, %p125
      %p128 = scmp.ne.s32.totalorder %s111, %s127
      %p129 = scmp.eq.s32.totalorder %s91, 0
      %p130 = por %p128, %p129
      %s131 = ssub.s32 %s92, %s104
      %p132 = scmp.eq.s32.totalorder %s131, 0
      %s134 = sadd.s32 %s133, 1
      %s135 = scalar_select %p132, %s133, %s134
      %p138 = pneg %p132
      %p139 = scmp.eq.s32.totalorder %s85, 3
      %p140 = por %p138, %p139
      %p141 = scmp.ne.s32.totalorder %s133, %s136
      %p142 = scmp.eq.s32.totalorder %s85, 0
      %p143 = por %p141, %p142
      %p144 = scmp.ne.s32.totalorder %s133, %s136
      %p145 = scmp.eq.s32.totalorder %s90, 3
      %p146 = por %p144, %p145
      %p147 = scmp.ne.s32.totalorder %s136, %s137
      %p148 = scmp.eq.s32.totalorder %s90, 0
      %p149 = por %p147, %p148
      %p150 = scmp.ne.s32.totalorder %s136, %s137
      %p151 = scmp.eq.s32.totalorder %s91, 3
      %p152 = por %p150, %p151
      %p154 = scmp.ne.s32.totalorder %s137, %s153
      %p155 = scmp.eq.s32.totalorder %s91, 0
      %p156 = por %p154, %p155
      %s157 = ssub.s32 %s92, %s104
      %p158 = scmp.eq.s32.totalorder %s157, 0
      %s160 = sadd.s32 %s159, 1
      %s161 = scalar_select %p158, %s159, %s160
      %p164 = pneg %p158
      %p165 = scmp.eq.s32.totalorder %s85, 3
      %p166 = por %p164, %p165
      %p167 = scmp.ne.s32.totalorder %s159, %s162
      %p168 = scmp.eq.s32.totalorder %s85, 0
      %p169 = por %p167, %p168
      %p170 = scmp.ne.s32.totalorder %s159, %s162
      %p171 = scmp.eq.s32.totalorder %s90, 3
      %p172 = por %p170, %p171
      %p173 = scmp.ne.s32.totalorder %s162, %s163
      %p174 = scmp.eq.s32.totalorder %s90, 0
      %p175 = por %p173, %p174
      %p176 = scmp.ne.s32.totalorder %s162, %s163
      %p177 = scmp.eq.s32.totalorder %s91, 3
      %p178 = por %p176, %p177
      %p180 = scmp.ne.s32.totalorder %s163, %s179
      %p181 = scmp.eq.s32.totalorder %s91, 0
      %p182 = por %p180, %p181
      %s183 = ssub.s32 %s92, %s104
      %p184 = scmp.eq.s32.totalorder %s183, 0
      %s186 = sadd.s32 %s185, 1
      %s187 = scalar_select %p184, %s185, %s186
      %p190 = pneg %p184
      %p191 = scmp.eq.s32.totalorder %s85, 3
      %p192 = por %p190, %p191
      %p193 = scmp.ne.s32.totalorder %s185, %s188
      %p194 = scmp.eq.s32.totalorder %s85, 0
      %p195 = por %p193, %p194
      %p196 = scmp.ne.s32.totalorder %s185, %s188
      %p197 = scmp.eq.s32.totalorder %s90, 3
      %p198 = por %p196, %p197
      %p199 = scmp.ne.s32.totalorder %s188, %s189
      %p200 = scmp.eq.s32.totalorder %s90, 0
      %p201 = por %p199, %p200
      %p202 = scmp.ne.s32.totalorder %s188, %s189
      %p203 = scmp.eq.s32.totalorder %s91, 3
      %p204 = por %p202, %p203
      %p206 = scmp.ne.s32.totalorder %s189, %s205
      %p207 = scmp.eq.s32.totalorder %s91, 0
      %p208 = por %p206, %p207
      %s209 = ssub.s32 %s93, %s100
      %p210 = scmp.eq.s32.totalorder %s209, 0
      %s212 = sadd.s32 %s211, 1
      %s213 = scalar_select %p210, %s211, %s212
      %p216 = pneg %p210
      %p217 = scmp.eq.s32.totalorder %s85, 3
      %p218 = por %p216, %p217
      %p219 = scmp.ne.s32.totalorder %s211, %s214
      %p220 = scmp.eq.s32.totalorder %s85, 0
      %p221 = por %p219, %p220
      %p222 = scmp.ne.s32.totalorder %s211, %s214
      %p223 = scmp.eq.s32.totalorder %s90, 3
      %p224 = por %p222, %p223
      %p225 = scmp.ne.s32.totalorder %s214, %s215
      %p226 = scmp.eq.s32.totalorder %s90, 0
      %p227 = por %p225, %p226
      %p228 = scmp.ne.s32.totalorder %s214, %s215
      %p229 = scmp.eq.s32.totalorder %s91, 3
      %p230 = por %p228, %p229
      %p232 = scmp.ne.s32.totalorder %s215, %s231
      %p233 = scmp.eq.s32.totalorder %s91, 0
      %p234 = por %p232, %p233
      %s235 = ssub.s32 %s93, %s100
      %p236 = scmp.eq.s32.totalorder %s235, 0
      %s238 = sadd.s32 %s237, 1
      %s239 = scalar_select %p236, %s237, %s238
      %p242 = pneg %p236
      %p243 = scmp.eq.s32.totalorder %s85, 3
      %p244 = por %p242, %p243
      %p245 = scmp.ne.s32.totalorder %s237, %s240
      %p246 = scmp.eq.s32.totalorder %s85, 0
      %p247 = por %p245, %p246
      %p248 = scmp.ne.s32.totalorder %s237, %s240
      %p249 = scmp.eq.s32.totalorder %s90, 3
      %p250 = por %p248, %p249
      %p251 = scmp.ne.s32.totalorder %s240, %s241
      %p252 = scmp.eq.s32.totalorder %s90, 0
      %p253 = por %p251, %p252
      %p254 = scmp.ne.s32.totalorder %s240, %s241
      %p255 = scmp.eq.s32.totalorder %s91, 3
      %p256 = por %p254, %p255
      %p258 = scmp.ne.s32.totalorder %s241, %s257
      %p259 = scmp.eq.s32.totalorder %s91, 0
      %p260 = por %p258, %p259
      %s261 = ssub.s32 %s93, %s100
      %p262 = scmp.eq.s32.totalorder %s261, 0
      %s264 = sadd.s32 %s263, 1
      %s265 = scalar_select %p262, %s263, %s264
      %p268 = pneg %p262
      %p269 = scmp.eq.s32.totalorder %s85, 3
      %p270 = por %p268, %p269
      %p271 = scmp.ne.s32.totalorder %s263, %s266
      %p272 = scmp.eq.s32.totalorder %s85, 0
      %p273 = por %p271, %p272
      %p274 = scmp.ne.s32.totalorder %s263, %s266
      %p275 = scmp.eq.s32.totalorder %s90, 3
      %p276 = por %p274, %p275
      %p277 = scmp.ne.s32.totalorder %s266, %s267
      %p278 = scmp.eq.s32.totalorder %s90, 0
      %p279 = por %p277, %p278
      %p280 = scmp.ne.s32.totalorder %s266, %s267
      %p281 = scmp.eq.s32.totalorder %s91, 3
      %p282 = por %p280, %p281
      %p284 = scmp.ne.s32.totalorder %s267, %s283
      %p285 = scmp.eq.s32.totalorder %s91, 0
      %p286 = por %p284, %p285
      %s287 = ssub.s32 %s93, %s100
      %p288 = scmp.eq.s32.totalorder %s287, 0
      %s290 = sadd.s32 %s289, 1
      %s291 = scalar_select %p288, %s289, %s290
      %p294 = pneg %p288
      %p295 = scmp.eq.s32.totalorder %s85, 3
      %p296 = por %p294, %p295
      %p297 = scmp.ne.s32.totalorder %s289, %s292
      %p298 = scmp.eq.s32.totalorder %s85, 0
      %p299 = por %p297, %p298
      %p300 = scmp.ne.s32.totalorder %s289, %s292
      %p301 = scmp.eq.s32.totalorder %s90, 3
      %p302 = por %p300, %p301
      %p303 = scmp.ne.s32.totalorder %s292, %s293
      %p304 = scmp.eq.s32.totalorder %s90, 0
      %p305 = por %p303, %p304
      %p306 = scmp.ne.s32.totalorder %s292, %s293
      %p307 = scmp.eq.s32.totalorder %s91, 3
      %p308 = por %p306, %p307
      %p310 = scmp.ne.s32.totalorder %s293, %s309
      %p311 = scmp.eq.s32.totalorder %s91, 0
      %p312 = por %p310, %p311
      %s313 = ssub.s32 %s93, %s100
      %p314 = scmp.eq.s32.totalorder %s313, 0
      %s316 = sadd.s32 %s315, 1
      %s317 = scalar_select %p314, %s315, %s316
      %p320 = pneg %p314
      %p321 = scmp.eq.s32.totalorder %s85, 3
      %p322 = por %p320, %p321
      %p323 = scmp.ne.s32.totalorder %s315, %s318
      %p324 = scmp.eq.s32.totalorder %s85, 0
      %p325 = por %p323, %p324
      %p326 = scmp.ne.s32.totalorder %s315, %s318
      %p327 = scmp.eq.s32.totalorder %s90, 3
      %p328 = por %p326, %p327
      %p329 = scmp.ne.s32.totalorder %s318, %s319
      %p330 = scmp.eq.s32.totalorder %s90, 0
      %p331 = por %p329, %p330
      %p332 = scmp.ne.s32.totalorder %s318, %s319
      %p333 = scmp.eq.s32.totalorder %s91, 3
      %p334 = por %p332, %p333
      %p336 = scmp.ne.s32.totalorder %s319, %s335
      %p337 = scmp.eq.s32.totalorder %s91, 0
      %p338 = por %p336, %p337
      %s339 = ssub.s32 %s93, %s100
      %p340 = scmp.eq.s32.totalorder %s339, 0
      %s342 = sadd.s32 %s341, 1
      %s343 = scalar_select %p340, %s341, %s342
      %p346 = pneg %p340
      %p347 = scmp.eq.s32.totalorder %s85, 3
      %p348 = por %p346, %p347
      %p349 = scmp.ne.s32.totalorder %s341, %s344
      %p350 = scmp.eq.s32.totalorder %s85, 0
      %p351 = por %p349, %p350
      %p352 = scmp.ne.s32.totalorder %s341, %s344
      %p353 = scmp.eq.s32.totalorder %s90, 3
      %p354 = por %p352, %p353
      %p355 = scmp.ne.s32.totalorder %s344, %s345
      %p356 = scmp.eq.s32.totalorder %s90, 0
      %p357 = por %p355, %p356
      %p358 = scmp.ne.s32.totalorder %s344, %s345
      %p359 = scmp.eq.s32.totalorder %s91, 3
      %p360 = por %p358, %p359
      %p362 = scmp.ne.s32.totalorder %s345, %s361
      %p363 = scmp.eq.s32.totalorder %s91, 0
      %p364 = por %p362, %p363
      %s365 = ssub.s32 %s93, %s100
      %p366 = scmp.eq.s32.totalorder %s365, 0
      %s368 = sadd.s32 %s367, 1
      %s369 = scalar_select %p366, %s367, %s368
      %p372 = pneg %p366
      %p373 = scmp.eq.s32.totalorder %s85, 3
      %p374 = por %p372, %p373
      %p375 = scmp.ne.s32.totalorder %s367, %s370
      %p376 = scmp.eq.s32.totalorder %s85, 0
      %p377 = por %p375, %p376
      %p378 = scmp.ne.s32.totalorder %s367, %s370
      %p379 = scmp.eq.s32.totalorder %s90, 3
      %p380 = por %p378, %p379
      %p381 = scmp.ne.s32.totalorder %s370, %s371
      %p382 = scmp.eq.s32.totalorder %s90, 0
      %p383 = por %p381, %p382
      %p384 = scmp.ne.s32.totalorder %s370, %s371
      %p385 = scmp.eq.s32.totalorder %s91, 3
      %p386 = por %p384, %p385
      %p388 = scmp.ne.s32.totalorder %s371, %s387
      %p389 = scmp.eq.s32.totalorder %s91, 0
      %p390 = por %p388, %p389
      %s391 = ssub.s32 %s93, %s100
      %p392 = scmp.eq.s32.totalorder %s391, 0
      %s394 = sadd.s32 %s393, 1
      %s395 = scalar_select %p392, %s393, %s394
      %p398 = pneg %p392
      %p399 = scmp.eq.s32.totalorder %s85, 3
      %p400 = por %p398, %p399
      %p401 = scmp.ne.s32.totalorder %s393, %s396
      %p402 = scmp.eq.s32.totalorder %s85, 0
      %p403 = por %p401, %p402
      %p404 = scmp.ne.s32.totalorder %s393, %s396
      %p405 = scmp.eq.s32.totalorder %s90, 3
      %p406 = por %p404, %p405
      %p407 = scmp.ne.s32.totalorder %s396, %s397
      %p408 = scmp.eq.s32.totalorder %s90, 0
      %p409 = por %p407, %p408
      %p410 = scmp.ne.s32.totalorder %s396, %s397
      %p411 = scmp.eq.s32.totalorder %s91, 3
      %p412 = por %p410, %p411
      %p414 = scmp.ne.s32.totalorder %s397, %s413
      %p415 = scmp.eq.s32.totalorder %s91, 0
      %p416 = por %p414, %p415
      %s417 = ssub.s32 %s93, %s100
      %p418 = scmp.eq.s32.totalorder %s417, 0
      %s420 = sadd.s32 %s419, 1
      %s421 = scalar_select %p418, %s419, %s420
      %p424 = pneg %p418
      %p425 = scmp.eq.s32.totalorder %s85, 3
      %p426 = por %p424, %p425
      %p427 = scmp.ne.s32.totalorder %s419, %s422
      %p428 = scmp.eq.s32.totalorder %s85, 0
      %p429 = por %p427, %p428
      %p430 = scmp.ne.s32.totalorder %s419, %s422
      %p431 = scmp.eq.s32.totalorder %s90, 3
      %p432 = por %p430, %p431
      %p433 = scmp.ne.s32.totalorder %s422, %s423
      %p434 = scmp.eq.s32.totalorder %s90, 0
      %p435 = por %p433, %p434
      %p436 = scmp.ne.s32.totalorder %s422, %s423
      %p437 = scmp.eq.s32.totalorder %s91, 3
      %p438 = por %p436, %p437
      %p440 = scmp.ne.s32.totalorder %s423, %s439
      %p441 = scmp.eq.s32.totalorder %s91, 0
      %p442 = por %p440, %p441
      %s443 = ssub.s32 %s93, %s100
      %p444 = scmp.eq.s32.totalorder %s443, 0
      %s446 = sadd.s32 %s445, 1
      %s447 = scalar_select %p444, %s445, %s446
      %p450 = pneg %p444
      %p451 = scmp.eq.s32.totalorder %s85, 3
      %p452 = por %p450, %p451
      %p453 = scmp.ne.s32.totalorder %s445, %s448
      %p454 = scmp.eq.s32.totalorder %s85, 0
      %p455 = por %p453, %p454
      %p456 = scmp.ne.s32.totalorder %s445, %s448
      %p457 = scmp.eq.s32.totalorder %s90, 3
      %p458 = por %p456, %p457
      %p459 = scmp.ne.s32.totalorder %s448, %s449
      %p460 = scmp.eq.s32.totalorder %s90, 0
      %p461 = por %p459, %p460
      %p462 = scmp.ne.s32.totalorder %s448, %s449
      %p463 = scmp.eq.s32.totalorder %s91, 3
      %p464 = por %p462, %p463
      %p466 = scmp.ne.s32.totalorder %s449, %s465
      %p467 = scmp.eq.s32.totalorder %s91, 0
      %p468 = por %p466, %p467
      %s469 = ssub.s32 %s93, %s100
      %p470 = scmp.eq.s32.totalorder %s469, 0
      %s472 = sadd.s32 %s471, 1
      %s473 = scalar_select %p470, %s471, %s472
      %p476 = pneg %p470
      %p477 = scmp.eq.s32.totalorder %s85, 3
      %p478 = por %p476, %p477
      %p479 = scmp.ne.s32.totalorder %s471, %s474
      %p480 = scmp.eq.s32.totalorder %s85, 0
      %p481 = por %p479, %p480
      %p482 = scmp.ne.s32.totalorder %s471, %s474
      %p483 = scmp.eq.s32.totalorder %s90, 3
      %p484 = por %p482, %p483
      %p485 = scmp.ne.s32.totalorder %s474, %s475
      %p486 = scmp.eq.s32.totalorder %s90, 0
      %p487 = por %p485, %p486
      %p488 = scmp.ne.s32.totalorder %s474, %s475
      %p489 = scmp.eq.s32.totalorder %s91, 3
      %p490 = por %p488, %p489
      %p492 = scmp.ne.s32.totalorder %s475, %s491
      %p493 = scmp.eq.s32.totalorder %s91, 0
      %p494 = por %p492, %p493
      %s495 = ssub.s32 %s93, %s100
      %p496 = scmp.eq.s32.totalorder %s495, 0
      %s498 = sadd.s32 %s497, 1
      %s499 = scalar_select %p496, %s497, %s498
      %p502 = pneg %p496
      %p503 = scmp.eq.s32.totalorder %s85, 3
      %p504 = por %p502, %p503
      %p505 = scmp.ne.s32.totalorder %s497, %s500
      %p506 = scmp.eq.s32.totalorder %s85, 0
      %p507 = por %p505, %p506
      %p508 = scmp.ne.s32.totalorder %s497, %s500
      %p509 = scmp.eq.s32.totalorder %s90, 3
      %p510 = por %p508, %p509
      %p511 = scmp.ne.s32.totalorder %s500, %s501
      %p512 = scmp.eq.s32.totalorder %s90, 0
      %p513 = por %p511, %p512
      %p514 = scmp.ne.s32.totalorder %s500, %s501
      %p515 = scmp.eq.s32.totalorder %s91, 3
      %p516 = por %p514, %p515
      %p518 = scmp.ne.s32.totalorder %s501, %s517
      %p519 = scmp.eq.s32.totalorder %s91, 0
      %p520 = por %p518, %p519
      %s521 = ssub.s32 %s93, %s100
      %p522 = scmp.eq.s32.totalorder %s521, 0
      %s524 = sadd.s32 %s523, 1
      %s525 = scalar_select %p522, %s523, %s524
      %p528 = pneg %p522
      %p529 = scmp.eq.s32.totalorder %s85, 3
      %p530 = por %p528, %p529
      %p531 = scmp.ne.s32.totalorder %s523, %s526
      %p532 = scmp.eq.s32.totalorder %s85, 0
      %p533 = por %p531, %p532
      %p534 = scmp.ne.s32.totalorder %s523, %s526
      %p535 = scmp.eq.s32.totalorder %s90, 3
      %p536 = por %p534, %p535
      %p537 = scmp.ne.s32.totalorder %s526, %s527
      %p538 = scmp.eq.s32.totalorder %s90, 0
      %p539 = por %p537, %p538
      %p540 = scmp.ne.s32.totalorder %s526, %s527
      %p541 = scmp.eq.s32.totalorder %s91, 3
      %p542 = por %p540, %p541
      %p544 = scmp.ne.s32.totalorder %s527, %s543
      %p545 = scmp.eq.s32.totalorder %s91, 0
      %p546 = por %p544, %p545
      %s547 = ssub.s32 %s93, %s100
      %p548 = scmp.eq.s32.totalorder %s547, 0
      %s550 = sadd.s32 %s549, 1
      %s551 = scalar_select %p548, %s549, %s550
      %p554 = pneg %p548
      %p555 = scmp.eq.s32.totalorder %s85, 3
      %p556 = por %p554, %p555
      %p557 = scmp.ne.s32.totalorder %s549, %s552
      %p558 = scmp.eq.s32.totalorder %s85, 0
      %p559 = por %p557, %p558
      %p560 = scmp.ne.s32.totalorder %s549, %s552
      %p561 = scmp.eq.s32.totalorder %s90, 3
      %p562 = por %p560, %p561
      %p563 = scmp.ne.s32.totalorder %s552, %s553
      %p564 = scmp.eq.s32.totalorder %s90, 0
      %p565 = por %p563, %p564
      %p566 = scmp.ne.s32.totalorder %s552, %s553
      %p567 = scmp.eq.s32.totalorder %s91, 3
      %p568 = por %p566, %p567
      %p570 = scmp.ne.s32.totalorder %s553, %s569
      %p571 = scmp.eq.s32.totalorder %s91, 0
      %p572 = por %p570, %p571
      %s573 = ssub.s32 %s93, %s100
      %p574 = scmp.eq.s32.totalorder %s573, 0
      %s576 = sadd.s32 %s575, 1
      %s577 = scalar_select %p574, %s575, %s576
      %p580 = pneg %p574
      %p581 = scmp.eq.s32.totalorder %s85, 3
      %p582 = por %p580, %p581
      %p583 = scmp.ne.s32.totalorder %s575, %s578
      %p584 = scmp.eq.s32.totalorder %s85, 0
      %p585 = por %p583, %p584
      %p586 = scmp.ne.s32.totalorder %s575, %s578
      %p587 = scmp.eq.s32.totalorder %s90, 3
      %p588 = por %p586, %p587
      %p589 = scmp.ne.s32.totalorder %s578, %s579
      %p590 = scmp.eq.s32.totalorder %s90, 0
      %p591 = por %p589, %p590
      %p592 = scmp.ne.s32.totalorder %s578, %s579
      %p593 = scmp.eq.s32.totalorder %s91, 3
      %p594 = por %p592, %p593
      %p596 = scmp.ne.s32.totalorder %s579, %s595
      %p597 = scmp.eq.s32.totalorder %s91, 0
      %p598 = por %p596, %p597
      %s599 = ssub.s32 %s93, %s100
      %p600 = scmp.eq.s32.totalorder %s599, 0
      %s602 = sadd.s32 %s601, 1
      %s603 = scalar_select %p600, %s601, %s602
      %p606 = pneg %p600
      %p607 = scmp.eq.s32.totalorder %s85, 3
      %p608 = por %p606, %p607
      %p609 = scmp.ne.s32.totalorder %s601, %s604
      %p610 = scmp.eq.s32.totalorder %s85, 0
      %p611 = por %p609, %p610
      %p612 = scmp.ne.s32.totalorder %s601, %s604
      %p613 = scmp.eq.s32.totalorder %s90, 3
      %p614 = por %p612, %p613
      %p615 = scmp.ne.s32.totalorder %s604, %s605
      %p616 = scmp.eq.s32.totalorder %s90, 0
      %p617 = por %p615, %p616
      %p618 = scmp.ne.s32.totalorder %s604, %s605
      %p619 = scmp.eq.s32.totalorder %s91, 3
      %p620 = por %p618, %p619
      %p622 = scmp.ne.s32.totalorder %s605, %s621
      %p623 = scmp.eq.s32.totalorder %s91, 0
      %p624 = por %p622, %p623
      %s625 = ssub.s32 %s93, %s100
      %p626 = scmp.eq.s32.totalorder %s625, 0
      %s628 = sadd.s32 %s627, 1
      %s629 = scalar_select %p626, %s627, %s628
      %p632 = pneg %p626
      %p633 = scmp.eq.s32.totalorder %s85, 3
      %p634 = por %p632, %p633
      %p635 = scmp.ne.s32.totalorder %s627, %s630
      %p636 = scmp.eq.s32.totalorder %s85, 0
      %p637 = por %p635, %p636
      %p638 = scmp.ne.s32.totalorder %s627, %s630
      %p639 = scmp.eq.s32.totalorder %s90, 3
      %p640 = por %p638, %p639
      %p641 = scmp.ne.s32.totalorder %s630, %s631
      %p642 = scmp.eq.s32.totalorder %s90, 0
      %p643 = por %p641, %p642
      %p644 = scmp.ne.s32.totalorder %s630, %s631
      %p645 = scmp.eq.s32.totalorder %s91, 3
      %p646 = por %p644, %p645
      %p648 = scmp.ne.s32.totalorder %s631, %s647
      %p649 = scmp.eq.s32.totalorder %s91, 0
      %p650 = por %p648, %p649
      %s651 = ssub.s32 %s93, %s100
      %p652 = scmp.eq.s32.totalorder %s651, 0
      %s654 = sadd.s32 %s653, 1
      %s655 = scalar_select %p652, %s653, %s654
      %p658 = pneg %p652
      %p659 = scmp.eq.s32.totalorder %s85, 3
      %p660 = por %p658, %p659
      %p661 = scmp.ne.s32.totalorder %s653, %s656
      %p662 = scmp.eq.s32.totalorder %s85, 0
      %p663 = por %p661, %p662
      %p664 = scmp.ne.s32.totalorder %s653, %s656
      %p665 = scmp.eq.s32.totalorder %s90, 3
      %p666 = por %p664, %p665
      %p667 = scmp.ne.s32.totalorder %s656, %s657
      %p668 = scmp.eq.s32.totalorder %s90, 0
      %p669 = por %p667, %p668
      %p670 = scmp.ne.s32.totalorder %s656, %s657
      %p671 = scmp.eq.s32.totalorder %s91, 3
      %p672 = por %p670, %p671
      %p674 = scmp.ne.s32.totalorder %s657, %s673
      %p675 = scmp.eq.s32.totalorder %s91, 0
      %p676 = por %p674, %p675
      %s677 = ssub.s32 %s93, %s100
      %p678 = scmp.eq.s32.totalorder %s677, 0
      %s680 = sadd.s32 %s679, 1
      %s681 = scalar_select %p678, %s679, %s680
      %p684 = pneg %p678
      %p685 = scmp.eq.s32.totalorder %s85, 3
      %p686 = por %p684, %p685
      %p687 = scmp.ne.s32.totalorder %s679, %s682
      %p688 = scmp.eq.s32.totalorder %s85, 0
      %p689 = por %p687, %p688
      %p690 = scmp.ne.s32.totalorder %s679, %s682
      %p691 = scmp.eq.s32.totalorder %s90, 3
      %p692 = por %p690, %p691
      %p693 = scmp.ne.s32.totalorder %s682, %s683
      %p694 = scmp.eq.s32.totalorder %s90, 0
      %p695 = por %p693, %p694
      %p696 = scmp.ne.s32.totalorder %s682, %s683
      %p697 = scmp.eq.s32.totalorder %s91, 3
      %p698 = por %p696, %p697
      %p700 = scmp.ne.s32.totalorder %s683, %s699
      %p701 = scmp.eq.s32.totalorder %s91, 0
      %p702 = por %p700, %p701
      %s703 = ssub.s32 %s93, %s100
      %p704 = scmp.eq.s32.totalorder %s703, 0
      %s706 = sadd.s32 %s705, 1
      %s707 = scalar_select %p704, %s705, %s706
      %p710 = pneg %p704
      %p711 = scmp.eq.s32.totalorder %s85, 3
      %p712 = por %p710, %p711
      %p713 = scmp.ne.s32.totalorder %s705, %s708
      %p714 = scmp.eq.s32.totalorder %s85, 0
      %p715 = por %p713, %p714
      %p716 = scmp.ne.s32.totalorder %s705, %s708
      %p717 = scmp.eq.s32.totalorder %s90, 3
      %p718 = por %p716, %p717
      %p719 = scmp.ne.s32.totalorder %s708, %s709
      %p720 = scmp.eq.s32.totalorder %s90, 0
      %p721 = por %p719, %p720
      %p722 = scmp.ne.s32.totalorder %s708, %s709
      %p723 = scmp.eq.s32.totalorder %s91, 3
      %p724 = por %p722, %p723
      %p726 = scmp.ne.s32.totalorder %s709, %s725
      %p727 = scmp.eq.s32.totalorder %s91, 0
      %p728 = por %p726, %p727
      %s729 = ssub.s32 %s93, %s100
      %p730 = scmp.eq.s32.totalorder %s729, 0
      %s732 = sadd.s32 %s731, 1
      %s733 = scalar_select %p730, %s731, %s732
      %p736 = pneg %p730
      %p737 = scmp.eq.s32.totalorder %s85, 3
      %p738 = por %p736, %p737
      %p739 = scmp.ne.s32.totalorder %s731, %s734
      %p740 = scmp.eq.s32.totalorder %s85, 0
      %p741 = por %p739, %p740
      %p742 = scmp.ne.s32.totalorder %s731, %s734
      %p743 = scmp.eq.s32.totalorder %s90, 3
      %p744 = por %p742, %p743
      %p745 = scmp.ne.s32.totalorder %s734, %s735
      %p746 = scmp.eq.s32.totalorder %s90, 0
      %p747 = por %p745, %p746
      %p748 = scmp.ne.s32.totalorder %s734, %s735
      %p749 = scmp.eq.s32.totalorder %s91, 3
      %p750 = por %p748, %p749
      %p752 = scmp.ne.s32.totalorder %s735, %s751
      %p753 = scmp.eq.s32.totalorder %s91, 0
      %p754 = por %p752, %p753
      %s755 = ssub.s32 %s93, %s100
      %p756 = scmp.eq.s32.totalorder %s755, 0
      %s758 = sadd.s32 %s757, 1
      %s759 = scalar_select %p756, %s757, %s758
      %p762 = pneg %p756
      %p763 = scmp.eq.s32.totalorder %s85, 3
      %p764 = por %p762, %p763
      %p765 = scmp.ne.s32.totalorder %s757, %s760
      %p766 = scmp.eq.s32.totalorder %s85, 0
      %p767 = por %p765, %p766
      %p768 = scmp.ne.s32.totalorder %s757, %s760
      %p769 = scmp.eq.s32.totalorder %s90, 3
      %p770 = por %p768, %p769
      %p771 = scmp.ne.s32.totalorder %s760, %s761
      %p772 = scmp.eq.s32.totalorder %s90, 0
      %p773 = por %p771, %p772
      %p774 = scmp.ne.s32.totalorder %s760, %s761
      %p775 = scmp.eq.s32.totalorder %s91, 3
      %p776 = por %p774, %p775
      %p778 = scmp.ne.s32.totalorder %s761, %s777
      %p779 = scmp.eq.s32.totalorder %s91, 0
      %p780 = por %p778, %p779
      %s781 = ssub.s32 %s93, %s100
      %p782 = scmp.eq.s32.totalorder %s781, 0
      %s784 = sadd.s32 %s783, 1
      %s785 = scalar_select %p782, %s783, %s784
      %p788 = pneg %p782
      %p789 = scmp.eq.s32.totalorder %s85, 3
      %p790 = por %p788, %p789
      %p791 = scmp.ne.s32.totalorder %s783, %s786
      %p792 = scmp.eq.s32.totalorder %s85, 0
      %p793 = por %p791, %p792
      %p794 = scmp.ne.s32.totalorder %s783, %s786
      %p795 = scmp.eq.s32.totalorder %s90, 3
      %p796 = por %p794, %p795
      %p797 = scmp.ne.s32.totalorder %s786, %s787
      %p798 = scmp.eq.s32.totalorder %s90, 0
      %p799 = por %p797, %p798
      %p800 = scmp.ne.s32.totalorder %s786, %s787
      %p801 = scmp.eq.s32.totalorder %s91, 3
      %p802 = por %p800, %p801
      %p804 = scmp.ne.s32.totalorder %s787, %s803
      %p805 = scmp.eq.s32.totalorder %s91, 0
      %p806 = por %p804, %p805
      %s807 = ssub.s32 %s93, %s100
      %p808 = scmp.eq.s32.totalorder %s807, 0
      %s810 = sadd.s32 %s809, 1
      %s811 = scalar_select %p808, %s809, %s810
      %p814 = pneg %p808
      %p815 = scmp.eq.s32.totalorder %s85, 3
      %p816 = por %p814, %p815
      %p817 = scmp.ne.s32.totalorder %s809, %s812
      %p818 = scmp.eq.s32.totalorder %s85, 0
      %p819 = por %p817, %p818
      %p820 = scmp.ne.s32.totalorder %s809, %s812
      %p821 = scmp.eq.s32.totalorder %s90, 3
      %p822 = por %p820, %p821
      %p823 = scmp.ne.s32.totalorder %s812, %s813
      %p824 = scmp.eq.s32.totalorder %s90, 0
      %p825 = por %p823, %p824
      %p826 = scmp.ne.s32.totalorder %s812, %s813
      %p827 = scmp.eq.s32.totalorder %s91, 3
      %p828 = por %p826, %p827
      %p830 = scmp.ne.s32.totalorder %s813, %s829
      %p831 = scmp.eq.s32.totalorder %s91, 0
      %p832 = por %p830, %p831
      %s833 = ssub.s32 %s93, %s100
      %p834 = scmp.eq.s32.totalorder %s833, 0
      %s836 = sadd.s32 %s835, 1
      %s837 = scalar_select %p834, %s835, %s836
      %p840 = pneg %p834
      %p841 = scmp.eq.s32.totalorder %s85, 3
      %p842 = por %p840, %p841
      %p843 = scmp.ne.s32.totalorder %s835, %s838
      %p844 = scmp.eq.s32.totalorder %s85, 0
      %p845 = por %p843, %p844
      %p846 = scmp.ne.s32.totalorder %s835, %s838
      %p847 = scmp.eq.s32.totalorder %s90, 3
      %p848 = por %p846, %p847
      %p849 = scmp.ne.s32.totalorder %s838, %s839
      %p850 = scmp.eq.s32.totalorder %s90, 0
      %p851 = por %p849, %p850
      %p852 = scmp.ne.s32.totalorder %s838, %s839
      %p853 = scmp.eq.s32.totalorder %s91, 3
      %p854 = por %p852, %p853
      %p856 = scmp.ne.s32.totalorder %s839, %s855
      %p857 = scmp.eq.s32.totalorder %s91, 0
      %p858 = por %p856, %p857
      %s859 = ssub.s32 %s93, %s100
      %p860 = scmp.eq.s32.totalorder %s859, 0
      %s862 = sadd.s32 %s861, 1
      %s863 = scalar_select %p860, %s861, %s862
      %p866 = pneg %p860
      %p867 = scmp.eq.s32.totalorder %s85, 3
      %p868 = por %p866, %p867
      %p869 = scmp.ne.s32.totalorder %s861, %s864
      %p870 = scmp.eq.s32.totalorder %s85, 0
      %p871 = por %p869, %p870
      %p872 = scmp.ne.s32.totalorder %s861, %s864
      %p873 = scmp.eq.s32.totalorder %s90, 3
      %p874 = por %p872, %p873
      %p875 = scmp.ne.s32.totalorder %s864, %s865
      %p876 = scmp.eq.s32.totalorder %s90, 0
      %p877 = por %p875, %p876
      %p878 = scmp.ne.s32.totalorder %s864, %s865
      %p879 = scmp.eq.s32.totalorder %s91, 3
      %p880 = por %p878, %p879
      %p882 = scmp.ne.s32.totalorder %s865, %s881
      %p883 = scmp.eq.s32.totalorder %s91, 0
      %p884 = por %p882, %p883
      %s885 = ssub.s32 %s92, %s104
      %p886 = scmp.eq.s32.totalorder %s885, 0
      %s888 = sadd.s32 %s887, 1
      %s889 = scalar_select %p886, %s887, %s888
      %p892 = pneg %p886
      %p893 = scmp.eq.s32.totalorder %s85, 3
      %p894 = por %p892, %p893
      %p895 = scmp.ne.s32.totalorder %s887, %s890
      %p896 = scmp.eq.s32.totalorder %s85, 0
      %p897 = por %p895, %p896
      %p898 = scmp.ne.s32.totalorder %s887, %s890
      %p899 = scmp.eq.s32.totalorder %s90, 3
      %p900 = por %p898, %p899
      %p901 = scmp.ne.s32.totalorder %s890, %s891
      %p902 = scmp.eq.s32.totalorder %s90, 0
      %p903 = por %p901, %p902
      %p904 = scmp.ne.s32.totalorder %s890, %s891
      %p905 = scmp.eq.s32.totalorder %s91, 3
      %p906 = por %p904, %p905
      %p908 = scmp.ne.s32.totalorder %s891, %s907
      %p909 = scmp.eq.s32.totalorder %s91, 0
      %p910 = por %p908, %p909
      %p911 = scmp.le.s32.totalorder 1, %s85
      %p912 = scmp.lt.s32.totalorder %s85, 5
      %p913 = pnand %p911, %p912
      %p914 = pneg %p913
      // Predicated region
      $region9: #{tpu_custom_call.1} parent=5 // pred_check
        _
      $region10: #{tpu_custom_call.1} parent=5 // pred_check_branch
        %916 = sbr.rel (%p913) target = $region12
      $region11: #{tpu_custom_call.1} parent=5 // pred_region
        %s917 = ssub.s32 %s85, 1
      $region12: #{tpu_custom_call.1} parent=5 // pred_fallthru
        _
      %p918 = scmp.lt.s32.totalorder %s85, 4
      // Predicated region
      $region13: #{tpu_custom_call.1} parent=5 // pred_check
        %p919 = pneg %p918
      $region14: #{tpu_custom_call.1} parent=5 // pred_check_branch
        %921 = sbr.rel (%p919) target = $region16
      $region15: #{tpu_custom_call.1} parent=5 // pred_region
        // Predicated region
        $region17: #{tpu_custom_call.1} parent=15 // pred_check
          %p922 = pneg %p117
        $region18: #{tpu_custom_call.1} parent=15 // pred_check_branch
          %924 = sbr.rel (%p922) target = $region20
        $region19: #{tpu_custom_call.1} parent=15 // pred_region
          %s925 = sand.u32 %s107, 1
          %s926 = scalar_lea.sflag [#allocation3], %s925
          %s927 = sand.u32 %s107, 1
          %s928 = smul.addr %s927, 8
          %s929 = scalar_lea.vmem [#allocation2], %s928
          %s931 = ssub.s32 128, 128
          %932 = vsyncadd %s926, %s931
          %s933 = smul.addr %s92, 128
          %s934 = scalar_lea.hbm %s1, %s933
          %s936 = sshll.u32 %s929, 4
          %s937 = int_to_ptr.vmem [resolvable:$true] %s936
          %939 = dma.hbm_to_vmem [thread:$0]  %s934, 128, %s937, %s926
        $region20: #{tpu_custom_call.1} parent=15 // pred_fallthru
          _
        // Predicated region
        $region21: #{tpu_custom_call.1} parent=15 // pred_check
          %p940 = pneg %p143
        $region22: #{tpu_custom_call.1} parent=15 // pred_check_branch
          %942 = sbr.rel (%p940) target = $region24
        $region23: #{tpu_custom_call.1} parent=15 // pred_region
          %s943 = sand.u32 %s85, 1
          %s944 = scalar_lea.sflag [#allocation6], %s943
          %s945 = sand.u32 %s133, 1
          %s946 = smul.addr %s945, 8
          %s947 = scalar_lea.vmem [#allocation5], %s946
          %s949 = ssub.s32 128, 128
          %950 = vsyncadd %s944, %s949
          %s951 = smul.addr %s92, 128
          %s952 = scalar_lea.hbm %s3, %s951
          %s954 = sshll.u32 %s947, 4
          %s955 = int_to_ptr.vmem [resolvable:$true] %s954
          %957 = dma.hbm_to_vmem [thread:$0]  %s952, 128, %s955, %s944
        $region24: #{tpu_custom_call.1} parent=15 // pred_fallthru
          _
        // Predicated region
        $region25: #{tpu_custom_call.1} parent=15 // pred_check
          %p958 = pneg %p169
        $region26: #{tpu_custom_call.1} parent=15 // pred_check_branch
          %960 = sbr.rel (%p958) target = $region28
        $region27: #{tpu_custom_call.1} parent=15 // pred_region
          %s961 = sand.u32 %s85, 1
          %s962 = scalar_lea.sflag [#allocation6], %s961
          %s963 = sand.u32 %s159, 1
          %s964 = smul.addr %s963, 8
          %s965 = scalar_lea.vmem [#allocation7], %s964
          %s967 = ssub.s32 128, 128
          %968 = vsyncadd %s962, %s967
          %s969 = smul.addr %s92, 128
          %s970 = scalar_lea.hbm %s5, %s969
          %s972 = sshll.u32 %s965, 4
          %s973 = int_to_ptr.vmem [resolvable:$true] %s972
          %975 = dma.hbm_to_vmem [thread:$0]  %s970, 128, %s973, %s962
        $region28: #{tpu_custom_call.1} parent=15 // pred_fallthru
          _
        // Predicated region
        $region29: #{tpu_custom_call.1} parent=15 // pred_check
          %p976 = pneg %p195
        $region30: #{tpu_custom_call.1} parent=15 // pred_check_branch
          %978 = sbr.rel (%p976) target = $region32
        $region31: #{tpu_custom_call.1} parent=15 // pred_region
          %p979 = scmp.lt.s32.totalorder %s92, 1
          %s980 = scalar_select %p979, %s92, 1
          %s981 = scalar_lea.vmem %s7, %s980
        $region32: #{tpu_custom_call.1} parent=15 // pred_fallthru
          _
        // Predicated region
        $region33: #{tpu_custom_call.1} parent=15 // pred_check
          %p982 = pneg %p221
        $region34: #{tpu_custom_call.1} parent=15 // pred_check_branch
          %984 = sbr.rel (%p982) target = $region36
        $region35: #{tpu_custom_call.1} parent=15 // pred_region
          %p985 = scmp.lt.s32.totalorder %s93, 1
          %s986 = scalar_select %p985, %s93, 1
          %s987 = smul.addr %s986, 4
          %s988 = smul.addr %s987, 8
          %s989 = scalar_lea.vmem %s9, %s988
        $region36: #{tpu_custom_call.1} parent=15 // pred_fallthru
          _
        // Predicated region
        $region37: #{tpu_custom_call.1} parent=15 // pred_check
          %p990 = pneg %p247
        $region38: #{tpu_custom_call.1} parent=15 // pred_check_branch
          %992 = sbr.rel (%p990) target = $region40
        $region39: #{tpu_custom_call.1} parent=15 // pred_region
          %p993 = scmp.lt.s32.totalorder %s93, 1
          %s994 = scalar_select %p993, %s93, 1
          %s995 = scalar_lea.vmem %s11, %s994
        $region40: #{tpu_custom_call.1} parent=15 // pred_fallthru
          _
        // Predicated region
        $region41: #{tpu_custom_call.1} parent=15 // pred_check
          %p996 = pneg %p273
        $region42: #{tpu_custom_call.1} parent=15 // pred_check_branch
          %998 = sbr.rel (%p996) target = $region44
        $region43: #{tpu_custom_call.1} parent=15 // pred_region
          %p999 = scmp.lt.s32.totalorder %s93, 1
          %s1000 = scalar_select %p999, %s93, 1
          %s1001 = smul.addr %s1000, 4
          %s1002 = smul.addr %s1001, 8
          %s1003 = scalar_lea.vmem %s13, %s1002
        $region44: #{tpu_custom_call.1} parent=15 // pred_fallthru
          _
        // Predicated region
        $region45: #{tpu_custom_call.1} parent=15 // pred_check
          %p1004 = pneg %p299
        $region46: #{tpu_custom_call.1} parent=15 // pred_check_branch
          %1006 = sbr.rel (%p1004) target = $region48
        $region47: #{tpu_custom_call.1} parent=15 // pred_region
          %p1007 = scmp.lt.s32.totalorder %s93, 1
          %s1008 = scalar_select %p1007, %s93, 1
          %s1009 = scalar_lea.vmem %s15, %s1008
        $region48: #{tpu_custom_call.1} parent=15 // pred_fallthru
          _
        // Predicated region
        $region49: #{tpu_custom_call.1} parent=15 // pred_check
          %p1010 = pneg %p325
        $region50: #{tpu_custom_call.1} parent=15 // pred_check_branch
          %1012 = sbr.rel (%p1010) target = $region52
        $region51: #{tpu_custom_call.1} parent=15 // pred_region
          %p1013 = scmp.lt.s32.totalorder %s93, 1
          %s1014 = scalar_select %p1013, %s93, 1
          %s1015 = smul.addr %s1014, 4
          %s1016 = smul.addr %s1015, 8
          %s1017 = scalar_lea.vmem %s17, %s1016
        $region52: #{tpu_custom_call.1} parent=15 // pred_fallthru
          _
        // Predicated region
        $region53: #{tpu_custom_call.1} parent=15 // pred_check
          %p1018 = pneg %p351
        $region54: #{tpu_custom_call.1} parent=15 // pred_check_branch
          %1020 = sbr.rel (%p1018) target = $region56
        $region55: #{tpu_custom_call.1} parent=15 // pred_region
          %p1021 = scmp.lt.s32.totalorder %s93, 1
          %s1022 = scalar_select %p1021, %s93, 1
          %s1023 = scalar_lea.vmem %s19, %s1022
        $region56: #{tpu_custom_call.1} parent=15 // pred_fallthru
          _
        // Predicated region
        $region57: #{tpu_custom_call.1} parent=15 // pred_check
          %p1024 = pneg %p377
        $region58: #{tpu_custom_call.1} parent=15 // pred_check_branch
          %1026 = sbr.rel (%p1024) target = $region60
        $region59: #{tpu_custom_call.1} parent=15 // pred_region
          %s1027 = sand.u32 %s85, 1
          %s1028 = scalar_lea.sflag [#allocation9], %s1027
          %s1029 = sand.u32 %s367, 1
          %s1030 = smul.addr %s1029, 32
          %s1031 = scalar_lea.vmem [#allocation8], %s1030
          %s1033 = ssub.s32 512, 512
          %1034 = vsyncadd %s1028, %s1033
          %s1035 = smul.addr %s93, 4
          %s1036 = smul.addr %s1035, 128
          %s1037 = scalar_lea.hbm %s21, %s1036
          %s1038 = sshll.u32 %s1031, 4
          %s1039 = int_to_ptr.vmem [resolvable:$true] %s1038
          %1044 = dma.hbm_to_vmem [thread:$0]  %s1037, 512, %s1039, %s1028, 128, 128, 8
        $region60: #{tpu_custom_call.1} parent=15 // pred_fallthru
          _
        // Predicated region
        $region61: #{tpu_custom_call.1} parent=15 // pred_check
          %p1045 = pneg %p403
        $region62: #{tpu_custom_call.1} parent=15 // pred_check_branch
          %1047 = sbr.rel (%p1045) target = $region64
        $region63: #{tpu_custom_call.1} parent=15 // pred_region
          %p1048 = scmp.lt.s32.totalorder %s93, 1
          %s1049 = scalar_select %p1048, %s93, 1
          %s1050 = scalar_lea.vmem %s23, %s1049
        $region64: #{tpu_custom_call.1} parent=15 // pred_fallthru
          _
        // Predicated region
        $region65: #{tpu_custom_call.1} parent=15 // pred_check
          %p1051 = pneg %p429
        $region66: #{tpu_custom_call.1} parent=15 // pred_check_branch
          %1053 = sbr.rel (%p1051) target = $region68
        $region67: #{tpu_custom_call.1} parent=15 // pred_region
          %p1054 = scmp.lt.s32.totalorder %s93, 1
          %s1055 = scalar_select %p1054, %s93, 1
          %s1056 = scalar_lea.vmem %s25, %s1055
        $region68: #{tpu_custom_call.1} parent=15 // pred_fallthru
          _
        // Predicated region
        $region69: #{tpu_custom_call.1} parent=15 // pred_check
          %p1057 = pneg %p455
        $region70: #{tpu_custom_call.1} parent=15 // pred_check_branch
          %1059 = sbr.rel (%p1057) target = $region72
        $region71: #{tpu_custom_call.1} parent=15 // pred_region
          %p1060 = scmp.lt.s32.totalorder %s93, 1
          %s1061 = scalar_select %p1060, %s93, 1
          %s1062 = scalar_lea.vmem %s27, %s1061
        $region72: #{tpu_custom_call.1} parent=15 // pred_fallthru
          _
        // Predicated region
        $region73: #{tpu_custom_call.1} parent=15 // pred_check
          %p1063 = pneg %p481
        $region74: #{tpu_custom_call.1} parent=15 // pred_check_branch
          %1065 = sbr.rel (%p1063) target = $region76
        $region75: #{tpu_custom_call.1} parent=15 // pred_region
          %s1066 = sand.u32 %s85, 1
          %s1067 = scalar_lea.sflag [#allocation9], %s1066
          %s1068 = sand.u32 %s471, 1
          %s1069 = smul.addr %s1068, 32
          %s1070 = scalar_lea.vmem [#allocation10], %s1069
          %s1072 = ssub.s32 512, 512
          %1073 = vsyncadd %s1067, %s1072
          %s1074 = smul.addr %s93, 4
          %s1075 = smul.addr %s1074, 128
          %s1076 = scalar_lea.hbm %s29, %s1075
          %s1077 = sshll.u32 %s1070, 4
          %s1078 = int_to_ptr.vmem [resolvable:$true] %s1077
          %1083 = dma.hbm_to_vmem [thread:$0]  %s1076, 512, %s1078, %s1067, 128, 128, 8
        $region76: #{tpu_custom_call.1} parent=15 // pred_fallthru
          _
        // Predicated region
        $region77: #{tpu_custom_call.1} parent=15 // pred_check
          %p1084 = pneg %p507
        $region78: #{tpu_custom_call.1} parent=15 // pred_check_branch
          %1086 = sbr.rel (%p1084) target = $region80
        $region79: #{tpu_custom_call.1} parent=15 // pred_region
          %p1087 = scmp.lt.s32.totalorder %s93, 1
          %s1088 = scalar_select %p1087, %s93, 1
          %s1089 = scalar_lea.vmem %s31, %s1088
        $region80: #{tpu_custom_call.1} parent=15 // pred_fallthru
          _
        // Predicated region
        $region81: #{tpu_custom_call.1} parent=15 // pred_check
          %p1090 = pneg %p533
        $region82: #{tpu_custom_call.1} parent=15 // pred_check_branch
          %1092 = sbr.rel (%p1090) target = $region84
        $region83: #{tpu_custom_call.1} parent=15 // pred_region
          %s1093 = sand.u32 %s85, 1
          %s1094 = scalar_lea.sflag [#allocation12], %s1093
          %s1095 = sand.u32 %s523, 1
          %s1096 = smul.addr %s1095, 32
          %s1097 = scalar_lea.vmem [#allocation11], %s1096
          %s1099 = ssub.s32 512, 512
          %1100 = vsyncadd %s1094, %s1099
          %s1101 = smul.addr %s93, 4
          %s1102 = smul.addr %s1101, 128
          %s1103 = scalar_lea.hbm %s33, %s1102
          %s1104 = sshll.u32 %s1097, 4
          %s1105 = int_to_ptr.vmem [resolvable:$true] %s1104
          %1110 = dma.hbm_to_vmem [thread:$0]  %s1103, 512, %s1105, %s1094, 128, 128, 8
        $region84: #{tpu_custom_call.1} parent=15 // pred_fallthru
          _
        // Predicated region
        $region85: #{tpu_custom_call.1} parent=15 // pred_check
          %p1111 = pneg %p559
        $region86: #{tpu_custom_call.1} parent=15 // pred_check_branch
          %1113 = sbr.rel (%p1111) target = $region88
        $region87: #{tpu_custom_call.1} parent=15 // pred_region
          %p1114 = scmp.lt.s32.totalorder %s93, 1
          %s1115 = scalar_select %p1114, %s93, 1
          %s1116 = scalar_lea.vmem %s35, %s1115
        $region88: #{tpu_custom_call.1} parent=15 // pred_fallthru
          _
        // Predicated region
        $region89: #{tpu_custom_call.1} parent=15 // pred_check
          %p1117 = pneg %p585
        $region90: #{tpu_custom_call.1} parent=15 // pred_check_branch
          %1119 = sbr.rel (%p1117) target = $region92
        $region91: #{tpu_custom_call.1} parent=15 // pred_region
          %s1120 = sand.u32 %s85, 1
          %s1121 = scalar_lea.sflag [#allocation12], %s1120
          %s1122 = sand.u32 %s575, 1
          %s1123 = smul.addr %s1122, 32
          %s1124 = scalar_lea.vmem [#allocation13], %s1123
          %s1126 = ssub.s32 512, 512
          %1127 = vsyncadd %s1121, %s1126
          %s1128 = smul.addr %s93, 4
          %s1129 = smul.addr %s1128, 128
          %s1130 = scalar_lea.hbm %s37, %s1129
          %s1131 = sshll.u32 %s1124, 4
          %s1132 = int_to_ptr.vmem [resolvable:$true] %s1131
          %1137 = dma.hbm_to_vmem [thread:$0]  %s1130, 512, %s1132, %s1121, 128, 128, 8
        $region92: #{tpu_custom_call.1} parent=15 // pred_fallthru
          _
        // Predicated region
        $region93: #{tpu_custom_call.1} parent=15 // pred_check
          %p1138 = pneg %p611
        $region94: #{tpu_custom_call.1} parent=15 // pred_check_branch
          %1140 = sbr.rel (%p1138) target = $region96
        $region95: #{tpu_custom_call.1} parent=15 // pred_region
          %p1141 = scmp.lt.s32.totalorder %s93, 1
          %s1142 = scalar_select %p1141, %s93, 1
          %s1143 = scalar_lea.vmem %s39, %s1142
        $region96: #{tpu_custom_call.1} parent=15 // pred_fallthru
          _
        // Predicated region
        $region97: #{tpu_custom_call.1} parent=15 // pred_check
          %p1144 = pneg %p637
        $region98: #{tpu_custom_call.1} parent=15 // pred_check_branch
          %1146 = sbr.rel (%p1144) target = $region100
        $region99: #{tpu_custom_call.1} parent=15 // pred_region
          %s1147 = sand.u32 %s85, 1
          %s1148 = scalar_lea.sflag [#allocation15], %s1147
          %s1149 = sand.u32 %s627, 1
          %s1150 = smul.addr %s1149, 32
          %s1151 = scalar_lea.vmem [#allocation14], %s1150
          %s1153 = ssub.s32 512, 512
          %1154 = vsyncadd %s1148, %s1153
          %s1155 = smul.addr %s93, 4
          %s1156 = smul.addr %s1155, 128
          %s1157 = scalar_lea.hbm %s41, %s1156
          %s1158 = sshll.u32 %s1151, 4
          %s1159 = int_to_ptr.vmem [resolvable:$true] %s1158
          %1164 = dma.hbm_to_vmem [thread:$0]  %s1157, 512, %s1159, %s1148, 128, 128, 8
        $region100: #{tpu_custom_call.1} parent=15 // pred_fallthru
          _
        // Predicated region
        $region101: #{tpu_custom_call.1} parent=15 // pred_check
          %p1165 = pneg %p663
        $region102: #{tpu_custom_call.1} parent=15 // pred_check_branch
          %1167 = sbr.rel (%p1165) target = $region104
        $region103: #{tpu_custom_call.1} parent=15 // pred_region
          %p1168 = scmp.lt.s32.totalorder %s93, 1
          %s1169 = scalar_select %p1168, %s93, 1
          %s1170 = scalar_lea.vmem %s43, %s1169
        $region104: #{tpu_custom_call.1} parent=15 // pred_fallthru
          _
        // Predicated region
        $region105: #{tpu_custom_call.1} parent=15 // pred_check
          %p1171 = pneg %p689
        $region106: #{tpu_custom_call.1} parent=15 // pred_check_branch
          %1173 = sbr.rel (%p1171) target = $region108
        $region107: #{tpu_custom_call.1} parent=15 // pred_region
          %p1174 = scmp.lt.s32.totalorder %s93, 1
          %s1175 = scalar_select %p1174, %s93, 1
          %s1176 = scalar_lea.vmem %s45, %s1175
        $region108: #{tpu_custom_call.1} parent=15 // pred_fallthru
          _
        // Predicated region
        $region109: #{tpu_custom_call.1} parent=15 // pred_check
          %p1177 = pneg %p715
        $region110: #{tpu_custom_call.1} parent=15 // pred_check_branch
          %1179 = sbr.rel (%p1177) target = $region112
        $region111: #{tpu_custom_call.1} parent=15 // pred_region
          %p1180 = scmp.lt.s32.totalorder %s93, 1
          %s1181 = scalar_select %p1180, %s93, 1
          %s1182 = scalar_lea.vmem %s47, %s1181
        $region112: #{tpu_custom_call.1} parent=15 // pred_fallthru
          _
        // Predicated region
        $region113: #{tpu_custom_call.1} parent=15 // pred_check
          %p1183 = pneg %p741
        $region114: #{tpu_custom_call.1} parent=15 // pred_check_branch
          %1185 = sbr.rel (%p1183) target = $region116
        $region115: #{tpu_custom_call.1} parent=15 // pred_region
          %s1186 = sand.u32 %s85, 1
          %s1187 = scalar_lea.sflag [#allocation15], %s1186
          %s1188 = sand.u32 %s731, 1
          %s1189 = smul.addr %s1188, 32
          %s1190 = scalar_lea.vmem [#allocation16], %s1189
          %s1192 = ssub.s32 512, 512
          %1193 = vsyncadd %s1187, %s1192
          %s1194 = smul.addr %s93, 4
          %s1195 = smul.addr %s1194, 128
          %s1196 = scalar_lea.hbm %s49, %s1195
          %s1197 = sshll.u32 %s1190, 4
          %s1198 = int_to_ptr.vmem [resolvable:$true] %s1197
          %1203 = dma.hbm_to_vmem [thread:$0]  %s1196, 512, %s1198, %s1187, 128, 128, 8
        $region116: #{tpu_custom_call.1} parent=15 // pred_fallthru
          _
        // Predicated region
        $region117: #{tpu_custom_call.1} parent=15 // pred_check
          %p1204 = pneg %p767
        $region118: #{tpu_custom_call.1} parent=15 // pred_check_branch
          %1206 = sbr.rel (%p1204) target = $region120
        $region119: #{tpu_custom_call.1} parent=15 // pred_region
          %p1207 = scmp.lt.s32.totalorder %s93, 1
          %s1208 = scalar_select %p1207, %s93, 1
          %s1209 = scalar_lea.vmem %s51, %s1208
        $region120: #{tpu_custom_call.1} parent=15 // pred_fallthru
          _
        // Predicated region
        $region121: #{tpu_custom_call.1} parent=15 // pred_check
          %p1210 = pneg %p793
        $region122: #{tpu_custom_call.1} parent=15 // pred_check_branch
          %1212 = sbr.rel (%p1210) target = $region124
        $region123: #{tpu_custom_call.1} parent=15 // pred_region
          %p1213 = scmp.lt.s32.totalorder %s93, 1
          %s1214 = scalar_select %p1213, %s93, 1
          %s1215 = smul.addr %s1214, 8
          %s1216 = smul.addr %s1215, 8
          %s1217 = scalar_lea.vmem %s53, %s1216
        $region124: #{tpu_custom_call.1} parent=15 // pred_fallthru
          _
        // Predicated region
        $region125: #{tpu_custom_call.1} parent=15 // pred_check
          %p1218 = pneg %p819
        $region126: #{tpu_custom_call.1} parent=15 // pred_check_branch
          %1220 = sbr.rel (%p1218) target = $region128
        $region127: #{tpu_custom_call.1} parent=15 // pred_region
          %p1221 = scmp.lt.s32.totalorder %s93, 1
          %s1222 = scalar_select %p1221, %s93, 1
          %s1223 = scalar_lea.vmem %s55, %s1222
        $region128: #{tpu_custom_call.1} parent=15 // pred_fallthru
          _
        // Predicated region
        $region129: #{tpu_custom_call.1} parent=15 // pred_check
          %p1224 = pneg %p845
        $region130: #{tpu_custom_call.1} parent=15 // pred_check_branch
          %1226 = sbr.rel (%p1224) target = $region132
        $region131: #{tpu_custom_call.1} parent=15 // pred_region
          %p1227 = scmp.lt.s32.totalorder %s93, 1
          %s1228 = scalar_select %p1227, %s93, 1
          %s1229 = scalar_lea.vmem %s57, %s1228
        $region132: #{tpu_custom_call.1} parent=15 // pred_fallthru
          _
        // Predicated region
        $region133: #{tpu_custom_call.1} parent=15 // pred_check
          %p1230 = pneg %p871
        $region134: #{tpu_custom_call.1} parent=15 // pred_check_branch
          %1232 = sbr.rel (%p1230) target = $region136
        $region135: #{tpu_custom_call.1} parent=15 // pred_region
          %p1233 = scmp.lt.s32.totalorder %s93, 1
          %s1234 = scalar_select %p1233, %s93, 1
          %s1235 = scalar_lea.vmem %s59, %s1234
        $region136: #{tpu_custom_call.1} parent=15 // pred_fallthru
          _
      $region16: #{tpu_custom_call.1} parent=5 // pred_fallthru
        _
      %p1236 = scmp.le.s32.totalorder 1, %s85
      %p1237 = scmp.lt.s32.totalorder %s85, 5
      %p1238 = pnand %p1236, %p1237
      %p1239 = pneg %p1238
      // Predicated region
      $region137: #{tpu_custom_call.1} parent=5 // pred_check
        _
      $region138: #{tpu_custom_call.1} parent=5 // pred_check_branch
        %1241 = sbr.rel (%p1238) target = $region140
      $region139: #{tpu_custom_call.1} parent=5 // pred_region
        %s1242 = ssub.s32 %s85, 1
        %s1243 = sand.u32 %s110, 1
        %s1244 = scalar_lea.sflag [#allocation3], %s1243
        %s1245 = sand.u32 %s110, 1
        %s1246 = smul.addr %s1245, 8
        %s1247 = scalar_lea.vmem [#allocation2], %s1246
        // Predicated region
        $region141: #{tpu_custom_call.1} parent=139 // pred_check
          %p1248 = pneg %p123
        $region142: #{tpu_custom_call.1} parent=139 // pred_check_branch
          %1250 = sbr.rel (%p1248) target = $region144
        $region143: #{tpu_custom_call.1} parent=139 // pred_region
          %1251 = dma.done %s1244, 128
        $region144: #{tpu_custom_call.1} parent=139 // pred_fallthru
          _
        %s1252 = sand.u32 %s90, 1
        %s1253 = scalar_lea.sflag [#allocation6], %s1252
        %s1254 = sand.u32 %s136, 1
        %s1255 = smul.addr %s1254, 8
        %s1256 = scalar_lea.vmem [#allocation5], %s1255
        // Predicated region
        $region145: #{tpu_custom_call.1} parent=139 // pred_check
          %p1257 = pneg %p149
        $region146: #{tpu_custom_call.1} parent=139 // pred_check_branch
          %1259 = sbr.rel (%p1257) target = $region148
        $region147: #{tpu_custom_call.1} parent=139 // pred_region
          %1260 = dma.done %s1253, 128
        $region148: #{tpu_custom_call.1} parent=139 // pred_fallthru
          _
        %s1261 = sand.u32 %s90, 1
        %s1262 = scalar_lea.sflag [#allocation6], %s1261
        %s1263 = sand.u32 %s162, 1
        %s1264 = smul.addr %s1263, 8
        %s1265 = scalar_lea.vmem [#allocation7], %s1264
        // Predicated region
        $region149: #{tpu_custom_call.1} parent=139 // pred_check
          %p1266 = pneg %p175
        $region150: #{tpu_custom_call.1} parent=139 // pred_check_branch
          %1268 = sbr.rel (%p1266) target = $region152
        $region151: #{tpu_custom_call.1} parent=139 // pred_region
          %1269 = dma.done %s1262, 128
        $region152: #{tpu_custom_call.1} parent=139 // pred_fallthru
          _
        %s1270 = sand.u32 %s90, 1
        %s1271 = scalar_lea.sflag [#allocation9], %s1270
        %s1272 = sand.u32 %s370, 1
        %s1273 = smul.addr %s1272, 32
        %s1274 = scalar_lea.vmem [#allocation8], %s1273
        // Predicated region
        $region153: #{tpu_custom_call.1} parent=139 // pred_check
          %p1275 = pneg %p383
        $region154: #{tpu_custom_call.1} parent=139 // pred_check_branch
          %1277 = sbr.rel (%p1275) target = $region156
        $region155: #{tpu_custom_call.1} parent=139 // pred_region
          %1278 = dma.done %s1271, 512
        $region156: #{tpu_custom_call.1} parent=139 // pred_fallthru
          _
        %s1279 = sand.u32 %s90, 1
        %s1280 = scalar_lea.sflag [#allocation9], %s1279
        %s1281 = sand.u32 %s474, 1
        %s1282 = smul.addr %s1281, 32
        %s1283 = scalar_lea.vmem [#allocation10], %s1282
        // Predicated region
        $region157: #{tpu_custom_call.1} parent=139 // pred_check
          %p1284 = pneg %p487
        $region158: #{tpu_custom_call.1} parent=139 // pred_check_branch
          %1286 = sbr.rel (%p1284) target = $region160
        $region159: #{tpu_custom_call.1} parent=139 // pred_region
          %1287 = dma.done %s1280, 512
        $region160: #{tpu_custom_call.1} parent=139 // pred_fallthru
          _
        %s1288 = sand.u32 %s90, 1
        %s1289 = scalar_lea.sflag [#allocation12], %s1288
        %s1290 = sand.u32 %s526, 1
        %s1291 = smul.addr %s1290, 32
        %s1292 = scalar_lea.vmem [#allocation11], %s1291
        // Predicated region
        $region161: #{tpu_custom_call.1} parent=139 // pred_check
          %p1293 = pneg %p539
        $region162: #{tpu_custom_call.1} parent=139 // pred_check_branch
          %1295 = sbr.rel (%p1293) target = $region164
        $region163: #{tpu_custom_call.1} parent=139 // pred_region
          %1296 = dma.done %s1289, 512
        $region164: #{tpu_custom_call.1} parent=139 // pred_fallthru
          _
        %s1297 = sand.u32 %s90, 1
        %s1298 = scalar_lea.sflag [#allocation12], %s1297
        %s1299 = sand.u32 %s578, 1
        %s1300 = smul.addr %s1299, 32
        %s1301 = scalar_lea.vmem [#allocation13], %s1300
        // Predicated region
        $region165: #{tpu_custom_call.1} parent=139 // pred_check
          %p1302 = pneg %p591
        $region166: #{tpu_custom_call.1} parent=139 // pred_check_branch
          %1304 = sbr.rel (%p1302) target = $region168
        $region167: #{tpu_custom_call.1} parent=139 // pred_region
          %1305 = dma.done %s1298, 512
        $region168: #{tpu_custom_call.1} parent=139 // pred_fallthru
          _
        %s1306 = sand.u32 %s90, 1
        %s1307 = scalar_lea.sflag [#allocation15], %s1306
        %s1308 = sand.u32 %s630, 1
        %s1309 = smul.addr %s1308, 32
        %s1310 = scalar_lea.vmem [#allocation14], %s1309
        // Predicated region
        $region169: #{tpu_custom_call.1} parent=139 // pred_check
          %p1311 = pneg %p643
        $region170: #{tpu_custom_call.1} parent=139 // pred_check_branch
          %1313 = sbr.rel (%p1311) target = $region172
        $region171: #{tpu_custom_call.1} parent=139 // pred_region
          %1314 = dma.done %s1307, 512
        $region172: #{tpu_custom_call.1} parent=139 // pred_fallthru
          _
        %s1315 = sand.u32 %s90, 1
        %s1316 = scalar_lea.sflag [#allocation15], %s1315
        %s1317 = sand.u32 %s734, 1
        %s1318 = smul.addr %s1317, 32
        %s1319 = scalar_lea.vmem [#allocation16], %s1318
        // Predicated region
        $region173: #{tpu_custom_call.1} parent=139 // pred_check
          %p1320 = pneg %p747
        $region174: #{tpu_custom_call.1} parent=139 // pred_check_branch
          %1322 = sbr.rel (%p1320) target = $region176
        $region175: #{tpu_custom_call.1} parent=139 // pred_region
          %1323 = dma.done %s1316, 512
        $region176: #{tpu_custom_call.1} parent=139 // pred_fallthru
          _
        %s1324 = sand.u32 %s110, 1
        %s1325 = scalar_lea.sflag [#allocation3], %s1324
        %s1326 = sand.u32 %s110, 1
        %s1327 = smul.addr %s1326, 8
        %s1328 = scalar_lea.vmem [#allocation2], %s1327
        %p1329 = pneg %p123
        %p1330 = pneg %p120
        %s1331 = sand.u32 %s90, 1
        %s1332 = scalar_lea.sflag [#allocation6], %s1331
        %s1333 = sand.u32 %s136, 1
        %s1334 = smul.addr %s1333, 8
        %s1335 = scalar_lea.vmem [#allocation5], %s1334
        %p1336 = pneg %p149
        %p1337 = pneg %p146
        %s1338 = sand.u32 %s90, 1
        %s1339 = scalar_lea.sflag [#allocation6], %s1338
        %s1340 = sand.u32 %s162, 1
        %s1341 = smul.addr %s1340, 8
        %s1342 = scalar_lea.vmem [#allocation7], %s1341
        %p1343 = pneg %p175
        %p1344 = pneg %p172
        %p1345 = scmp.lt.s32.totalorder %s94, 1
        %s1346 = scalar_select %p1345, %s94, 1
        %s1347 = scalar_lea.vmem %s7, %s1346
        %p1348 = pneg %p201
        %p1349 = pneg %p198
        %p1350 = scmp.lt.s32.totalorder %s95, 1
        %s1351 = scalar_select %p1350, %s95, 1
        %s1352 = smul.addr %s1351, 4
        %s1353 = smul.addr %s1352, 8
        %s1354 = scalar_lea.vmem %s9, %s1353
        %p1355 = pneg %p227
        %p1356 = pneg %p224
        %p1357 = scmp.lt.s32.totalorder %s95, 1
        %s1358 = scalar_select %p1357, %s95, 1
        %s1359 = scalar_lea.vmem %s11, %s1358
        %p1360 = pneg %p253
        %p1361 = pneg %p250
        %p1362 = scmp.lt.s32.totalorder %s95, 1
        %s1363 = scalar_select %p1362, %s95, 1
        %s1364 = smul.addr %s1363, 4
        %s1365 = smul.addr %s1364, 8
        %s1366 = scalar_lea.vmem %s13, %s1365
        %p1367 = pneg %p279
        %p1368 = pneg %p276
        %p1369 = scmp.lt.s32.totalorder %s95, 1
        %s1370 = scalar_select %p1369, %s95, 1
        %s1371 = scalar_lea.vmem %s15, %s1370
        %p1372 = pneg %p305
        %p1373 = pneg %p302
        %p1374 = scmp.lt.s32.totalorder %s95, 1
        %s1375 = scalar_select %p1374, %s95, 1
        %s1376 = smul.addr %s1375, 4
        %s1377 = smul.addr %s1376, 8
        %s1378 = scalar_lea.vmem %s17, %s1377
        %p1379 = pneg %p331
        %p1380 = pneg %p328
        %p1381 = scmp.lt.s32.totalorder %s95, 1
        %s1382 = scalar_select %p1381, %s95, 1
        %s1383 = scalar_lea.vmem %s19, %s1382
        %p1384 = pneg %p357
        %p1385 = pneg %p354
        %s1386 = sand.u32 %s90, 1
        %s1387 = scalar_lea.sflag [#allocation9], %s1386
        %s1388 = sand.u32 %s370, 1
        %s1389 = smul.addr %s1388, 32
        %s1390 = scalar_lea.vmem [#allocation8], %s1389
        %p1391 = pneg %p383
        %p1392 = pneg %p380
        %p1393 = scmp.lt.s32.totalorder %s95, 1
        %s1394 = scalar_select %p1393, %s95, 1
        %s1395 = scalar_lea.vmem %s23, %s1394
        %p1396 = pneg %p409
        %p1397 = pneg %p406
        %p1398 = scmp.lt.s32.totalorder %s95, 1
        %s1399 = scalar_select %p1398, %s95, 1
        %s1400 = scalar_lea.vmem %s25, %s1399
        %p1401 = pneg %p435
        %p1402 = pneg %p432
        %p1403 = scmp.lt.s32.totalorder %s95, 1
        %s1404 = scalar_select %p1403, %s95, 1
        %s1405 = scalar_lea.vmem %s27, %s1404
        %p1406 = pneg %p461
        %p1407 = pneg %p458
        %s1408 = sand.u32 %s90, 1
        %s1409 = scalar_lea.sflag [#allocation9], %s1408
        %s1410 = sand.u32 %s474, 1
        %s1411 = smul.addr %s1410, 32
        %s1412 = scalar_lea.vmem [#allocation10], %s1411
        %p1413 = pneg %p487
        %p1414 = pneg %p484
        %p1415 = scmp.lt.s32.totalorder %s95, 1
        %s1416 = scalar_select %p1415, %s95, 1
        %s1417 = scalar_lea.vmem %s31, %s1416
        %p1418 = pneg %p513
        %p1419 = pneg %p510
        %s1420 = sand.u32 %s90, 1
        %s1421 = scalar_lea.sflag [#allocation12], %s1420
        %s1422 = sand.u32 %s526, 1
        %s1423 = smul.addr %s1422, 32
        %s1424 = scalar_lea.vmem [#allocation11], %s1423
        %p1425 = pneg %p539
        %p1426 = pneg %p536
        %p1427 = scmp.lt.s32.totalorder %s95, 1
        %s1428 = scalar_select %p1427, %s95, 1
        %s1429 = scalar_lea.vmem %s35, %s1428
        %p1430 = pneg %p565
        %p1431 = pneg %p562
        %s1432 = sand.u32 %s90, 1
        %s1433 = scalar_lea.sflag [#allocation12], %s1432
        %s1434 = sand.u32 %s578, 1
        %s1435 = smul.addr %s1434, 32
        %s1436 = scalar_lea.vmem [#allocation13], %s1435
        %p1437 = pneg %p591
        %p1438 = pneg %p588
        %p1439 = scmp.lt.s32.totalorder %s95, 1
        %s1440 = scalar_select %p1439, %s95, 1
        %s1441 = scalar_lea.vmem %s39, %s1440
        %p1442 = pneg %p617
        %p1443 = pneg %p614
        %s1444 = sand.u32 %s90, 1
        %s1445 = scalar_lea.sflag [#allocation15], %s1444
        %s1446 = sand.u32 %s630, 1
        %s1447 = smul.addr %s1446, 32
        %s1448 = scalar_lea.vmem [#allocation14], %s1447
        %p1449 = pneg %p643
        %p1450 = pneg %p640
        %p1451 = scmp.lt.s32.totalorder %s95, 1
        %s1452 = scalar_select %p1451, %s95, 1
        %s1453 = scalar_lea.vmem %s43, %s1452
        %p1454 = pneg %p669
        %p1455 = pneg %p666
        %p1456 = scmp.lt.s32.totalorder %s95, 1
        %s1457 = scalar_select %p1456, %s95, 1
        %s1458 = scalar_lea.vmem %s45, %s1457
        %p1459 = pneg %p695
        %p1460 = pneg %p692
        %p1461 = scmp.lt.s32.totalorder %s95, 1
        %s1462 = scalar_select %p1461, %s95, 1
        %s1463 = scalar_lea.vmem %s47, %s1462
        %p1464 = pneg %p721
        %p1465 = pneg %p718
        %s1466 = sand.u32 %s90, 1
        %s1467 = scalar_lea.sflag [#allocation15], %s1466
        %s1468 = sand.u32 %s734, 1
        %s1469 = smul.addr %s1468, 32
        %s1470 = scalar_lea.vmem [#allocation16], %s1469
        %p1471 = pneg %p747
        %p1472 = pneg %p744
        %p1473 = scmp.lt.s32.totalorder %s95, 1
        %s1474 = scalar_select %p1473, %s95, 1
        %s1475 = scalar_lea.vmem %s51, %s1474
        %p1476 = pneg %p773
        %p1477 = pneg %p770
        %p1478 = scmp.lt.s32.totalorder %s95, 1
        %s1479 = scalar_select %p1478, %s95, 1
        %s1480 = smul.addr %s1479, 8
        %s1481 = smul.addr %s1480, 8
        %s1482 = scalar_lea.vmem %s53, %s1481
        %p1483 = pneg %p799
        %p1484 = pneg %p796
        %p1485 = scmp.lt.s32.totalorder %s95, 1
        %s1486 = scalar_select %p1485, %s95, 1
        %s1487 = scalar_lea.vmem %s55, %s1486
        %p1488 = pneg %p825
        %p1489 = pneg %p822
        %p1490 = scmp.lt.s32.totalorder %s95, 1
        %s1491 = scalar_select %p1490, %s95, 1
        %s1492 = scalar_lea.vmem %s57, %s1491
        %p1493 = pneg %p851
        %p1494 = pneg %p848
        %p1495 = scmp.lt.s32.totalorder %s95, 1
        %s1496 = scalar_select %p1495, %s95, 1
        %s1497 = scalar_lea.vmem %s59, %s1496
        %p1498 = pneg %p877
        %p1499 = pneg %p874
        %p1500 = pneg %p903
        %p1501 = pneg %p900
        %s1502 = sand.u32 %s890, 1
        %s1503 = scalar_lea.sflag [#allocation4], %s1502
        %s1504 = sand.u32 %s890, 1
        %s1505 = smul.addr %s1504, 8
        %s1506 = scalar_lea.vmem [#allocation17], %s1505
        %p1507 = scmp.lt.s32.totalorder %s94, 1
        %s1508 = scalar_select %p1507, %s94, 1
        %s1509 = scalar_lea.vmem %s7, %s1508
        %p1510 = scmp.lt.s32.totalorder %s95, 1
        %s1511 = scalar_select %p1510, %s95, 1
        %s1512 = smul.addr %s1511, 4
        %s1513 = smul.addr %s1512, 8
        %s1514 = scalar_lea.vmem %s9, %s1513
        %p1515 = scmp.lt.s32.totalorder %s95, 1
        %s1516 = scalar_select %p1515, %s95, 1
        %s1517 = scalar_lea.vmem %s11, %s1516
        %p1518 = scmp.lt.s32.totalorder %s95, 1
        %s1519 = scalar_select %p1518, %s95, 1
        %s1520 = smul.addr %s1519, 4
        %s1521 = smul.addr %s1520, 8
        %s1522 = scalar_lea.vmem %s13, %s1521
        %p1523 = scmp.lt.s32.totalorder %s95, 1
        %s1524 = scalar_select %p1523, %s95, 1
        %s1525 = scalar_lea.vmem %s15, %s1524
        %p1526 = scmp.lt.s32.totalorder %s95, 1
        %s1527 = scalar_select %p1526, %s95, 1
        %s1528 = smul.addr %s1527, 4
        %s1529 = smul.addr %s1528, 8
        %s1530 = scalar_lea.vmem %s17, %s1529
        %p1531 = scmp.lt.s32.totalorder %s95, 1
        %s1532 = scalar_select %p1531, %s95, 1
        %s1533 = scalar_lea.vmem %s19, %s1532
        %p1534 = scmp.lt.s32.totalorder %s95, 1
        %s1535 = scalar_select %p1534, %s95, 1
        %s1536 = scalar_lea.vmem %s23, %s1535
        %p1537 = scmp.lt.s32.totalorder %s95, 1
        %s1538 = scalar_select %p1537, %s95, 1
        %s1539 = scalar_lea.vmem %s25, %s1538
        %p1540 = scmp.lt.s32.totalorder %s95, 1
        %s1541 = scalar_select %p1540, %s95, 1
        %s1542 = scalar_lea.vmem %s27, %s1541
        %p1543 = scmp.lt.s32.totalorder %s95, 1
        %s1544 = scalar_select %p1543, %s95, 1
        %s1545 = scalar_lea.vmem %s31, %s1544
        %p1546 = scmp.lt.s32.totalorder %s95, 1
        %s1547 = scalar_select %p1546, %s95, 1
        %s1548 = scalar_lea.vmem %s35, %s1547
        %p1549 = scmp.lt.s32.totalorder %s95, 1
        %s1550 = scalar_select %p1549, %s95, 1
        %s1551 = scalar_lea.vmem %s39, %s1550
        %p1552 = scmp.lt.s32.totalorder %s95, 1
        %s1553 = scalar_select %p1552, %s95, 1
        %s1554 = scalar_lea.vmem %s43, %s1553
        %p1555 = scmp.lt.s32.totalorder %s95, 1
        %s1556 = scalar_select %p1555, %s95, 1
        %s1557 = scalar_lea.vmem %s45, %s1556
        %p1558 = scmp.lt.s32.totalorder %s95, 1
        %s1559 = scalar_select %p1558, %s95, 1
        %s1560 = scalar_lea.vmem %s47, %s1559
        %p1561 = scmp.lt.s32.totalorder %s95, 1
        %s1562 = scalar_select %p1561, %s95, 1
        %s1563 = scalar_lea.vmem %s51, %s1562
        %p1564 = scmp.lt.s32.totalorder %s95, 1
        %s1565 = scalar_select %p1564, %s95, 1
        %s1566 = smul.addr %s1565, 8
        %s1567 = smul.addr %s1566, 8
        %s1568 = scalar_lea.vmem %s53, %s1567
        %p1569 = scmp.lt.s32.totalorder %s95, 1
        %s1570 = scalar_select %p1569, %s95, 1
        %s1571 = scalar_lea.vmem %s55, %s1570
        %p1572 = scmp.lt.s32.totalorder %s95, 1
        %s1573 = scalar_select %p1572, %s95, 1
        %s1574 = scalar_lea.vmem %s57, %s1573
        %p1575 = scmp.lt.s32.totalorder %s95, 1
        %s1576 = scalar_select %p1575, %s95, 1
        %s1577 = scalar_lea.vmem %s59, %s1576
        %p1578 = scmp.eq.s32.totalorder %s95, 0
        // Predicated region
        $region177: #{tpu_custom_call.1} parent=139 // pred_check
          %p1579 = pneg %p1578
        $region178: #{tpu_custom_call.1} parent=139 // pred_check_branch
          %1581 = sbr.rel (%p1579) target = $region180
        $region179: #{tpu_custom_call.1} parent=139 // pred_region
          %v1582 = vld [vmem:[%s1247] sm:$0xff]
          %vm1583 = vcmask 261120
          %1584 = vst.msk [vmem:[%s1506] sm:$0xff] %vm1583, %v1582
        $region180: #{tpu_custom_call.1} parent=139 // pred_fallthru
          _
        %v1585 = vld [vmem:[%s1506] sm:$0xff]
        %v1586 = vld [vmem:[%s1256] sm:$0xff]
        %v1587 = vld [vmem:[%s1265] sm:$0xff]
        %v1588 = vld [vmem:[%s1514] sm:$0xff]
        %v1589 = vld [vmem:[%s1514 + $0x8] sm:$0xff]
        %v1590 = vld [vmem:[%s1514 + $0x10] sm:$0xff]
        %v1591 = vld [vmem:[%s1514 + $0x18] sm:$0xff]
        %v1592 = vld [vmem:[%s1517] sm:$0x1]
        %v1593 = vld [vmem:[%s1522] sm:$0xff]
        %v1594 = vld [vmem:[%s1522 + $0x8] sm:$0xff]
        %v1595 = vld [vmem:[%s1522 + $0x10] sm:$0xff]
        %v1596 = vld [vmem:[%s1522 + $0x18] sm:$0xff]
        %v1597 = vld [vmem:[%s1525] sm:$0x1]
        %v1598 = vld [vmem:[%s1530] sm:$0xff]
        %v1599 = vld [vmem:[%s1530 + $0x8] sm:$0xff]
        %v1600 = vld [vmem:[%s1530 + $0x10] sm:$0xff]
        %v1601 = vld [vmem:[%s1530 + $0x18] sm:$0xff]
        %v1602 = vld [vmem:[%s1533] sm:$0x1]
        %v1603 = vld [vmem:[%s1274] sm:$0xff]
        %v1604 = vld [vmem:[%s1274 + $0x8] sm:$0xff]
        %v1605 = vld [vmem:[%s1274 + $0x10] sm:$0xff]
        %v1606 = vld [vmem:[%s1274 + $0x18] sm:$0xff]
        %v1607 = vld [vmem:[%s1536] sm:$0x1]
        %v1609 = vlaneseq
        %v1610 = vshrl.u32 %v1609, 7
        %v1611 = vsub.s32 0, %v1610
        %v1612 = vrot.slane %v1592, %v1611
        %vm1614 = vcmask 261120
        %v1616 = vsel %vm1614, %v1585, 0
        %1618 = vmatprep.subr.mxu0 0.0
        %1619 = vmatpush1.msra.mxu0 %v1588
        %1620 = vmatprep.subr.mxu0 0.0
        %1621 = vmatpush1.msra.mxu0 %v1589
        %1622 = vmatprep.subr.mxu0 0.0
        %1623 = vmatpush1.msra.mxu0 %v1590
        %1624 = vmatprep.subr.mxu0 0.0
        %1625 = vmatpush1.msra.mxu0 %v1591
        %1626 = vmatprep.subr.mxu0 0.0
        %1627 = vmatpush1.msra.mxu0 0.0
        %1628 = vmatprep.subr.mxu0 0.0
        %1629 = vmatpush1.msra.mxu0 0.0
        %1630 = vmatprep.subr.mxu0 0.0
        %1631 = vmatpush1.msra.mxu0 0.0
        %1632 = vmatprep.subr.mxu0 0.0
        %1633 = vmatpush1.msra.mxu0 0.0
        %1634 = vmatprep.subr.mxu0 0.0
        %1635 = vmatpush1.msra.mxu0 0.0
        %1636 = vmatprep.subr.mxu0 0.0
        %1637 = vmatpush1.msra.mxu0 0.0
        %1638 = vmatprep.subr.mxu0 0.0
        %1639 = vmatpush1.msra.mxu0 0.0
        %1640 = vmatprep.subr.mxu0 0.0
        %1641 = vmatpush1.msra.mxu0 0.0
        %1642 = vmatprep.subr.mxu0 0.0
        %1643 = vmatpush1.msra.mxu0 0.0
        %1644 = vmatprep.subr.mxu0 0.0
        %1645 = vmatpush1.msra.mxu0 0.0
        %1646 = vmatprep.subr.mxu0 0.0
        %1647 = vmatpush1.msra.mxu0 0.0
        %1648 = vmatprep.subr.mxu0 0.0
        %1649 = vmatpush1.msra.mxu0 0.0
        %1650 = vmatprep.subr.mxu0 0.0
        %1651 = vmatpush1.msra.mxu0 0.0
        %1652 = vmatprep.subr.mxu0 0.0
        %1653 = vmatpush1.msra.mxu0 0.0
        %1654 = vmatprep.subr.mxu0 0.0
        %1655 = vmatpush1.msra.mxu0 0.0
        %1656 = vmatprep.subr.mxu0 0.0
        %1657 = vmatpush1.msra.mxu0 0.0
        %1658 = vmatprep.subr.mxu0 0.0
        %1659 = vmatpush1.msra.mxu0 0.0
        %1660 = vmatprep.subr.mxu0 0.0
        %1661 = vmatpush1.msra.mxu0 0.0
        %1662 = vmatprep.subr.mxu0 0.0
        %1663 = vmatpush1.msra.mxu0 0.0
        %1664 = vmatprep.subr.mxu0 0.0
        %1665 = vmatpush1.msra.mxu0 0.0
        %1666 = vmatprep.subr.mxu0 0.0
        %1667 = vmatpush1.msra.mxu0 0.0
        %1668 = vmatprep.subr.mxu0 0.0
        %1669 = vmatpush1.msra.mxu0 0.0
        %1670 = vmatprep.subr.mxu0 0.0
        %1671 = vmatpush1.msra.mxu0 0.0
        %1672 = vmatprep.subr.mxu0 0.0
        %1673 = vmatpush1.msra.mxu0 0.0
        %1674 = vmatprep.subr.mxu0 0.0
        %1675 = vmatpush1.msra.mxu0 0.0
        %1676 = vmatprep.subr.mxu0 0.0
        %1677 = vmatpush1.msra.mxu0 0.0
        %1678 = vmatprep.subr.mxu0 0.0
        %1679 = vmatpush1.msra.mxu0 0.0
        %1680 = vmatprep.subr.mxu0 0.0
        %1681 = vmatpush1.msra.mxu0 0.0
        %1682 = vmatprep.mubr.f32.mxu0 0.0
        %1683 = vmatmul.mubr.f32.gmra.mrb[0].mxu0 %v1616
        %v1684 = vpop.f32.mrb[0].mxu0
        %v1685 = vadd.f32 %v1612, %v1684
        %v1686 = vpop.f32.mrb[0].mxu0
        %1687 = vdwg.mxu0
        %v1689 = vlaneseq
        %v1690 = vshrl.u32 %v1689, 7
        %v1691 = vsub.s32 0, %v1690
        %v1692 = vrot.slane %v1597, %v1691
        %1694 = vmatprep.subr.mxu0 0.0
        %1695 = vmatpush1.msra.mxu0 %v1593
        %1696 = vmatprep.subr.mxu0 0.0
        %1697 = vmatpush1.msra.mxu0 %v1594
        %1698 = vmatprep.subr.mxu0 0.0
        %1699 = vmatpush1.msra.mxu0 %v1595
        %1700 = vmatprep.subr.mxu0 0.0
        %1701 = vmatpush1.msra.mxu0 %v1596
        %1702 = vmatprep.subr.mxu0 0.0
        %1703 = vmatpush1.msra.mxu0 0.0
        %1704 = vmatprep.subr.mxu0 0.0
        %1705 = vmatpush1.msra.mxu0 0.0
        %1706 = vmatprep.subr.mxu0 0.0
        %1707 = vmatpush1.msra.mxu0 0.0
        %1708 = vmatprep.subr.mxu0 0.0
        %1709 = vmatpush1.msra.mxu0 0.0
        %1710 = vmatprep.subr.mxu0 0.0
        %1711 = vmatpush1.msra.mxu0 0.0
        %1712 = vmatprep.subr.mxu0 0.0
        %1713 = vmatpush1.msra.mxu0 0.0
        %1714 = vmatprep.subr.mxu0 0.0
        %1715 = vmatpush1.msra.mxu0 0.0
        %1716 = vmatprep.subr.mxu0 0.0
        %1717 = vmatpush1.msra.mxu0 0.0
        %1718 = vmatprep.subr.mxu0 0.0
        %1719 = vmatpush1.msra.mxu0 0.0
        %1720 = vmatprep.subr.mxu0 0.0
        %1721 = vmatpush1.msra.mxu0 0.0
        %1722 = vmatprep.subr.mxu0 0.0
        %1723 = vmatpush1.msra.mxu0 0.0
        %1724 = vmatprep.subr.mxu0 0.0
        %1725 = vmatpush1.msra.mxu0 0.0
        %1726 = vmatprep.subr.mxu0 0.0
        %1727 = vmatpush1.msra.mxu0 0.0
        %1728 = vmatprep.subr.mxu0 0.0
        %1729 = vmatpush1.msra.mxu0 0.0
        %1730 = vmatprep.subr.mxu0 0.0
        %1731 = vmatpush1.msra.mxu0 0.0
        %1732 = vmatprep.subr.mxu0 0.0
        %1733 = vmatpush1.msra.mxu0 0.0
        %1734 = vmatprep.subr.mxu0 0.0
        %1735 = vmatpush1.msra.mxu0 0.0
        %1736 = vmatprep.subr.mxu0 0.0
        %1737 = vmatpush1.msra.mxu0 0.0
        %1738 = vmatprep.subr.mxu0 0.0
        %1739 = vmatpush1.msra.mxu0 0.0
        %1740 = vmatprep.subr.mxu0 0.0
        %1741 = vmatpush1.msra.mxu0 0.0
        %1742 = vmatprep.subr.mxu0 0.0
        %1743 = vmatpush1.msra.mxu0 0.0
        %1744 = vmatprep.subr.mxu0 0.0
        %1745 = vmatpush1.msra.mxu0 0.0
        %1746 = vmatprep.subr.mxu0 0.0
        %1747 = vmatpush1.msra.mxu0 0.0
        %1748 = vmatprep.subr.mxu0 0.0
        %1749 = vmatpush1.msra.mxu0 0.0
        %1750 = vmatprep.subr.mxu0 0.0
        %1751 = vmatpush1.msra.mxu0 0.0
        %1752 = vmatprep.subr.mxu0 0.0
        %1753 = vmatpush1.msra.mxu0 0.0
        %1754 = vmatprep.subr.mxu0 0.0
        %1755 = vmatpush1.msra.mxu0 0.0
        %1756 = vmatprep.subr.mxu0 0.0
        %1757 = vmatpush1.msra.mxu0 0.0
        %1758 = vmatprep.mubr.f32.mxu0 0.0
        %1759 = vmatmul.mubr.f32.gmra.mrb[0].mxu0 %v1616
        %v1760 = vpop.f32.mrb[0].mxu0
        %v1761 = vadd.f32 %v1692, %v1760
        %v1762 = vpop.f32.mrb[0].mxu0
        %1763 = vdwg.mxu0
        %v1765 = vlaneseq
        %v1766 = vshrl.u32 %v1765, 7
        %v1767 = vsub.s32 0, %v1766
        %v1768 = vrot.slane %v1602, %v1767
        %1770 = vmatprep.subr.mxu0 0.0
        %1771 = vmatpush1.msra.mxu0 %v1598
        %1772 = vmatprep.subr.mxu0 0.0
        %1773 = vmatpush1.msra.mxu0 %v1599
        %1774 = vmatprep.subr.mxu0 0.0
        %1775 = vmatpush1.msra.mxu0 %v1600
        %1776 = vmatprep.subr.mxu0 0.0
        %1777 = vmatpush1.msra.mxu0 %v1601
        %1778 = vmatprep.subr.mxu0 0.0
        %1779 = vmatpush1.msra.mxu0 0.0
        %1780 = vmatprep.subr.mxu0 0.0
        %1781 = vmatpush1.msra.mxu0 0.0
        %1782 = vmatprep.subr.mxu0 0.0
        %1783 = vmatpush1.msra.mxu0 0.0
        %1784 = vmatprep.subr.mxu0 0.0
        %1785 = vmatpush1.msra.mxu0 0.0
        %1786 = vmatprep.subr.mxu0 0.0
        %1787 = vmatpush1.msra.mxu0 0.0
        %1788 = vmatprep.subr.mxu0 0.0
        %1789 = vmatpush1.msra.mxu0 0.0
        %1790 = vmatprep.subr.mxu0 0.0
        %1791 = vmatpush1.msra.mxu0 0.0
        %1792 = vmatprep.subr.mxu0 0.0
        %1793 = vmatpush1.msra.mxu0 0.0
        %1794 = vmatprep.subr.mxu0 0.0
        %1795 = vmatpush1.msra.mxu0 0.0
        %1796 = vmatprep.subr.mxu0 0.0
        %1797 = vmatpush1.msra.mxu0 0.0
        %1798 = vmatprep.subr.mxu0 0.0
        %1799 = vmatpush1.msra.mxu0 0.0
        %1800 = vmatprep.subr.mxu0 0.0
        %1801 = vmatpush1.msra.mxu0 0.0
        %1802 = vmatprep.subr.mxu0 0.0
        %1803 = vmatpush1.msra.mxu0 0.0
        %1804 = vmatprep.subr.mxu0 0.0
        %1805 = vmatpush1.msra.mxu0 0.0
        %1806 = vmatprep.subr.mxu0 0.0
        %1807 = vmatpush1.msra.mxu0 0.0
        %1808 = vmatprep.subr.mxu0 0.0
        %1809 = vmatpush1.msra.mxu0 0.0
        %1810 = vmatprep.subr.mxu0 0.0
        %1811 = vmatpush1.msra.mxu0 0.0
        %1812 = vmatprep.subr.mxu0 0.0
        %1813 = vmatpush1.msra.mxu0 0.0
        %1814 = vmatprep.subr.mxu0 0.0
        %1815 = vmatpush1.msra.mxu0 0.0
        %1816 = vmatprep.subr.mxu0 0.0
        %1817 = vmatpush1.msra.mxu0 0.0
        %1818 = vmatprep.subr.mxu0 0.0
        %1819 = vmatpush1.msra.mxu0 0.0
        %1820 = vmatprep.subr.mxu0 0.0
        %1821 = vmatpush1.msra.mxu0 0.0
        %1822 = vmatprep.subr.mxu0 0.0
        %1823 = vmatpush1.msra.mxu0 0.0
        %1824 = vmatprep.subr.mxu0 0.0
        %1825 = vmatpush1.msra.mxu0 0.0
        %1826 = vmatprep.subr.mxu0 0.0
        %1827 = vmatpush1.msra.mxu0 0.0
        %1828 = vmatprep.subr.mxu0 0.0
        %1829 = vmatpush1.msra.mxu0 0.0
        %1830 = vmatprep.subr.mxu0 0.0
        %1831 = vmatpush1.msra.mxu0 0.0
        %1832 = vmatprep.subr.mxu0 0.0
        %1833 = vmatpush1.msra.mxu0 0.0
        %1834 = vmatprep.mubr.f32.mxu0 0.0
        %1835 = vmatmul.mubr.f32.gmra.mrb[0].mxu0 %v1616
        %v1836 = vpop.f32.mrb[0].mxu0
        %v1837 = vadd.f32 %v1768, %v1836
        %v1838 = vpop.f32.mrb[0].mxu0
        %1839 = vdwg.mxu0
        %1841 = vrot.lane.b32.xlu0 %v1685, 120
        %v1842 = vpop.permute.xlu0 %1841
        %1844 = vrot.lane.b32.xlu0 %v1685, 112
        %v1845 = vpop.permute.xlu0 %1844
        %1847 = vrot.lane.b32.xlu0 %v1685, 104
        %v1848 = vpop.permute.xlu0 %1847
        %v1850 = vcombine.low %v1685, %v1845
        %v1851 = vcombine.high %v1685, %v1845
        %v1853 = vunpack.c.l.s4 1983009808
        %v1854 = vunpack.c.0.s8 %v1853
        %v1855 = vlaneseq
        %v1856 = vshrl.u32 %v1855, 7
        %v1857 = vsub.s32 %v1854, %v1856
        %v1858 = vrot.slane %v1850, %v1857
        %v1860 = vunpack.c.l.s4 1983009808
        %v1861 = vunpack.c.0.s8 %v1860
        %v1862 = vlaneseq
        %v1863 = vshrl.u32 %v1862, 7
        %v1864 = vsub.s32 %v1861, %v1863
        %v1865 = vrot.slane %v1851, %v1864
        %v1866 = vcombine.low %v1842, %v1848
        %v1867 = vcombine.high %v1842, %v1848
        %v1869 = vunpack.c.l.s4 1983009808
        %v1870 = vunpack.c.0.s8 %v1869
        %v1871 = vlaneseq
        %v1872 = vshrl.u32 %v1871, 7
        %v1873 = vsub.s32 %v1870, %v1872
        %v1874 = vrot.slane %v1866, %v1873
        %v1876 = vunpack.c.l.s4 1983009808
        %v1877 = vunpack.c.0.s8 %v1876
        %v1878 = vlaneseq
        %v1879 = vshrl.u32 %v1878, 7
        %v1880 = vsub.s32 %v1877, %v1879
        %v1881 = vrot.slane %v1867, %v1880
        %v1882 = vcombine.low %v1858, %v1874
        %v1883 = vcombine.high %v1858, %v1874
        %v1885 = vunpack.c.l.s4 1934713408
        %v1886 = vunpack.c.0.s8 %v1885
        %v1887 = vlaneseq
        %v1888 = vshrl.u32 %v1887, 7
        %v1889 = vsub.s32 %v1886, %v1888
        %v1890 = vrot.slane %v1882, %v1889
        %v1892 = vunpack.c.l.s4 1934713408
        %v1893 = vunpack.c.0.s8 %v1892
        %v1894 = vlaneseq
        %v1895 = vshrl.u32 %v1894, 7
        %v1896 = vsub.s32 %v1893, %v1895
        %v1897 = vrot.slane %v1883, %v1896
        %v1898 = vcombine.low %v1865, %v1881
        %v1899 = vcombine.high %v1865, %v1881
        %v1901 = vunpack.c.l.s4 1934713408
        %v1902 = vunpack.c.0.s8 %v1901
        %v1903 = vlaneseq
        %v1904 = vshrl.u32 %v1903, 7
        %v1905 = vsub.s32 %v1902, %v1904
        %v1906 = vrot.slane %v1898, %v1905
        %v1908 = vunpack.c.l.s4 1934713408
        %v1909 = vunpack.c.0.s8 %v1908
        %v1910 = vlaneseq
        %v1911 = vshrl.u32 %v1910, 7
        %v1912 = vsub.s32 %v1909, %v1911
        %v1913 = vrot.slane %v1899, %v1912
        %v1914 = vcombine.high %v1890, 0.0
        %v1915 = vcombine.high %v1897, 0.0
        %v1916 = vcombine.high %v1906, 0.0
        %v1917 = vcombine.high %v1913, 0.0
        %v1918 = vcombine.low %v1890, %v1897
        %v1920 = vunpack.c.l.s4 1983009808
        %v1921 = vunpack.c.0.s8 %v1920
        %v1922 = vlaneseq
        %v1923 = vshrl.u32 %v1922, 7
        %v1924 = vsub.s32 %v1921, %v1923
        %v1925 = vrot.slane %v1918, %v1924
        %v1926 = vcombine.low %v1914, %v1915
        %v1928 = vunpack.c.l.s4 1983009808
        %v1929 = vunpack.c.0.s8 %v1928
        %v1930 = vlaneseq
        %v1931 = vshrl.u32 %v1930, 7
        %v1932 = vsub.s32 %v1929, %v1931
        %v1933 = vrot.slane %v1926, %v1932
        %v1934 = vcombine.low %v1906, %v1913
        %v1936 = vunpack.c.l.s4 1983009808
        %v1937 = vunpack.c.0.s8 %v1936
        %v1938 = vlaneseq
        %v1939 = vshrl.u32 %v1938, 7
        %v1940 = vsub.s32 %v1937, %v1939
        %v1941 = vrot.slane %v1934, %v1940
        %v1942 = vcombine.low %v1916, %v1917
        %v1944 = vunpack.c.l.s4 1983009808
        %v1945 = vunpack.c.0.s8 %v1944
        %v1946 = vlaneseq
        %v1947 = vshrl.u32 %v1946, 7
        %v1948 = vsub.s32 %v1945, %v1947
        %v1949 = vrot.slane %v1942, %v1948
        %v1950 = vcombine.low %v1925, %v1933
        %v1951 = vcombine.high %v1925, %v1933
        %v1953 = vunpack.c.l.s4 1934713408
        %v1954 = vunpack.c.0.s8 %v1953
        %v1955 = vlaneseq
        %v1956 = vshrl.u32 %v1955, 7
        %v1957 = vsub.s32 %v1954, %v1956
        %v1958 = vrot.slane %v1950, %v1957
        %v1960 = vunpack.c.l.s4 1934713408
        %v1961 = vunpack.c.0.s8 %v1960
        %v1962 = vlaneseq
        %v1963 = vshrl.u32 %v1962, 7
        %v1964 = vsub.s32 %v1961, %v1963
        %v1965 = vrot.slane %v1951, %v1964
        %v1966 = vcombine.low %v1941, %v1949
        %v1967 = vcombine.high %v1941, %v1949
        %v1969 = vunpack.c.l.s4 1934713408
        %v1970 = vunpack.c.0.s8 %v1969
        %v1971 = vlaneseq
        %v1972 = vshrl.u32 %v1971, 7
        %v1973 = vsub.s32 %v1970, %v1972
        %v1974 = vrot.slane %v1966, %v1973
        %v1976 = vunpack.c.l.s4 1934713408
        %v1977 = vunpack.c.0.s8 %v1976
        %v1978 = vlaneseq
        %v1979 = vshrl.u32 %v1978, 7
        %v1980 = vsub.s32 %v1977, %v1979
        %v1981 = vrot.slane %v1967, %v1980
        %v1982 = vcombine.low %v1958, %v1974
        %v1983 = vcombine.high %v1958, %v1974
        %v1984 = vcombine.low %v1965, %v1981
        %v1985 = vcombine.high %v1965, %v1981
        %1987 = vrot.lane.b32.xlu0 %v1761, 120
        %v1988 = vpop.permute.xlu0 %1987
        %1990 = vrot.lane.b32.xlu0 %v1761, 112
        %v1991 = vpop.permute.xlu0 %1990
        %1993 = vrot.lane.b32.xlu0 %v1761, 104
        %v1994 = vpop.permute.xlu0 %1993
        %v1996 = vcombine.low %v1761, %v1991
        %v1997 = vcombine.high %v1761, %v1991
        %v1999 = vunpack.c.l.s4 1983009808
        %v2000 = vunpack.c.0.s8 %v1999
        %v2001 = vlaneseq
        %v2002 = vshrl.u32 %v2001, 7
        %v2003 = vsub.s32 %v2000, %v2002
        %v2004 = vrot.slane %v1996, %v2003
        %v2006 = vunpack.c.l.s4 1983009808
        %v2007 = vunpack.c.0.s8 %v2006
        %v2008 = vlaneseq
        %v2009 = vshrl.u32 %v2008, 7
        %v2010 = vsub.s32 %v2007, %v2009
        %v2011 = vrot.slane %v1997, %v2010
        %v2012 = vcombine.low %v1988, %v1994
        %v2013 = vcombine.high %v1988, %v1994
        %v2015 = vunpack.c.l.s4 1983009808
        %v2016 = vunpack.c.0.s8 %v2015
        %v2017 = vlaneseq
        %v2018 = vshrl.u32 %v2017, 7
        %v2019 = vsub.s32 %v2016, %v2018
        %v2020 = vrot.slane %v2012, %v2019
        %v2022 = vunpack.c.l.s4 1983009808
        %v2023 = vunpack.c.0.s8 %v2022
        %v2024 = vlaneseq
        %v2025 = vshrl.u32 %v2024, 7
        %v2026 = vsub.s32 %v2023, %v2025
        %v2027 = vrot.slane %v2013, %v2026
        %v2028 = vcombine.low %v2004, %v2020
        %v2029 = vcombine.high %v2004, %v2020
        %v2031 = vunpack.c.l.s4 1934713408
        %v2032 = vunpack.c.0.s8 %v2031
        %v2033 = vlaneseq
        %v2034 = vshrl.u32 %v2033, 7
        %v2035 = vsub.s32 %v2032, %v2034
        %v2036 = vrot.slane %v2028, %v2035
        %v2038 = vunpack.c.l.s4 1934713408
        %v2039 = vunpack.c.0.s8 %v2038
        %v2040 = vlaneseq
        %v2041 = vshrl.u32 %v2040, 7
        %v2042 = vsub.s32 %v2039, %v2041
        %v2043 = vrot.slane %v2029, %v2042
        %v2044 = vcombine.low %v2011, %v2027
        %v2045 = vcombine.high %v2011, %v2027
        %v2047 = vunpack.c.l.s4 1934713408
        %v2048 = vunpack.c.0.s8 %v2047
        %v2049 = vlaneseq
        %v2050 = vshrl.u32 %v2049, 7
        %v2051 = vsub.s32 %v2048, %v2050
        %v2052 = vrot.slane %v2044, %v2051
        %v2054 = vunpack.c.l.s4 1934713408
        %v2055 = vunpack.c.0.s8 %v2054
        %v2056 = vlaneseq
        %v2057 = vshrl.u32 %v2056, 7
        %v2058 = vsub.s32 %v2055, %v2057
        %v2059 = vrot.slane %v2045, %v2058
        %v2060 = vcombine.high %v2036, 0.0
        %v2061 = vcombine.high %v2043, 0.0
        %v2062 = vcombine.high %v2052, 0.0
        %v2063 = vcombine.high %v2059, 0.0
        %v2064 = vcombine.low %v2036, %v2043
        %v2066 = vunpack.c.l.s4 1983009808
        %v2067 = vunpack.c.0.s8 %v2066
        %v2068 = vlaneseq
        %v2069 = vshrl.u32 %v2068, 7
        %v2070 = vsub.s32 %v2067, %v2069
        %v2071 = vrot.slane %v2064, %v2070
        %v2072 = vcombine.low %v2060, %v2061
        %v2074 = vunpack.c.l.s4 1983009808
        %v2075 = vunpack.c.0.s8 %v2074
        %v2076 = vlaneseq
        %v2077 = vshrl.u32 %v2076, 7
        %v2078 = vsub.s32 %v2075, %v2077
        %v2079 = vrot.slane %v2072, %v2078
        %v2080 = vcombine.low %v2052, %v2059
        %v2082 = vunpack.c.l.s4 1983009808
        %v2083 = vunpack.c.0.s8 %v2082
        %v2084 = vlaneseq
        %v2085 = vshrl.u32 %v2084, 7
        %v2086 = vsub.s32 %v2083, %v2085
        %v2087 = vrot.slane %v2080, %v2086
        %v2088 = vcombine.low %v2062, %v2063
        %v2090 = vunpack.c.l.s4 1983009808
        %v2091 = vunpack.c.0.s8 %v2090
        %v2092 = vlaneseq
        %v2093 = vshrl.u32 %v2092, 7
        %v2094 = vsub.s32 %v2091, %v2093
        %v2095 = vrot.slane %v2088, %v2094
        %v2096 = vcombine.low %v2071, %v2079
        %v2097 = vcombine.high %v2071, %v2079
        %v2099 = vunpack.c.l.s4 1934713408
        %v2100 = vunpack.c.0.s8 %v2099
        %v2101 = vlaneseq
        %v2102 = vshrl.u32 %v2101, 7
        %v2103 = vsub.s32 %v2100, %v2102
        %v2104 = vrot.slane %v2096, %v2103
        %v2106 = vunpack.c.l.s4 1934713408
        %v2107 = vunpack.c.0.s8 %v2106
        %v2108 = vlaneseq
        %v2109 = vshrl.u32 %v2108, 7
        %v2110 = vsub.s32 %v2107, %v2109
        %v2111 = vrot.slane %v2097, %v2110
        %v2112 = vcombine.low %v2087, %v2095
        %v2113 = vcombine.high %v2087, %v2095
        %v2115 = vunpack.c.l.s4 1934713408
        %v2116 = vunpack.c.0.s8 %v2115
        %v2117 = vlaneseq
        %v2118 = vshrl.u32 %v2117, 7
        %v2119 = vsub.s32 %v2116, %v2118
        %v2120 = vrot.slane %v2112, %v2119
        %v2122 = vunpack.c.l.s4 1934713408
        %v2123 = vunpack.c.0.s8 %v2122
        %v2124 = vlaneseq
        %v2125 = vshrl.u32 %v2124, 7
        %v2126 = vsub.s32 %v2123, %v2125
        %v2127 = vrot.slane %v2113, %v2126
        %v2128 = vcombine.low %v2104, %v2120
        %v2129 = vcombine.high %v2104, %v2120
        %v2130 = vcombine.low %v2111, %v2127
        %v2131 = vcombine.high %v2111, %v2127
        %2133 = vrot.lane.b32.xlu0 %v1837, 120
        %v2134 = vpop.permute.xlu0 %2133
        %2136 = vrot.lane.b32.xlu0 %v1837, 112
        %v2137 = vpop.permute.xlu0 %2136
        %2139 = vrot.lane.b32.xlu0 %v1837, 104
        %v2140 = vpop.permute.xlu0 %2139
        %v2142 = vcombine.low %v1837, %v2137
        %v2143 = vcombine.high %v1837, %v2137
        %v2145 = vunpack.c.l.s4 1983009808
        %v2146 = vunpack.c.0.s8 %v2145
        %v2147 = vlaneseq
        %v2148 = vshrl.u32 %v2147, 7
        %v2149 = vsub.s32 %v2146, %v2148
        %v2150 = vrot.slane %v2142, %v2149
        %v2152 = vunpack.c.l.s4 1983009808
        %v2153 = vunpack.c.0.s8 %v2152
        %v2154 = vlaneseq
        %v2155 = vshrl.u32 %v2154, 7
        %v2156 = vsub.s32 %v2153, %v2155
        %v2157 = vrot.slane %v2143, %v2156
        %v2158 = vcombine.low %v2134, %v2140
        %v2159 = vcombine.high %v2134, %v2140
        %v2161 = vunpack.c.l.s4 1983009808
        %v2162 = vunpack.c.0.s8 %v2161
        %v2163 = vlaneseq
        %v2164 = vshrl.u32 %v2163, 7
        %v2165 = vsub.s32 %v2162, %v2164
        %v2166 = vrot.slane %v2158, %v2165
        %v2168 = vunpack.c.l.s4 1983009808
        %v2169 = vunpack.c.0.s8 %v2168
        %v2170 = vlaneseq
        %v2171 = vshrl.u32 %v2170, 7
        %v2172 = vsub.s32 %v2169, %v2171
        %v2173 = vrot.slane %v2159, %v2172
        %v2174 = vcombine.low %v2150, %v2166
        %v2175 = vcombine.high %v2150, %v2166
        %v2177 = vunpack.c.l.s4 1934713408
        %v2178 = vunpack.c.0.s8 %v2177
        %v2179 = vlaneseq
        %v2180 = vshrl.u32 %v2179, 7
        %v2181 = vsub.s32 %v2178, %v2180
        %v2182 = vrot.slane %v2174, %v2181
        %v2184 = vunpack.c.l.s4 1934713408
        %v2185 = vunpack.c.0.s8 %v2184
        %v2186 = vlaneseq
        %v2187 = vshrl.u32 %v2186, 7
        %v2188 = vsub.s32 %v2185, %v2187
        %v2189 = vrot.slane %v2175, %v2188
        %v2190 = vcombine.low %v2157, %v2173
        %v2191 = vcombine.high %v2157, %v2173
        %v2193 = vunpack.c.l.s4 1934713408
        %v2194 = vunpack.c.0.s8 %v2193
        %v2195 = vlaneseq
        %v2196 = vshrl.u32 %v2195, 7
        %v2197 = vsub.s32 %v2194, %v2196
        %v2198 = vrot.slane %v2190, %v2197
        %v2200 = vunpack.c.l.s4 1934713408
        %v2201 = vunpack.c.0.s8 %v2200
        %v2202 = vlaneseq
        %v2203 = vshrl.u32 %v2202, 7
        %v2204 = vsub.s32 %v2201, %v2203
        %v2205 = vrot.slane %v2191, %v2204
        %v2206 = vcombine.high %v2182, 0.0
        %v2207 = vcombine.high %v2189, 0.0
        %v2208 = vcombine.high %v2198, 0.0
        %v2209 = vcombine.high %v2205, 0.0
        %v2210 = vcombine.low %v2182, %v2189
        %v2212 = vunpack.c.l.s4 1983009808
        %v2213 = vunpack.c.0.s8 %v2212
        %v2214 = vlaneseq
        %v2215 = vshrl.u32 %v2214, 7
        %v2216 = vsub.s32 %v2213, %v2215
        %v2217 = vrot.slane %v2210, %v2216
        %v2218 = vcombine.low %v2206, %v2207
        %v2220 = vunpack.c.l.s4 1983009808
        %v2221 = vunpack.c.0.s8 %v2220
        %v2222 = vlaneseq
        %v2223 = vshrl.u32 %v2222, 7
        %v2224 = vsub.s32 %v2221, %v2223
        %v2225 = vrot.slane %v2218, %v2224
        %v2226 = vcombine.low %v2198, %v2205
        %v2228 = vunpack.c.l.s4 1983009808
        %v2229 = vunpack.c.0.s8 %v2228
        %v2230 = vlaneseq
        %v2231 = vshrl.u32 %v2230, 7
        %v2232 = vsub.s32 %v2229, %v2231
        %v2233 = vrot.slane %v2226, %v2232
        %v2234 = vcombine.low %v2208, %v2209
        %v2236 = vunpack.c.l.s4 1983009808
        %v2237 = vunpack.c.0.s8 %v2236
        %v2238 = vlaneseq
        %v2239 = vshrl.u32 %v2238, 7
        %v2240 = vsub.s32 %v2237, %v2239
        %v2241 = vrot.slane %v2234, %v2240
        %v2242 = vcombine.low %v2217, %v2225
        %v2243 = vcombine.high %v2217, %v2225
        %v2245 = vunpack.c.l.s4 1934713408
        %v2246 = vunpack.c.0.s8 %v2245
        %v2247 = vlaneseq
        %v2248 = vshrl.u32 %v2247, 7
        %v2249 = vsub.s32 %v2246, %v2248
        %v2250 = vrot.slane %v2242, %v2249
        %v2252 = vunpack.c.l.s4 1934713408
        %v2253 = vunpack.c.0.s8 %v2252
        %v2254 = vlaneseq
        %v2255 = vshrl.u32 %v2254, 7
        %v2256 = vsub.s32 %v2253, %v2255
        %v2257 = vrot.slane %v2243, %v2256
        %v2258 = vcombine.low %v2233, %v2241
        %v2259 = vcombine.high %v2233, %v2241
        %v2261 = vunpack.c.l.s4 1934713408
        %v2262 = vunpack.c.0.s8 %v2261
        %v2263 = vlaneseq
        %v2264 = vshrl.u32 %v2263, 7
        %v2265 = vsub.s32 %v2262, %v2264
        %v2266 = vrot.slane %v2258, %v2265
        %v2268 = vunpack.c.l.s4 1934713408
        %v2269 = vunpack.c.0.s8 %v2268
        %v2270 = vlaneseq
        %v2271 = vshrl.u32 %v2270, 7
        %v2272 = vsub.s32 %v2269, %v2271
        %v2273 = vrot.slane %v2259, %v2272
        %v2274 = vcombine.low %v2250, %v2266
        %v2275 = vcombine.high %v2250, %v2266
        %v2276 = vcombine.low %v2257, %v2273
        %v2277 = vcombine.high %v2257, %v2273
        %vm2278 = vcmask 64512
        %v2280 = vsel %vm2278, %v1982, 0
        %v2283 = vsel %vm2278, %v2128, 0
        %2285 = vmatprep.subr.mxu0 0.0
        %2286 = vmatpush1.xpose.msra.mxu0 %v2283
        %2287 = vmatprep.subr.mxu0 0.0
        %2288 = vmatpush1.xpose.msra.mxu0 0.0
        %2289 = vmatprep.subr.mxu0 0.0
        %2290 = vmatpush1.xpose.msra.mxu0 0.0
        %2291 = vmatprep.subr.mxu0 0.0
        %2292 = vmatpush1.xpose.msra.mxu0 0.0
        %2293 = vmatprep.subr.mxu0 0.0
        %2294 = vmatpush1.xpose.msra.mxu0 0.0
        %2295 = vmatprep.subr.mxu0 0.0
        %2296 = vmatpush1.xpose.msra.mxu0 0.0
        %2297 = vmatprep.subr.mxu0 0.0
        %2298 = vmatpush1.xpose.msra.mxu0 0.0
        %2299 = vmatprep.subr.mxu0 0.0
        %2300 = vmatpush1.xpose.msra.mxu0 0.0
        %2301 = vmatprep.subr.mxu0 0.0
        %2302 = vmatpush1.xpose.msra.mxu0 0.0
        %2303 = vmatprep.subr.mxu0 0.0
        %2304 = vmatpush1.xpose.msra.mxu0 0.0
        %2305 = vmatprep.subr.mxu0 0.0
        %2306 = vmatpush1.xpose.msra.mxu0 0.0
        %2307 = vmatprep.subr.mxu0 0.0
        %2308 = vmatpush1.xpose.msra.mxu0 0.0
        %2309 = vmatprep.subr.mxu0 0.0
        %2310 = vmatpush1.xpose.msra.mxu0 0.0
        %2311 = vmatprep.subr.mxu0 0.0
        %2312 = vmatpush1.xpose.msra.mxu0 0.0
        %2313 = vmatprep.subr.mxu0 0.0
        %2314 = vmatpush1.xpose.msra.mxu0 0.0
        %2315 = vmatprep.subr.mxu0 0.0
        %2316 = vmatpush1.xpose.msra.mxu0 0.0
        %2317 = vmatprep.subr.mxu0 0.0
        %2318 = vmatpush1.xpose.msra.mxu0 0.0
        %2319 = vmatprep.subr.mxu0 0.0
        %2320 = vmatpush1.xpose.msra.mxu0 0.0
        %2321 = vmatprep.subr.mxu0 0.0
        %2322 = vmatpush1.xpose.msra.mxu0 0.0
        %2323 = vmatprep.subr.mxu0 0.0
        %2324 = vmatpush1.xpose.msra.mxu0 0.0
        %2325 = vmatprep.subr.mxu0 0.0
        %2326 = vmatpush1.xpose.msra.mxu0 0.0
        %2327 = vmatprep.subr.mxu0 0.0
        %2328 = vmatpush1.xpose.msra.mxu0 0.0
        %2329 = vmatprep.subr.mxu0 0.0
        %2330 = vmatpush1.xpose.msra.mxu0 0.0
        %2331 = vmatprep.subr.mxu0 0.0
        %2332 = vmatpush1.xpose.msra.mxu0 0.0
        %2333 = vmatprep.subr.mxu0 0.0
        %2334 = vmatpush1.xpose.msra.mxu0 0.0
        %2335 = vmatprep.subr.mxu0 0.0
        %2336 = vmatpush1.xpose.msra.mxu0 0.0
        %2337 = vmatprep.subr.mxu0 0.0
        %2338 = vmatpush1.xpose.msra.mxu0 0.0
        %2339 = vmatprep.subr.mxu0 0.0
        %2340 = vmatpush1.xpose.msra.mxu0 0.0
        %2341 = vmatprep.subr.mxu0 0.0
        %2342 = vmatpush1.xpose.msra.mxu0 0.0
        %2343 = vmatprep.subr.mxu0 0.0
        %2344 = vmatpush1.xpose.msra.mxu0 0.0
        %2345 = vmatprep.subr.mxu0 0.0
        %2346 = vmatpush1.xpose.msra.mxu0 0.0
        %2347 = vmatprep.subr.mxu0 0.0
        %2348 = vmatpush1.xpose.msra.mxu0 0.0
        %2349 = vmatprep.mubr.f32.mxu0 0.0
        %2350 = vmatmul.mubr.f32.gmra.mrb[0].mxu0 %v2280
        %v2351 = vpop.f32.mrb[0].mxu0
        %v2352 = vadd.f32 %v1587, %v2351
        %v2353 = vpop.f32.mrb[0].mxu0
        %2354 = vdwg.mxu0
        %v2356 = vsel %vm2278, %v1983, 0
        %v2359 = vsel %vm2278, %v2129, 0
        %2361 = vmatprep.subr.mxu0 0.0
        %2362 = vmatpush1.xpose.msra.mxu0 %v2359
        %2363 = vmatprep.subr.mxu0 0.0
        %2364 = vmatpush1.xpose.msra.mxu0 0.0
        %2365 = vmatprep.subr.mxu0 0.0
        %2366 = vmatpush1.xpose.msra.mxu0 0.0
        %2367 = vmatprep.subr.mxu0 0.0
        %2368 = vmatpush1.xpose.msra.mxu0 0.0
        %2369 = vmatprep.subr.mxu0 0.0
        %2370 = vmatpush1.xpose.msra.mxu0 0.0
        %2371 = vmatprep.subr.mxu0 0.0
        %2372 = vmatpush1.xpose.msra.mxu0 0.0
        %2373 = vmatprep.subr.mxu0 0.0
        %2374 = vmatpush1.xpose.msra.mxu0 0.0
        %2375 = vmatprep.subr.mxu0 0.0
        %2376 = vmatpush1.xpose.msra.mxu0 0.0
        %2377 = vmatprep.subr.mxu0 0.0
        %2378 = vmatpush1.xpose.msra.mxu0 0.0
        %2379 = vmatprep.subr.mxu0 0.0
        %2380 = vmatpush1.xpose.msra.mxu0 0.0
        %2381 = vmatprep.subr.mxu0 0.0
        %2382 = vmatpush1.xpose.msra.mxu0 0.0
        %2383 = vmatprep.subr.mxu0 0.0
        %2384 = vmatpush1.xpose.msra.mxu0 0.0
        %2385 = vmatprep.subr.mxu0 0.0
        %2386 = vmatpush1.xpose.msra.mxu0 0.0
        %2387 = vmatprep.subr.mxu0 0.0
        %2388 = vmatpush1.xpose.msra.mxu0 0.0
        %2389 = vmatprep.subr.mxu0 0.0
        %2390 = vmatpush1.xpose.msra.mxu0 0.0
        %2391 = vmatprep.subr.mxu0 0.0
        %2392 = vmatpush1.xpose.msra.mxu0 0.0
        %2393 = vmatprep.subr.mxu0 0.0
        %2394 = vmatpush1.xpose.msra.mxu0 0.0
        %2395 = vmatprep.subr.mxu0 0.0
        %2396 = vmatpush1.xpose.msra.mxu0 0.0
        %2397 = vmatprep.subr.mxu0 0.0
        %2398 = vmatpush1.xpose.msra.mxu0 0.0
        %2399 = vmatprep.subr.mxu0 0.0
        %2400 = vmatpush1.xpose.msra.mxu0 0.0
        %2401 = vmatprep.subr.mxu0 0.0
        %2402 = vmatpush1.xpose.msra.mxu0 0.0
        %2403 = vmatprep.subr.mxu0 0.0
        %2404 = vmatpush1.xpose.msra.mxu0 0.0
        %2405 = vmatprep.subr.mxu0 0.0
        %2406 = vmatpush1.xpose.msra.mxu0 0.0
        %2407 = vmatprep.subr.mxu0 0.0
        %2408 = vmatpush1.xpose.msra.mxu0 0.0
        %2409 = vmatprep.subr.mxu0 0.0
        %2410 = vmatpush1.xpose.msra.mxu0 0.0
        %2411 = vmatprep.subr.mxu0 0.0
        %2412 = vmatpush1.xpose.msra.mxu0 0.0
        %2413 = vmatprep.subr.mxu0 0.0
        %2414 = vmatpush1.xpose.msra.mxu0 0.0
        %2415 = vmatprep.subr.mxu0 0.0
        %2416 = vmatpush1.xpose.msra.mxu0 0.0
        %2417 = vmatprep.subr.mxu0 0.0
        %2418 = vmatpush1.xpose.msra.mxu0 0.0
        %2419 = vmatprep.subr.mxu0 0.0
        %2420 = vmatpush1.xpose.msra.mxu0 0.0
        %2421 = vmatprep.subr.mxu0 0.0
        %2422 = vmatpush1.xpose.msra.mxu0 0.0
        %2423 = vmatprep.subr.mxu0 0.0
        %2424 = vmatpush1.xpose.msra.mxu0 0.0
        %2425 = vmatprep.mubr.f32.mxu0 0.0
        %2426 = vmatmul.mubr.f32.gmra.mrb[0].mxu0 %v2356
        %v2427 = vpop.f32.mrb[0].mxu0
        %v2428 = vadd.f32 %v1587, %v2427
        %v2429 = vpop.f32.mrb[0].mxu0
        %2430 = vdwg.mxu0
        %v2432 = vsel %vm2278, %v1984, 0
        %v2435 = vsel %vm2278, %v2130, 0
        %2437 = vmatprep.subr.mxu0 0.0
        %2438 = vmatpush1.xpose.msra.mxu0 %v2435
        %2439 = vmatprep.subr.mxu0 0.0
        %2440 = vmatpush1.xpose.msra.mxu0 0.0
        %2441 = vmatprep.subr.mxu0 0.0
        %2442 = vmatpush1.xpose.msra.mxu0 0.0
        %2443 = vmatprep.subr.mxu0 0.0
        %2444 = vmatpush1.xpose.msra.mxu0 0.0
        %2445 = vmatprep.subr.mxu0 0.0
        %2446 = vmatpush1.xpose.msra.mxu0 0.0
        %2447 = vmatprep.subr.mxu0 0.0
        %2448 = vmatpush1.xpose.msra.mxu0 0.0
        %2449 = vmatprep.subr.mxu0 0.0
        %2450 = vmatpush1.xpose.msra.mxu0 0.0
        %2451 = vmatprep.subr.mxu0 0.0
        %2452 = vmatpush1.xpose.msra.mxu0 0.0
        %2453 = vmatprep.subr.mxu0 0.0
        %2454 = vmatpush1.xpose.msra.mxu0 0.0
        %2455 = vmatprep.subr.mxu0 0.0
        %2456 = vmatpush1.xpose.msra.mxu0 0.0
        %2457 = vmatprep.subr.mxu0 0.0
        %2458 = vmatpush1.xpose.msra.mxu0 0.0
        %2459 = vmatprep.subr.mxu0 0.0
        %2460 = vmatpush1.xpose.msra.mxu0 0.0
        %2461 = vmatprep.subr.mxu0 0.0
        %2462 = vmatpush1.xpose.msra.mxu0 0.0
        %2463 = vmatprep.subr.mxu0 0.0
        %2464 = vmatpush1.xpose.msra.mxu0 0.0
        %2465 = vmatprep.subr.mxu0 0.0
        %2466 = vmatpush1.xpose.msra.mxu0 0.0
        %2467 = vmatprep.subr.mxu0 0.0
        %2468 = vmatpush1.xpose.msra.mxu0 0.0
        %2469 = vmatprep.subr.mxu0 0.0
        %2470 = vmatpush1.xpose.msra.mxu0 0.0
        %2471 = vmatprep.subr.mxu0 0.0
        %2472 = vmatpush1.xpose.msra.mxu0 0.0
        %2473 = vmatprep.subr.mxu0 0.0
        %2474 = vmatpush1.xpose.msra.mxu0 0.0
        %2475 = vmatprep.subr.mxu0 0.0
        %2476 = vmatpush1.xpose.msra.mxu0 0.0
        %2477 = vmatprep.subr.mxu0 0.0
        %2478 = vmatpush1.xpose.msra.mxu0 0.0
        %2479 = vmatprep.subr.mxu0 0.0
        %2480 = vmatpush1.xpose.msra.mxu0 0.0
        %2481 = vmatprep.subr.mxu0 0.0
        %2482 = vmatpush1.xpose.msra.mxu0 0.0
        %2483 = vmatprep.subr.mxu0 0.0
        %2484 = vmatpush1.xpose.msra.mxu0 0.0
        %2485 = vmatprep.subr.mxu0 0.0
        %2486 = vmatpush1.xpose.msra.mxu0 0.0
        %2487 = vmatprep.subr.mxu0 0.0
        %2488 = vmatpush1.xpose.msra.mxu0 0.0
        %2489 = vmatprep.subr.mxu0 0.0
        %2490 = vmatpush1.xpose.msra.mxu0 0.0
        %2491 = vmatprep.subr.mxu0 0.0
        %2492 = vmatpush1.xpose.msra.mxu0 0.0
        %2493 = vmatprep.subr.mxu0 0.0
        %2494 = vmatpush1.xpose.msra.mxu0 0.0
        %2495 = vmatprep.subr.mxu0 0.0
        %2496 = vmatpush1.xpose.msra.mxu0 0.0
        %2497 = vmatprep.subr.mxu0 0.0
        %2498 = vmatpush1.xpose.msra.mxu0 0.0
        %2499 = vmatprep.subr.mxu0 0.0
        %2500 = vmatpush1.xpose.msra.mxu0 0.0
        %2501 = vmatprep.mubr.f32.mxu0 0.0
        %2502 = vmatmul.mubr.f32.gmra.mrb[0].mxu0 %v2432
        %v2503 = vpop.f32.mrb[0].mxu0
        %v2504 = vadd.f32 %v1587, %v2503
        %v2505 = vpop.f32.mrb[0].mxu0
        %2506 = vdwg.mxu0
        %v2508 = vsel %vm2278, %v1985, 0
        %v2511 = vsel %vm2278, %v2131, 0
        %2513 = vmatprep.subr.mxu0 0.0
        %2514 = vmatpush1.xpose.msra.mxu0 %v2511
        %2515 = vmatprep.subr.mxu0 0.0
        %2516 = vmatpush1.xpose.msra.mxu0 0.0
        %2517 = vmatprep.subr.mxu0 0.0
        %2518 = vmatpush1.xpose.msra.mxu0 0.0
        %2519 = vmatprep.subr.mxu0 0.0
        %2520 = vmatpush1.xpose.msra.mxu0 0.0
        %2521 = vmatprep.subr.mxu0 0.0
        %2522 = vmatpush1.xpose.msra.mxu0 0.0
        %2523 = vmatprep.subr.mxu0 0.0
        %2524 = vmatpush1.xpose.msra.mxu0 0.0
        %2525 = vmatprep.subr.mxu0 0.0
        %2526 = vmatpush1.xpose.msra.mxu0 0.0
        %2527 = vmatprep.subr.mxu0 0.0
        %2528 = vmatpush1.xpose.msra.mxu0 0.0
        %2529 = vmatprep.subr.mxu0 0.0
        %2530 = vmatpush1.xpose.msra.mxu0 0.0
        %2531 = vmatprep.subr.mxu0 0.0
        %2532 = vmatpush1.xpose.msra.mxu0 0.0
        %2533 = vmatprep.subr.mxu0 0.0
        %2534 = vmatpush1.xpose.msra.mxu0 0.0
        %2535 = vmatprep.subr.mxu0 0.0
        %2536 = vmatpush1.xpose.msra.mxu0 0.0
        %2537 = vmatprep.subr.mxu0 0.0
        %2538 = vmatpush1.xpose.msra.mxu0 0.0
        %2539 = vmatprep.subr.mxu0 0.0
        %2540 = vmatpush1.xpose.msra.mxu0 0.0
        %2541 = vmatprep.subr.mxu0 0.0
        %2542 = vmatpush1.xpose.msra.mxu0 0.0
        %2543 = vmatprep.subr.mxu0 0.0
        %2544 = vmatpush1.xpose.msra.mxu0 0.0
        %2545 = vmatprep.subr.mxu0 0.0
        %2546 = vmatpush1.xpose.msra.mxu0 0.0
        %2547 = vmatprep.subr.mxu0 0.0
        %2548 = vmatpush1.xpose.msra.mxu0 0.0
        %2549 = vmatprep.subr.mxu0 0.0
        %2550 = vmatpush1.xpose.msra.mxu0 0.0
        %2551 = vmatprep.subr.mxu0 0.0
        %2552 = vmatpush1.xpose.msra.mxu0 0.0
        %2553 = vmatprep.subr.mxu0 0.0
        %2554 = vmatpush1.xpose.msra.mxu0 0.0
        %2555 = vmatprep.subr.mxu0 0.0
        %2556 = vmatpush1.xpose.msra.mxu0 0.0
        %2557 = vmatprep.subr.mxu0 0.0
        %2558 = vmatpush1.xpose.msra.mxu0 0.0
        %2559 = vmatprep.subr.mxu0 0.0
        %2560 = vmatpush1.xpose.msra.mxu0 0.0
        %2561 = vmatprep.subr.mxu0 0.0
        %2562 = vmatpush1.xpose.msra.mxu0 0.0
        %2563 = vmatprep.subr.mxu0 0.0
        %2564 = vmatpush1.xpose.msra.mxu0 0.0
        %2565 = vmatprep.subr.mxu0 0.0
        %2566 = vmatpush1.xpose.msra.mxu0 0.0
        %2567 = vmatprep.subr.mxu0 0.0
        %2568 = vmatpush1.xpose.msra.mxu0 0.0
        %2569 = vmatprep.subr.mxu0 0.0
        %2570 = vmatpush1.xpose.msra.mxu0 0.0
        %2571 = vmatprep.subr.mxu0 0.0
        %2572 = vmatpush1.xpose.msra.mxu0 0.0
        %2573 = vmatprep.subr.mxu0 0.0
        %2574 = vmatpush1.xpose.msra.mxu0 0.0
        %2575 = vmatprep.subr.mxu0 0.0
        %2576 = vmatpush1.xpose.msra.mxu0 0.0
        %2577 = vmatprep.mubr.f32.mxu0 0.0
        %2578 = vmatmul.mubr.f32.gmra.mrb[0].mxu0 %v2508
        %v2579 = vpop.f32.mrb[0].mxu0
        %v2580 = vadd.f32 %v1587, %v2579
        %v2581 = vpop.f32.mrb[0].mxu0
        %2582 = vdwg.mxu0
        %v2583 = vsel %vm2278, %v2352, -inf
        %2584 = vmax.xlane.f32.xlu0 %v2583
        %v2585 = vpop.xlane.xlu0 %2584
        %v2586 = vsel %vm2278, %v2428, -inf
        %2587 = vmax.xlane.f32.xlu0 %v2586
        %v2588 = vpop.xlane.xlu0 %2587
        %v2589 = vsel %vm2278, %v2504, -inf
        %2590 = vmax.xlane.f32.xlu0 %v2589
        %v2591 = vpop.xlane.xlu0 %2590
        %v2592 = vsel %vm2278, %v2580, -inf
        %2593 = vmax.xlane.f32.xlu0 %v2592
        %v2594 = vpop.xlane.xlu0 %2593
        %v2595 = vsub.f32 %v2352, %v2585
        %v2596 = vsub.f32 %v2428, %v2588
        %v2597 = vsub.f32 %v2504, %v2591
        %v2598 = vsub.f32 %v2580, %v2594
        %v2599 = vmul.f32 %v2595, 1.442695
        %v2600 = vpow.pop %v2599
        %v2601 = vmul.f32 %v2596, 1.442695
        %v2602 = vpow.pop %v2601
        %v2603 = vmul.f32 %v2597, 1.442695
        %v2604 = vpow.pop %v2603
        %v2605 = vmul.f32 %v2598, 1.442695
        %v2606 = vpow.pop %v2605
        %v2607 = vsel %vm2278, %v2600, 0.0
        %2608 = vadd.xlane.f32.xlu0 %v2607
        %v2609 = vpop.xlane.xlu0 %2608
        %v2610 = vsel %vm2278, %v2602, 0.0
        %2611 = vadd.xlane.f32.xlu0 %v2610
        %v2612 = vpop.xlane.xlu0 %2611
        %v2613 = vsel %vm2278, %v2604, 0.0
        %2614 = vadd.xlane.f32.xlu0 %v2613
        %v2615 = vpop.xlane.xlu0 %2614
        %v2616 = vsel %vm2278, %v2606, 0.0
        %2617 = vadd.xlane.f32.xlu0 %v2616
        %v2618 = vpop.xlane.xlu0 %2617
        %v2619 = vrcp.pop %v2609
        %v2620 = vrcp.pop %v2612
        %v2621 = vrcp.pop %v2615
        %v2622 = vrcp.pop %v2618
        %v2623 = vmul.f32 %v2600, %v2619
        %v2624 = vmul.f32 %v2602, %v2620
        %v2625 = vmul.f32 %v2604, %v2621
        %v2626 = vmul.f32 %v2606, %v2622
        %v2628 = vsel %vm2278, %v2623, 0
        %2630 = vmatprep.subr.mxu0 0.0
        %2631 = vmatpush1.msra.mxu0 %v2274
        %2632 = vmatprep.subr.mxu0 0.0
        %2633 = vmatpush1.msra.mxu0 0.0
        %2634 = vmatprep.subr.mxu0 0.0
        %2635 = vmatpush1.msra.mxu0 0.0
        %2636 = vmatprep.subr.mxu0 0.0
        %2637 = vmatpush1.msra.mxu0 0.0
        %2638 = vmatprep.subr.mxu0 0.0
        %2639 = vmatpush1.msra.mxu0 0.0
        %2640 = vmatprep.subr.mxu0 0.0
        %2641 = vmatpush1.msra.mxu0 0.0
        %2642 = vmatprep.subr.mxu0 0.0
        %2643 = vmatpush1.msra.mxu0 0.0
        %2644 = vmatprep.subr.mxu0 0.0
        %2645 = vmatpush1.msra.mxu0 0.0
        %2646 = vmatprep.subr.mxu0 0.0
        %2647 = vmatpush1.msra.mxu0 0.0
        %2648 = vmatprep.subr.mxu0 0.0
        %2649 = vmatpush1.msra.mxu0 0.0
        %2650 = vmatprep.subr.mxu0 0.0
        %2651 = vmatpush1.msra.mxu0 0.0
        %2652 = vmatprep.subr.mxu0 0.0
        %2653 = vmatpush1.msra.mxu0 0.0
        %2654 = vmatprep.subr.mxu0 0.0
        %2655 = vmatpush1.msra.mxu0 0.0
        %2656 = vmatprep.subr.mxu0 0.0
        %2657 = vmatpush1.msra.mxu0 0.0
        %2658 = vmatprep.subr.mxu0 0.0
        %2659 = vmatpush1.msra.mxu0 0.0
        %2660 = vmatprep.subr.mxu0 0.0
        %2661 = vmatpush1.msra.mxu0 0.0
        %2662 = vmatprep.subr.mxu0 0.0
        %2663 = vmatpush1.msra.mxu0 0.0
        %2664 = vmatprep.subr.mxu0 0.0
        %2665 = vmatpush1.msra.mxu0 0.0
        %2666 = vmatprep.subr.mxu0 0.0
        %2667 = vmatpush1.msra.mxu0 0.0
        %2668 = vmatprep.subr.mxu0 0.0
        %2669 = vmatpush1.msra.mxu0 0.0
        %2670 = vmatprep.subr.mxu0 0.0
        %2671 = vmatpush1.msra.mxu0 0.0
        %2672 = vmatprep.subr.mxu0 0.0
        %2673 = vmatpush1.msra.mxu0 0.0
        %2674 = vmatprep.subr.mxu0 0.0
        %2675 = vmatpush1.msra.mxu0 0.0
        %2676 = vmatprep.subr.mxu0 0.0
        %2677 = vmatpush1.msra.mxu0 0.0
        %2678 = vmatprep.subr.mxu0 0.0
        %2679 = vmatpush1.msra.mxu0 0.0
        %2680 = vmatprep.subr.mxu0 0.0
        %2681 = vmatpush1.msra.mxu0 0.0
        %2682 = vmatprep.subr.mxu0 0.0
        %2683 = vmatpush1.msra.mxu0 0.0
        %2684 = vmatprep.subr.mxu0 0.0
        %2685 = vmatpush1.msra.mxu0 0.0
        %2686 = vmatprep.subr.mxu0 0.0
        %2687 = vmatpush1.msra.mxu0 0.0
        %2688 = vmatprep.subr.mxu0 0.0
        %2689 = vmatpush1.msra.mxu0 0.0
        %2690 = vmatprep.subr.mxu0 0.0
        %2691 = vmatpush1.msra.mxu0 0.0
        %2692 = vmatprep.subr.mxu0 0.0
        %2693 = vmatpush1.msra.mxu0 0.0
        %2694 = vmatprep.mubr.f32.mxu0 0.0
        %2695 = vmatmul.mubr.f32.gmra.mrb[0].mxu0 %v2628
        %v2696 = vpop.f32.mrb[0].mxu0
        %v2697 = vadd.f32 0.0, %v2696
        %v2698 = vpop.f32.mrb[0].mxu0
        %2699 = vdwg.mxu0
        %v2701 = vsel %vm2278, %v2624, 0
        %2703 = vmatprep.subr.mxu0 0.0
        %2704 = vmatpush1.msra.mxu0 %v2275
        %2705 = vmatprep.subr.mxu0 0.0
        %2706 = vmatpush1.msra.mxu0 0.0
        %2707 = vmatprep.subr.mxu0 0.0
        %2708 = vmatpush1.msra.mxu0 0.0
        %2709 = vmatprep.subr.mxu0 0.0
        %2710 = vmatpush1.msra.mxu0 0.0
        %2711 = vmatprep.subr.mxu0 0.0
        %2712 = vmatpush1.msra.mxu0 0.0
        %2713 = vmatprep.subr.mxu0 0.0
        %2714 = vmatpush1.msra.mxu0 0.0
        %2715 = vmatprep.subr.mxu0 0.0
        %2716 = vmatpush1.msra.mxu0 0.0
        %2717 = vmatprep.subr.mxu0 0.0
        %2718 = vmatpush1.msra.mxu0 0.0
        %2719 = vmatprep.subr.mxu0 0.0
        %2720 = vmatpush1.msra.mxu0 0.0
        %2721 = vmatprep.subr.mxu0 0.0
        %2722 = vmatpush1.msra.mxu0 0.0
        %2723 = vmatprep.subr.mxu0 0.0
        %2724 = vmatpush1.msra.mxu0 0.0
        %2725 = vmatprep.subr.mxu0 0.0
        %2726 = vmatpush1.msra.mxu0 0.0
        %2727 = vmatprep.subr.mxu0 0.0
        %2728 = vmatpush1.msra.mxu0 0.0
        %2729 = vmatprep.subr.mxu0 0.0
        %2730 = vmatpush1.msra.mxu0 0.0
        %2731 = vmatprep.subr.mxu0 0.0
        %2732 = vmatpush1.msra.mxu0 0.0
        %2733 = vmatprep.subr.mxu0 0.0
        %2734 = vmatpush1.msra.mxu0 0.0
        %2735 = vmatprep.subr.mxu0 0.0
        %2736 = vmatpush1.msra.mxu0 0.0
        %2737 = vmatprep.subr.mxu0 0.0
        %2738 = vmatpush1.msra.mxu0 0.0
        %2739 = vmatprep.subr.mxu0 0.0
        %2740 = vmatpush1.msra.mxu0 0.0
        %2741 = vmatprep.subr.mxu0 0.0
        %2742 = vmatpush1.msra.mxu0 0.0
        %2743 = vmatprep.subr.mxu0 0.0
        %2744 = vmatpush1.msra.mxu0 0.0
        %2745 = vmatprep.subr.mxu0 0.0
        %2746 = vmatpush1.msra.mxu0 0.0
        %2747 = vmatprep.subr.mxu0 0.0
        %2748 = vmatpush1.msra.mxu0 0.0
        %2749 = vmatprep.subr.mxu0 0.0
        %2750 = vmatpush1.msra.mxu0 0.0
        %2751 = vmatprep.subr.mxu0 0.0
        %2752 = vmatpush1.msra.mxu0 0.0
        %2753 = vmatprep.subr.mxu0 0.0
        %2754 = vmatpush1.msra.mxu0 0.0
        %2755 = vmatprep.subr.mxu0 0.0
        %2756 = vmatpush1.msra.mxu0 0.0
        %2757 = vmatprep.subr.mxu0 0.0
        %2758 = vmatpush1.msra.mxu0 0.0
        %2759 = vmatprep.subr.mxu0 0.0
        %2760 = vmatpush1.msra.mxu0 0.0
        %2761 = vmatprep.subr.mxu0 0.0
        %2762 = vmatpush1.msra.mxu0 0.0
        %2763 = vmatprep.subr.mxu0 0.0
        %2764 = vmatpush1.msra.mxu0 0.0
        %2765 = vmatprep.subr.mxu0 0.0
        %2766 = vmatpush1.msra.mxu0 0.0
        %2767 = vmatprep.mubr.f32.mxu0 0.0
        %2768 = vmatmul.mubr.f32.gmra.mrb[0].mxu0 %v2701
        %v2769 = vpop.f32.mrb[0].mxu0
        %v2770 = vadd.f32 0.0, %v2769
        %v2771 = vpop.f32.mrb[0].mxu0
        %2772 = vdwg.mxu0
        %v2774 = vsel %vm2278, %v2625, 0
        %2776 = vmatprep.subr.mxu0 0.0
        %2777 = vmatpush1.msra.mxu0 %v2276
        %2778 = vmatprep.subr.mxu0 0.0
        %2779 = vmatpush1.msra.mxu0 0.0
        %2780 = vmatprep.subr.mxu0 0.0
        %2781 = vmatpush1.msra.mxu0 0.0
        %2782 = vmatprep.subr.mxu0 0.0
        %2783 = vmatpush1.msra.mxu0 0.0
        %2784 = vmatprep.subr.mxu0 0.0
        %2785 = vmatpush1.msra.mxu0 0.0
        %2786 = vmatprep.subr.mxu0 0.0
        %2787 = vmatpush1.msra.mxu0 0.0
        %2788 = vmatprep.subr.mxu0 0.0
        %2789 = vmatpush1.msra.mxu0 0.0
        %2790 = vmatprep.subr.mxu0 0.0
        %2791 = vmatpush1.msra.mxu0 0.0
        %2792 = vmatprep.subr.mxu0 0.0
        %2793 = vmatpush1.msra.mxu0 0.0
        %2794 = vmatprep.subr.mxu0 0.0
        %2795 = vmatpush1.msra.mxu0 0.0
        %2796 = vmatprep.subr.mxu0 0.0
        %2797 = vmatpush1.msra.mxu0 0.0
        %2798 = vmatprep.subr.mxu0 0.0
        %2799 = vmatpush1.msra.mxu0 0.0
        %2800 = vmatprep.subr.mxu0 0.0
        %2801 = vmatpush1.msra.mxu0 0.0
        %2802 = vmatprep.subr.mxu0 0.0
        %2803 = vmatpush1.msra.mxu0 0.0
        %2804 = vmatprep.subr.mxu0 0.0
        %2805 = vmatpush1.msra.mxu0 0.0
        %2806 = vmatprep.subr.mxu0 0.0
        %2807 = vmatpush1.msra.mxu0 0.0
        %2808 = vmatprep.subr.mxu0 0.0
        %2809 = vmatpush1.msra.mxu0 0.0
        %2810 = vmatprep.subr.mxu0 0.0
        %2811 = vmatpush1.msra.mxu0 0.0
        %2812 = vmatprep.subr.mxu0 0.0
        %2813 = vmatpush1.msra.mxu0 0.0
        %2814 = vmatprep.subr.mxu0 0.0
        %2815 = vmatpush1.msra.mxu0 0.0
        %2816 = vmatprep.subr.mxu0 0.0
        %2817 = vmatpush1.msra.mxu0 0.0
        %2818 = vmatprep.subr.mxu0 0.0
        %2819 = vmatpush1.msra.mxu0 0.0
        %2820 = vmatprep.subr.mxu0 0.0
        %2821 = vmatpush1.msra.mxu0 0.0
        %2822 = vmatprep.subr.mxu0 0.0
        %2823 = vmatpush1.msra.mxu0 0.0
        %2824 = vmatprep.subr.mxu0 0.0
        %2825 = vmatpush1.msra.mxu0 0.0
        %2826 = vmatprep.subr.mxu0 0.0
        %2827 = vmatpush1.msra.mxu0 0.0
        %2828 = vmatprep.subr.mxu0 0.0
        %2829 = vmatpush1.msra.mxu0 0.0
        %2830 = vmatprep.subr.mxu0 0.0
        %2831 = vmatpush1.msra.mxu0 0.0
        %2832 = vmatprep.subr.mxu0 0.0
        %2833 = vmatpush1.msra.mxu0 0.0
        %2834 = vmatprep.subr.mxu0 0.0
        %2835 = vmatpush1.msra.mxu0 0.0
        %2836 = vmatprep.subr.mxu0 0.0
        %2837 = vmatpush1.msra.mxu0 0.0
        %2838 = vmatprep.subr.mxu0 0.0
        %2839 = vmatpush1.msra.mxu0 0.0
        %2840 = vmatprep.mubr.f32.mxu0 0.0
        %2841 = vmatmul.mubr.f32.gmra.mrb[0].mxu0 %v2774
        %v2842 = vpop.f32.mrb[0].mxu0
        %v2843 = vadd.f32 0.0, %v2842
        %v2844 = vpop.f32.mrb[0].mxu0
        %2845 = vdwg.mxu0
        %v2847 = vsel %vm2278, %v2626, 0
        %2849 = vmatprep.subr.mxu0 0.0
        %2850 = vmatpush1.msra.mxu0 %v2277
        %2851 = vmatprep.subr.mxu0 0.0
        %2852 = vmatpush1.msra.mxu0 0.0
        %2853 = vmatprep.subr.mxu0 0.0
        %2854 = vmatpush1.msra.mxu0 0.0
        %2855 = vmatprep.subr.mxu0 0.0
        %2856 = vmatpush1.msra.mxu0 0.0
        %2857 = vmatprep.subr.mxu0 0.0
        %2858 = vmatpush1.msra.mxu0 0.0
        %2859 = vmatprep.subr.mxu0 0.0
        %2860 = vmatpush1.msra.mxu0 0.0
        %2861 = vmatprep.subr.mxu0 0.0
        %2862 = vmatpush1.msra.mxu0 0.0
        %2863 = vmatprep.subr.mxu0 0.0
        %2864 = vmatpush1.msra.mxu0 0.0
        %2865 = vmatprep.subr.mxu0 0.0
        %2866 = vmatpush1.msra.mxu0 0.0
        %2867 = vmatprep.subr.mxu0 0.0
        %2868 = vmatpush1.msra.mxu0 0.0
        %2869 = vmatprep.subr.mxu0 0.0
        %2870 = vmatpush1.msra.mxu0 0.0
        %2871 = vmatprep.subr.mxu0 0.0
        %2872 = vmatpush1.msra.mxu0 0.0
        %2873 = vmatprep.subr.mxu0 0.0
        %2874 = vmatpush1.msra.mxu0 0.0
        %2875 = vmatprep.subr.mxu0 0.0
        %2876 = vmatpush1.msra.mxu0 0.0
        %2877 = vmatprep.subr.mxu0 0.0
        %2878 = vmatpush1.msra.mxu0 0.0
        %2879 = vmatprep.subr.mxu0 0.0
        %2880 = vmatpush1.msra.mxu0 0.0
        %2881 = vmatprep.subr.mxu0 0.0
        %2882 = vmatpush1.msra.mxu0 0.0
        %2883 = vmatprep.subr.mxu0 0.0
        %2884 = vmatpush1.msra.mxu0 0.0
        %2885 = vmatprep.subr.mxu0 0.0
        %2886 = vmatpush1.msra.mxu0 0.0
        %2887 = vmatprep.subr.mxu0 0.0
        %2888 = vmatpush1.msra.mxu0 0.0
        %2889 = vmatprep.subr.mxu0 0.0
        %2890 = vmatpush1.msra.mxu0 0.0
        %2891 = vmatprep.subr.mxu0 0.0
        %2892 = vmatpush1.msra.mxu0 0.0
        %2893 = vmatprep.subr.mxu0 0.0
        %2894 = vmatpush1.msra.mxu0 0.0
        %2895 = vmatprep.subr.mxu0 0.0
        %2896 = vmatpush1.msra.mxu0 0.0
        %2897 = vmatprep.subr.mxu0 0.0
        %2898 = vmatpush1.msra.mxu0 0.0
        %2899 = vmatprep.subr.mxu0 0.0
        %2900 = vmatpush1.msra.mxu0 0.0
        %2901 = vmatprep.subr.mxu0 0.0
        %2902 = vmatpush1.msra.mxu0 0.0
        %2903 = vmatprep.subr.mxu0 0.0
        %2904 = vmatpush1.msra.mxu0 0.0
        %2905 = vmatprep.subr.mxu0 0.0
        %2906 = vmatpush1.msra.mxu0 0.0
        %2907 = vmatprep.subr.mxu0 0.0
        %2908 = vmatpush1.msra.mxu0 0.0
        %2909 = vmatprep.subr.mxu0 0.0
        %2910 = vmatpush1.msra.mxu0 0.0
        %2911 = vmatprep.subr.mxu0 0.0
        %2912 = vmatpush1.msra.mxu0 0.0
        %2913 = vmatprep.mubr.f32.mxu0 0.0
        %2914 = vmatmul.mubr.f32.gmra.mrb[0].mxu0 %v2847
        %v2915 = vpop.f32.mrb[0].mxu0
        %v2916 = vadd.f32 0.0, %v2915
        %v2917 = vpop.f32.mrb[0].mxu0
        %2918 = vdwg.mxu0
        %v2919 = vcombine.low %v2697, %v2843
        %v2920 = vcombine.high %v2697, %v2843
        %v2922 = vunpack.c.l.s4 1983009808
        %v2923 = vunpack.c.0.s8 %v2922
        %v2924 = vlaneseq
        %v2925 = vshrl.u32 %v2924, 7
        %v2926 = vsub.s32 %v2923, %v2925
        %v2927 = vrot.slane %v2919, %v2926
        %v2929 = vunpack.c.l.s4 1983009808
        %v2930 = vunpack.c.0.s8 %v2929
        %v2931 = vlaneseq
        %v2932 = vshrl.u32 %v2931, 7
        %v2933 = vsub.s32 %v2930, %v2932
        %v2934 = vrot.slane %v2920, %v2933
        %v2935 = vcombine.low %v2770, %v2916
        %v2936 = vcombine.high %v2770, %v2916
        %v2938 = vunpack.c.l.s4 1983009808
        %v2939 = vunpack.c.0.s8 %v2938
        %v2940 = vlaneseq
        %v2941 = vshrl.u32 %v2940, 7
        %v2942 = vsub.s32 %v2939, %v2941
        %v2943 = vrot.slane %v2935, %v2942
        %v2945 = vunpack.c.l.s4 1983009808
        %v2946 = vunpack.c.0.s8 %v2945
        %v2947 = vlaneseq
        %v2948 = vshrl.u32 %v2947, 7
        %v2949 = vsub.s32 %v2946, %v2948
        %v2950 = vrot.slane %v2936, %v2949
        %v2951 = vcombine.low %v2927, %v2943
        %v2952 = vcombine.high %v2927, %v2943
        %v2954 = vunpack.c.l.s4 1934713408
        %v2955 = vunpack.c.0.s8 %v2954
        %v2956 = vlaneseq
        %v2957 = vshrl.u32 %v2956, 7
        %v2958 = vsub.s32 %v2955, %v2957
        %v2959 = vrot.slane %v2951, %v2958
        %v2961 = vunpack.c.l.s4 1934713408
        %v2962 = vunpack.c.0.s8 %v2961
        %v2963 = vlaneseq
        %v2964 = vshrl.u32 %v2963, 7
        %v2965 = vsub.s32 %v2962, %v2964
        %v2966 = vrot.slane %v2952, %v2965
        %v2967 = vcombine.low %v2934, %v2950
        %v2968 = vcombine.high %v2934, %v2950
        %v2970 = vunpack.c.l.s4 1934713408
        %v2971 = vunpack.c.0.s8 %v2970
        %v2972 = vlaneseq
        %v2973 = vshrl.u32 %v2972, 7
        %v2974 = vsub.s32 %v2971, %v2973
        %v2975 = vrot.slane %v2967, %v2974
        %v2977 = vunpack.c.l.s4 1934713408
        %v2978 = vunpack.c.0.s8 %v2977
        %v2979 = vlaneseq
        %v2980 = vshrl.u32 %v2979, 7
        %v2981 = vsub.s32 %v2978, %v2980
        %v2982 = vrot.slane %v2968, %v2981
        %v2983 = vcombine.high %v2959, 0.0
        %v2984 = vcombine.high %v2966, 0.0
        %v2985 = vcombine.high %v2975, 0.0
        %v2986 = vcombine.high %v2982, 0.0
        %v2987 = vcombine.low %v2959, %v2966
        %v2989 = vunpack.c.l.s4 1983009808
        %v2990 = vunpack.c.0.s8 %v2989
        %v2991 = vlaneseq
        %v2992 = vshrl.u32 %v2991, 7
        %v2993 = vsub.s32 %v2990, %v2992
        %v2994 = vrot.slane %v2987, %v2993
        %v2995 = vcombine.low %v2983, %v2984
        %v2997 = vunpack.c.l.s4 1983009808
        %v2998 = vunpack.c.0.s8 %v2997
        %v2999 = vlaneseq
        %v3000 = vshrl.u32 %v2999, 7
        %v3001 = vsub.s32 %v2998, %v3000
        %v3002 = vrot.slane %v2995, %v3001
        %v3003 = vcombine.low %v2975, %v2982
        %v3005 = vunpack.c.l.s4 1983009808
        %v3006 = vunpack.c.0.s8 %v3005
        %v3007 = vlaneseq
        %v3008 = vshrl.u32 %v3007, 7
        %v3009 = vsub.s32 %v3006, %v3008
        %v3010 = vrot.slane %v3003, %v3009
        %v3011 = vcombine.low %v2985, %v2986
        %v3013 = vunpack.c.l.s4 1983009808
        %v3014 = vunpack.c.0.s8 %v3013
        %v3015 = vlaneseq
        %v3016 = vshrl.u32 %v3015, 7
        %v3017 = vsub.s32 %v3014, %v3016
        %v3018 = vrot.slane %v3011, %v3017
        %v3019 = vcombine.low %v2994, %v3002
        %v3020 = vcombine.high %v2994, %v3002
        %v3022 = vunpack.c.l.s4 1934713408
        %v3023 = vunpack.c.0.s8 %v3022
        %v3024 = vlaneseq
        %v3025 = vshrl.u32 %v3024, 7
        %v3026 = vsub.s32 %v3023, %v3025
        %v3027 = vrot.slane %v3019, %v3026
        %v3029 = vunpack.c.l.s4 1934713408
        %v3030 = vunpack.c.0.s8 %v3029
        %v3031 = vlaneseq
        %v3032 = vshrl.u32 %v3031, 7
        %v3033 = vsub.s32 %v3030, %v3032
        %v3034 = vrot.slane %v3020, %v3033
        %v3035 = vcombine.low %v3010, %v3018
        %v3036 = vcombine.high %v3010, %v3018
        %v3038 = vunpack.c.l.s4 1934713408
        %v3039 = vunpack.c.0.s8 %v3038
        %v3040 = vlaneseq
        %v3041 = vshrl.u32 %v3040, 7
        %v3042 = vsub.s32 %v3039, %v3041
        %v3043 = vrot.slane %v3035, %v3042
        %v3045 = vunpack.c.l.s4 1934713408
        %v3046 = vunpack.c.0.s8 %v3045
        %v3047 = vlaneseq
        %v3048 = vshrl.u32 %v3047, 7
        %v3049 = vsub.s32 %v3046, %v3048
        %v3050 = vrot.slane %v3036, %v3049
        %v3051 = vcombine.low %v3027, %v3043
        %v3052 = vcombine.high %v3027, %v3043
        %v3053 = vcombine.low %v3034, %v3050
        %v3054 = vcombine.high %v3034, %v3050
        %3056 = vrot.lane.b32.xlu0 %v3052, 8
        %v3057 = vpop.permute.xlu0 %3056
        %3060 = vrot.lane.b32.xlu0 %v3053, 16
        %v3061 = vpop.permute.xlu0 %3060
        %3064 = vrot.lane.b32.xlu0 %v3054, 24
        %v3065 = vpop.permute.xlu0 %3064
        %v3067 = vsel %vm2278, %v3051, %v3057
        %vm3068 = vcmask 130048
        %v3069 = vsel %vm3068, %v3067, %v3061
        %vm3070 = vcmask 195584
        %v3071 = vsel %vm3070, %v3069, %v3065
        %v3073 = vlaneseq
        %v3074 = vshrl.u32 %v3073, 7
        %v3075 = vsub.s32 0, %v3074
        %v3076 = vrot.slane %v1607, %v3075
        %v3079 = vsel %vm1614, %v3071, 0
        %3081 = vmatprep.subr.mxu0 0.0
        %3082 = vmatpush1.msra.mxu0 %v1603
        %3083 = vmatprep.subr.mxu0 0.0
        %3084 = vmatpush1.msra.mxu0 %v1604
        %3085 = vmatprep.subr.mxu0 0.0
        %3086 = vmatpush1.msra.mxu0 %v1605
        %3087 = vmatprep.subr.mxu0 0.0
        %3088 = vmatpush1.msra.mxu0 %v1606
        %3089 = vmatprep.subr.mxu0 0.0
        %3090 = vmatpush1.msra.mxu0 0.0
        %3091 = vmatprep.subr.mxu0 0.0
        %3092 = vmatpush1.msra.mxu0 0.0
        %3093 = vmatprep.subr.mxu0 0.0
        %3094 = vmatpush1.msra.mxu0 0.0
        %3095 = vmatprep.subr.mxu0 0.0
        %3096 = vmatpush1.msra.mxu0 0.0
        %3097 = vmatprep.subr.mxu0 0.0
        %3098 = vmatpush1.msra.mxu0 0.0
        %3099 = vmatprep.subr.mxu0 0.0
        %3100 = vmatpush1.msra.mxu0 0.0
        %3101 = vmatprep.subr.mxu0 0.0
        %3102 = vmatpush1.msra.mxu0 0.0
        %3103 = vmatprep.subr.mxu0 0.0
        %3104 = vmatpush1.msra.mxu0 0.0
        %3105 = vmatprep.subr.mxu0 0.0
        %3106 = vmatpush1.msra.mxu0 0.0
        %3107 = vmatprep.subr.mxu0 0.0
        %3108 = vmatpush1.msra.mxu0 0.0
        %3109 = vmatprep.subr.mxu0 0.0
        %3110 = vmatpush1.msra.mxu0 0.0
        %3111 = vmatprep.subr.mxu0 0.0
        %3112 = vmatpush1.msra.mxu0 0.0
        %3113 = vmatprep.subr.mxu0 0.0
        %3114 = vmatpush1.msra.mxu0 0.0
        %3115 = vmatprep.subr.mxu0 0.0
        %3116 = vmatpush1.msra.mxu0 0.0
        %3117 = vmatprep.subr.mxu0 0.0
        %3118 = vmatpush1.msra.mxu0 0.0
        %3119 = vmatprep.subr.mxu0 0.0
        %3120 = vmatpush1.msra.mxu0 0.0
        %3121 = vmatprep.subr.mxu0 0.0
        %3122 = vmatpush1.msra.mxu0 0.0
        %3123 = vmatprep.subr.mxu0 0.0
        %3124 = vmatpush1.msra.mxu0 0.0
        %3125 = vmatprep.subr.mxu0 0.0
        %3126 = vmatpush1.msra.mxu0 0.0
        %3127 = vmatprep.subr.mxu0 0.0
        %3128 = vmatpush1.msra.mxu0 0.0
        %3129 = vmatprep.subr.mxu0 0.0
        %3130 = vmatpush1.msra.mxu0 0.0
        %3131 = vmatprep.subr.mxu0 0.0
        %3132 = vmatpush1.msra.mxu0 0.0
        %3133 = vmatprep.subr.mxu0 0.0
        %3134 = vmatpush1.msra.mxu0 0.0
        %3135 = vmatprep.subr.mxu0 0.0
        %3136 = vmatpush1.msra.mxu0 0.0
        %3137 = vmatprep.subr.mxu0 0.0
        %3138 = vmatpush1.msra.mxu0 0.0
        %3139 = vmatprep.subr.mxu0 0.0
        %3140 = vmatpush1.msra.mxu0 0.0
        %3141 = vmatprep.subr.mxu0 0.0
        %3142 = vmatpush1.msra.mxu0 0.0
        %3143 = vmatprep.subr.mxu0 0.0
        %3144 = vmatpush1.msra.mxu0 0.0
        %3145 = vmatprep.mubr.f32.mxu0 0.0
        %3146 = vmatmul.mubr.f32.gmra.mrb[0].mxu0 %v3079
        %v3147 = vpop.f32.mrb[0].mxu0
        %v3148 = vadd.f32 %v3076, %v3147
        %v3149 = vpop.f32.mrb[0].mxu0
        %3150 = vdwg.mxu0
        %v3151 = vadd.f32 %v1585, %v3148
        %v3152 = vld [vmem:[%s1539] sm:$0x1]
        %v3153 = vld [vmem:[%s1542] sm:$0x1]
        %v3154 = vsel %vm1614, %v3151, 0.0
        %3155 = vadd.xlane.f32.xlu0 %v3154
        %v3156 = vpop.xlane.xlu0 %3155
        %v3157 = vrcp.pop 32.0
        %v3158 = vmul.f32 %v3156, %v3157
        %v3159 = vsub.f32 %v3151, %v3158
        %v3160 = vmul.f32 %v3159, %v3159
        %v3161 = vsel %vm1614, %v3160, 0.0
        %3162 = vadd.xlane.f32.xlu0 %v3161
        %v3163 = vpop.xlane.xlu0 %3162
        %v3164 = vmul.f32 %v3163, %v3157
        %v3165 = vadd.f32 %v3164, 1e-05
        %v3166 = vrsqrt.pop %v3165
        %v3167 = vmul.f32 %v3159, %v3166
        %v3169 = vlaneseq
        %v3170 = vshrl.u32 %v3169, 7
        %v3171 = vsub.s32 0, %v3170
        %v3172 = vrot.slane %v3152, %v3171
        %v3174 = vmul.f32 %v3167, %v3172
        %v3176 = vlaneseq
        %v3177 = vshrl.u32 %v3176, 7
        %v3178 = vsub.s32 0, %v3177
        %v3179 = vrot.slane %v3153, %v3178
        %v3181 = vadd.f32 %v3174, %v3179
        %v3182 = vld [vmem:[%s1509] sm:$0x1]
        %v3183 = vld [vmem:[%s1283] sm:$0xff]
        %v3184 = vld [vmem:[%s1283 + $0x8] sm:$0xff]
        %v3185 = vld [vmem:[%s1283 + $0x10] sm:$0xff]
        %v3186 = vld [vmem:[%s1283 + $0x18] sm:$0xff]
        %v3187 = vld [vmem:[%s1545] sm:$0x1]
        %v3188 = vld [vmem:[%s1292] sm:$0xff]
        %v3189 = vld [vmem:[%s1292 + $0x8] sm:$0xff]
        %v3190 = vld [vmem:[%s1292 + $0x10] sm:$0xff]
        %v3191 = vld [vmem:[%s1292 + $0x18] sm:$0xff]
        %v3192 = vld [vmem:[%s1548] sm:$0x1]
        %v3193 = vld [vmem:[%s1301] sm:$0xff]
        %v3194 = vld [vmem:[%s1301 + $0x8] sm:$0xff]
        %v3195 = vld [vmem:[%s1301 + $0x10] sm:$0xff]
        %v3196 = vld [vmem:[%s1301 + $0x18] sm:$0xff]
        %v3197 = vld [vmem:[%s1551] sm:$0x1]
        %v3198 = vld [vmem:[%s1310] sm:$0xff]
        %v3199 = vld [vmem:[%s1310 + $0x8] sm:$0xff]
        %v3200 = vld [vmem:[%s1310 + $0x10] sm:$0xff]
        %v3201 = vld [vmem:[%s1310 + $0x18] sm:$0xff]
        %v3202 = vld [vmem:[%s1554] sm:$0x1]
        %v3204 = vlaneseq
        %v3205 = vshrl.u32 %v3204, 7
        %v3206 = vsub.s32 0, %v3205
        %v3207 = vrot.slane %v3187, %v3206
        %v3210 = vsel %vm1614, %v3181, 0
        %3212 = vmatprep.subr.mxu0 0.0
        %3213 = vmatpush1.msra.mxu0 %v3183
        %3214 = vmatprep.subr.mxu0 0.0
        %3215 = vmatpush1.msra.mxu0 %v3184
        %3216 = vmatprep.subr.mxu0 0.0
        %3217 = vmatpush1.msra.mxu0 %v3185
        %3218 = vmatprep.subr.mxu0 0.0
        %3219 = vmatpush1.msra.mxu0 %v3186
        %3220 = vmatprep.subr.mxu0 0.0
        %3221 = vmatpush1.msra.mxu0 0.0
        %3222 = vmatprep.subr.mxu0 0.0
        %3223 = vmatpush1.msra.mxu0 0.0
        %3224 = vmatprep.subr.mxu0 0.0
        %3225 = vmatpush1.msra.mxu0 0.0
        %3226 = vmatprep.subr.mxu0 0.0
        %3227 = vmatpush1.msra.mxu0 0.0
        %3228 = vmatprep.subr.mxu0 0.0
        %3229 = vmatpush1.msra.mxu0 0.0
        %3230 = vmatprep.subr.mxu0 0.0
        %3231 = vmatpush1.msra.mxu0 0.0
        %3232 = vmatprep.subr.mxu0 0.0
        %3233 = vmatpush1.msra.mxu0 0.0
        %3234 = vmatprep.subr.mxu0 0.0
        %3235 = vmatpush1.msra.mxu0 0.0
        %3236 = vmatprep.subr.mxu0 0.0
        %3237 = vmatpush1.msra.mxu0 0.0
        %3238 = vmatprep.subr.mxu0 0.0
        %3239 = vmatpush1.msra.mxu0 0.0
        %3240 = vmatprep.subr.mxu0 0.0
        %3241 = vmatpush1.msra.mxu0 0.0
        %3242 = vmatprep.subr.mxu0 0.0
        %3243 = vmatpush1.msra.mxu0 0.0
        %3244 = vmatprep.subr.mxu0 0.0
        %3245 = vmatpush1.msra.mxu0 0.0
        %3246 = vmatprep.subr.mxu0 0.0
        %3247 = vmatpush1.msra.mxu0 0.0
        %3248 = vmatprep.subr.mxu0 0.0
        %3249 = vmatpush1.msra.mxu0 0.0
        %3250 = vmatprep.subr.mxu0 0.0
        %3251 = vmatpush1.msra.mxu0 0.0
        %3252 = vmatprep.subr.mxu0 0.0
        %3253 = vmatpush1.msra.mxu0 0.0
        %3254 = vmatprep.subr.mxu0 0.0
        %3255 = vmatpush1.msra.mxu0 0.0
        %3256 = vmatprep.subr.mxu0 0.0
        %3257 = vmatpush1.msra.mxu0 0.0
        %3258 = vmatprep.subr.mxu0 0.0
        %3259 = vmatpush1.msra.mxu0 0.0
        %3260 = vmatprep.subr.mxu0 0.0
        %3261 = vmatpush1.msra.mxu0 0.0
        %3262 = vmatprep.subr.mxu0 0.0
        %3263 = vmatpush1.msra.mxu0 0.0
        %3264 = vmatprep.subr.mxu0 0.0
        %3265 = vmatpush1.msra.mxu0 0.0
        %3266 = vmatprep.subr.mxu0 0.0
        %3267 = vmatpush1.msra.mxu0 0.0
        %3268 = vmatprep.subr.mxu0 0.0
        %3269 = vmatpush1.msra.mxu0 0.0
        %3270 = vmatprep.subr.mxu0 0.0
        %3271 = vmatpush1.msra.mxu0 0.0
        %3272 = vmatprep.subr.mxu0 0.0
        %3273 = vmatpush1.msra.mxu0 0.0
        %3274 = vmatprep.subr.mxu0 0.0
        %3275 = vmatpush1.msra.mxu0 0.0
        %3276 = vmatprep.mubr.f32.mxu0 0.0
        %3277 = vmatmul.mubr.f32.gmra.mrb[0].mxu0 %v3210
        %v3278 = vpop.f32.mrb[0].mxu0
        %v3279 = vadd.f32 %v3207, %v3278
        %v3280 = vpop.f32.mrb[0].mxu0
        %3281 = vdwg.mxu0
        %v3283 = vlaneseq
        %v3284 = vshrl.u32 %v3283, 7
        %v3285 = vsub.s32 0, %v3284
        %v3286 = vrot.slane %v3192, %v3285
        %v3289 = vsel %vm1614, %v1586, 0
        %3291 = vmatprep.subr.mxu0 0.0
        %3292 = vmatpush1.msra.mxu0 %v3188
        %3293 = vmatprep.subr.mxu0 0.0
        %3294 = vmatpush1.msra.mxu0 %v3189
        %3295 = vmatprep.subr.mxu0 0.0
        %3296 = vmatpush1.msra.mxu0 %v3190
        %3297 = vmatprep.subr.mxu0 0.0
        %3298 = vmatpush1.msra.mxu0 %v3191
        %3299 = vmatprep.subr.mxu0 0.0
        %3300 = vmatpush1.msra.mxu0 0.0
        %3301 = vmatprep.subr.mxu0 0.0
        %3302 = vmatpush1.msra.mxu0 0.0
        %3303 = vmatprep.subr.mxu0 0.0
        %3304 = vmatpush1.msra.mxu0 0.0
        %3305 = vmatprep.subr.mxu0 0.0
        %3306 = vmatpush1.msra.mxu0 0.0
        %3307 = vmatprep.subr.mxu0 0.0
        %3308 = vmatpush1.msra.mxu0 0.0
        %3309 = vmatprep.subr.mxu0 0.0
        %3310 = vmatpush1.msra.mxu0 0.0
        %3311 = vmatprep.subr.mxu0 0.0
        %3312 = vmatpush1.msra.mxu0 0.0
        %3313 = vmatprep.subr.mxu0 0.0
        %3314 = vmatpush1.msra.mxu0 0.0
        %3315 = vmatprep.subr.mxu0 0.0
        %3316 = vmatpush1.msra.mxu0 0.0
        %3317 = vmatprep.subr.mxu0 0.0
        %3318 = vmatpush1.msra.mxu0 0.0
        %3319 = vmatprep.subr.mxu0 0.0
        %3320 = vmatpush1.msra.mxu0 0.0
        %3321 = vmatprep.subr.mxu0 0.0
        %3322 = vmatpush1.msra.mxu0 0.0
        %3323 = vmatprep.subr.mxu0 0.0
        %3324 = vmatpush1.msra.mxu0 0.0
        %3325 = vmatprep.subr.mxu0 0.0
        %3326 = vmatpush1.msra.mxu0 0.0
        %3327 = vmatprep.subr.mxu0 0.0
        %3328 = vmatpush1.msra.mxu0 0.0
        %3329 = vmatprep.subr.mxu0 0.0
        %3330 = vmatpush1.msra.mxu0 0.0
        %3331 = vmatprep.subr.mxu0 0.0
        %3332 = vmatpush1.msra.mxu0 0.0
        %3333 = vmatprep.subr.mxu0 0.0
        %3334 = vmatpush1.msra.mxu0 0.0
        %3335 = vmatprep.subr.mxu0 0.0
        %3336 = vmatpush1.msra.mxu0 0.0
        %3337 = vmatprep.subr.mxu0 0.0
        %3338 = vmatpush1.msra.mxu0 0.0
        %3339 = vmatprep.subr.mxu0 0.0
        %3340 = vmatpush1.msra.mxu0 0.0
        %3341 = vmatprep.subr.mxu0 0.0
        %3342 = vmatpush1.msra.mxu0 0.0
        %3343 = vmatprep.subr.mxu0 0.0
        %3344 = vmatpush1.msra.mxu0 0.0
        %3345 = vmatprep.subr.mxu0 0.0
        %3346 = vmatpush1.msra.mxu0 0.0
        %3347 = vmatprep.subr.mxu0 0.0
        %3348 = vmatpush1.msra.mxu0 0.0
        %3349 = vmatprep.subr.mxu0 0.0
        %3350 = vmatpush1.msra.mxu0 0.0
        %3351 = vmatprep.subr.mxu0 0.0
        %3352 = vmatpush1.msra.mxu0 0.0
        %3353 = vmatprep.subr.mxu0 0.0
        %3354 = vmatpush1.msra.mxu0 0.0
        %3355 = vmatprep.mubr.f32.mxu0 0.0
        %3356 = vmatmul.mubr.f32.gmra.mrb[0].mxu0 %v3289
        %v3357 = vpop.f32.mrb[0].mxu0
        %v3358 = vadd.f32 %v3286, %v3357
        %v3359 = vpop.f32.mrb[0].mxu0
        %3360 = vdwg.mxu0
        %v3362 = vlaneseq
        %v3363 = vshrl.u32 %v3362, 7
        %v3364 = vsub.s32 0, %v3363
        %v3365 = vrot.slane %v3197, %v3364
        %3367 = vmatprep.subr.mxu0 0.0
        %3368 = vmatpush1.msra.mxu0 %v3193
        %3369 = vmatprep.subr.mxu0 0.0
        %3370 = vmatpush1.msra.mxu0 %v3194
        %3371 = vmatprep.subr.mxu0 0.0
        %3372 = vmatpush1.msra.mxu0 %v3195
        %3373 = vmatprep.subr.mxu0 0.0
        %3374 = vmatpush1.msra.mxu0 %v3196
        %3375 = vmatprep.subr.mxu0 0.0
        %3376 = vmatpush1.msra.mxu0 0.0
        %3377 = vmatprep.subr.mxu0 0.0
        %3378 = vmatpush1.msra.mxu0 0.0
        %3379 = vmatprep.subr.mxu0 0.0
        %3380 = vmatpush1.msra.mxu0 0.0
        %3381 = vmatprep.subr.mxu0 0.0
        %3382 = vmatpush1.msra.mxu0 0.0
        %3383 = vmatprep.subr.mxu0 0.0
        %3384 = vmatpush1.msra.mxu0 0.0
        %3385 = vmatprep.subr.mxu0 0.0
        %3386 = vmatpush1.msra.mxu0 0.0
        %3387 = vmatprep.subr.mxu0 0.0
        %3388 = vmatpush1.msra.mxu0 0.0
        %3389 = vmatprep.subr.mxu0 0.0
        %3390 = vmatpush1.msra.mxu0 0.0
        %3391 = vmatprep.subr.mxu0 0.0
        %3392 = vmatpush1.msra.mxu0 0.0
        %3393 = vmatprep.subr.mxu0 0.0
        %3394 = vmatpush1.msra.mxu0 0.0
        %3395 = vmatprep.subr.mxu0 0.0
        %3396 = vmatpush1.msra.mxu0 0.0
        %3397 = vmatprep.subr.mxu0 0.0
        %3398 = vmatpush1.msra.mxu0 0.0
        %3399 = vmatprep.subr.mxu0 0.0
        %3400 = vmatpush1.msra.mxu0 0.0
        %3401 = vmatprep.subr.mxu0 0.0
        %3402 = vmatpush1.msra.mxu0 0.0
        %3403 = vmatprep.subr.mxu0 0.0
        %3404 = vmatpush1.msra.mxu0 0.0
        %3405 = vmatprep.subr.mxu0 0.0
        %3406 = vmatpush1.msra.mxu0 0.0
        %3407 = vmatprep.subr.mxu0 0.0
        %3408 = vmatpush1.msra.mxu0 0.0
        %3409 = vmatprep.subr.mxu0 0.0
        %3410 = vmatpush1.msra.mxu0 0.0
        %3411 = vmatprep.subr.mxu0 0.0
        %3412 = vmatpush1.msra.mxu0 0.0
        %3413 = vmatprep.subr.mxu0 0.0
        %3414 = vmatpush1.msra.mxu0 0.0
        %3415 = vmatprep.subr.mxu0 0.0
        %3416 = vmatpush1.msra.mxu0 0.0
        %3417 = vmatprep.subr.mxu0 0.0
        %3418 = vmatpush1.msra.mxu0 0.0
        %3419 = vmatprep.subr.mxu0 0.0
        %3420 = vmatpush1.msra.mxu0 0.0
        %3421 = vmatprep.subr.mxu0 0.0
        %3422 = vmatpush1.msra.mxu0 0.0
        %3423 = vmatprep.subr.mxu0 0.0
        %3424 = vmatpush1.msra.mxu0 0.0
        %3425 = vmatprep.subr.mxu0 0.0
        %3426 = vmatpush1.msra.mxu0 0.0
        %3427 = vmatprep.subr.mxu0 0.0
        %3428 = vmatpush1.msra.mxu0 0.0
        %3429 = vmatprep.subr.mxu0 0.0
        %3430 = vmatpush1.msra.mxu0 0.0
        %3431 = vmatprep.mubr.f32.mxu0 0.0
        %3432 = vmatmul.mubr.f32.gmra.mrb[0].mxu0 %v3289
        %v3433 = vpop.f32.mrb[0].mxu0
        %v3434 = vadd.f32 %v3365, %v3433
        %v3435 = vpop.f32.mrb[0].mxu0
        %3436 = vdwg.mxu0
        %3438 = vrot.lane.b32.xlu0 %v3279, 120
        %v3439 = vpop.permute.xlu0 %3438
        %3441 = vrot.lane.b32.xlu0 %v3279, 112
        %v3442 = vpop.permute.xlu0 %3441
        %3444 = vrot.lane.b32.xlu0 %v3279, 104
        %v3445 = vpop.permute.xlu0 %3444
        %v3447 = vcombine.low %v3279, %v3442
        %v3448 = vcombine.high %v3279, %v3442
        %v3450 = vunpack.c.l.s4 1983009808
        %v3451 = vunpack.c.0.s8 %v3450
        %v3452 = vlaneseq
        %v3453 = vshrl.u32 %v3452, 7
        %v3454 = vsub.s32 %v3451, %v3453
        %v3455 = vrot.slane %v3447, %v3454
        %v3457 = vunpack.c.l.s4 1983009808
        %v3458 = vunpack.c.0.s8 %v3457
        %v3459 = vlaneseq
        %v3460 = vshrl.u32 %v3459, 7
        %v3461 = vsub.s32 %v3458, %v3460
        %v3462 = vrot.slane %v3448, %v3461
        %v3463 = vcombine.low %v3439, %v3445
        %v3464 = vcombine.high %v3439, %v3445
        %v3466 = vunpack.c.l.s4 1983009808
        %v3467 = vunpack.c.0.s8 %v3466
        %v3468 = vlaneseq
        %v3469 = vshrl.u32 %v3468, 7
        %v3470 = vsub.s32 %v3467, %v3469
        %v3471 = vrot.slane %v3463, %v3470
        %v3473 = vunpack.c.l.s4 1983009808
        %v3474 = vunpack.c.0.s8 %v3473
        %v3475 = vlaneseq
        %v3476 = vshrl.u32 %v3475, 7
        %v3477 = vsub.s32 %v3474, %v3476
        %v3478 = vrot.slane %v3464, %v3477
        %v3479 = vcombine.low %v3455, %v3471
        %v3480 = vcombine.high %v3455, %v3471
        %v3482 = vunpack.c.l.s4 1934713408
        %v3483 = vunpack.c.0.s8 %v3482
        %v3484 = vlaneseq
        %v3485 = vshrl.u32 %v3484, 7
        %v3486 = vsub.s32 %v3483, %v3485
        %v3487 = vrot.slane %v3479, %v3486
        %v3489 = vunpack.c.l.s4 1934713408
        %v3490 = vunpack.c.0.s8 %v3489
        %v3491 = vlaneseq
        %v3492 = vshrl.u32 %v3491, 7
        %v3493 = vsub.s32 %v3490, %v3492
        %v3494 = vrot.slane %v3480, %v3493
        %v3495 = vcombine.low %v3462, %v3478
        %v3496 = vcombine.high %v3462, %v3478
        %v3498 = vunpack.c.l.s4 1934713408
        %v3499 = vunpack.c.0.s8 %v3498
        %v3500 = vlaneseq
        %v3501 = vshrl.u32 %v3500, 7
        %v3502 = vsub.s32 %v3499, %v3501
        %v3503 = vrot.slane %v3495, %v3502
        %v3505 = vunpack.c.l.s4 1934713408
        %v3506 = vunpack.c.0.s8 %v3505
        %v3507 = vlaneseq
        %v3508 = vshrl.u32 %v3507, 7
        %v3509 = vsub.s32 %v3506, %v3508
        %v3510 = vrot.slane %v3496, %v3509
        %v3511 = vcombine.high %v3487, 0.0
        %v3512 = vcombine.high %v3494, 0.0
        %v3513 = vcombine.high %v3503, 0.0
        %v3514 = vcombine.high %v3510, 0.0
        %v3515 = vcombine.low %v3487, %v3494
        %v3517 = vunpack.c.l.s4 1983009808
        %v3518 = vunpack.c.0.s8 %v3517
        %v3519 = vlaneseq
        %v3520 = vshrl.u32 %v3519, 7
        %v3521 = vsub.s32 %v3518, %v3520
        %v3522 = vrot.slane %v3515, %v3521
        %v3523 = vcombine.low %v3511, %v3512
        %v3525 = vunpack.c.l.s4 1983009808
        %v3526 = vunpack.c.0.s8 %v3525
        %v3527 = vlaneseq
        %v3528 = vshrl.u32 %v3527, 7
        %v3529 = vsub.s32 %v3526, %v3528
        %v3530 = vrot.slane %v3523, %v3529
        %v3531 = vcombine.low %v3503, %v3510
        %v3533 = vunpack.c.l.s4 1983009808
        %v3534 = vunpack.c.0.s8 %v3533
        %v3535 = vlaneseq
        %v3536 = vshrl.u32 %v3535, 7
        %v3537 = vsub.s32 %v3534, %v3536
        %v3538 = vrot.slane %v3531, %v3537
        %v3539 = vcombine.low %v3513, %v3514
        %v3541 = vunpack.c.l.s4 1983009808
        %v3542 = vunpack.c.0.s8 %v3541
        %v3543 = vlaneseq
        %v3544 = vshrl.u32 %v3543, 7
        %v3545 = vsub.s32 %v3542, %v3544
        %v3546 = vrot.slane %v3539, %v3545
        %v3547 = vcombine.low %v3522, %v3530
        %v3548 = vcombine.high %v3522, %v3530
        %v3550 = vunpack.c.l.s4 1934713408
        %v3551 = vunpack.c.0.s8 %v3550
        %v3552 = vlaneseq
        %v3553 = vshrl.u32 %v3552, 7
        %v3554 = vsub.s32 %v3551, %v3553
        %v3555 = vrot.slane %v3547, %v3554
        %v3557 = vunpack.c.l.s4 1934713408
        %v3558 = vunpack.c.0.s8 %v3557
        %v3559 = vlaneseq
        %v3560 = vshrl.u32 %v3559, 7
        %v3561 = vsub.s32 %v3558, %v3560
        %v3562 = vrot.slane %v3548, %v3561
        %v3563 = vcombine.low %v3538, %v3546
        %v3564 = vcombine.high %v3538, %v3546
        %v3566 = vunpack.c.l.s4 1934713408
        %v3567 = vunpack.c.0.s8 %v3566
        %v3568 = vlaneseq
        %v3569 = vshrl.u32 %v3568, 7
        %v3570 = vsub.s32 %v3567, %v3569
        %v3571 = vrot.slane %v3563, %v3570
        %v3573 = vunpack.c.l.s4 1934713408
        %v3574 = vunpack.c.0.s8 %v3573
        %v3575 = vlaneseq
        %v3576 = vshrl.u32 %v3575, 7
        %v3577 = vsub.s32 %v3574, %v3576
        %v3578 = vrot.slane %v3564, %v3577
        %v3579 = vcombine.low %v3555, %v3571
        %v3580 = vcombine.high %v3555, %v3571
        %v3581 = vcombine.low %v3562, %v3578
        %v3582 = vcombine.high %v3562, %v3578
        %3584 = vrot.lane.b32.xlu0 %v3358, 120
        %v3585 = vpop.permute.xlu0 %3584
        %3587 = vrot.lane.b32.xlu0 %v3358, 112
        %v3588 = vpop.permute.xlu0 %3587
        %3590 = vrot.lane.b32.xlu0 %v3358, 104
        %v3591 = vpop.permute.xlu0 %3590
        %v3593 = vcombine.low %v3358, %v3588
        %v3594 = vcombine.high %v3358, %v3588
        %v3596 = vunpack.c.l.s4 1983009808
        %v3597 = vunpack.c.0.s8 %v3596
        %v3598 = vlaneseq
        %v3599 = vshrl.u32 %v3598, 7
        %v3600 = vsub.s32 %v3597, %v3599
        %v3601 = vrot.slane %v3593, %v3600
        %v3603 = vunpack.c.l.s4 1983009808
        %v3604 = vunpack.c.0.s8 %v3603
        %v3605 = vlaneseq
        %v3606 = vshrl.u32 %v3605, 7
        %v3607 = vsub.s32 %v3604, %v3606
        %v3608 = vrot.slane %v3594, %v3607
        %v3609 = vcombine.low %v3585, %v3591
        %v3610 = vcombine.high %v3585, %v3591
        %v3612 = vunpack.c.l.s4 1983009808
        %v3613 = vunpack.c.0.s8 %v3612
        %v3614 = vlaneseq
        %v3615 = vshrl.u32 %v3614, 7
        %v3616 = vsub.s32 %v3613, %v3615
        %v3617 = vrot.slane %v3609, %v3616
        %v3619 = vunpack.c.l.s4 1983009808
        %v3620 = vunpack.c.0.s8 %v3619
        %v3621 = vlaneseq
        %v3622 = vshrl.u32 %v3621, 7
        %v3623 = vsub.s32 %v3620, %v3622
        %v3624 = vrot.slane %v3610, %v3623
        %v3625 = vcombine.low %v3601, %v3617
        %v3626 = vcombine.high %v3601, %v3617
        %v3628 = vunpack.c.l.s4 1934713408
        %v3629 = vunpack.c.0.s8 %v3628
        %v3630 = vlaneseq
        %v3631 = vshrl.u32 %v3630, 7
        %v3632 = vsub.s32 %v3629, %v3631
        %v3633 = vrot.slane %v3625, %v3632
        %v3635 = vunpack.c.l.s4 1934713408
        %v3636 = vunpack.c.0.s8 %v3635
        %v3637 = vlaneseq
        %v3638 = vshrl.u32 %v3637, 7
        %v3639 = vsub.s32 %v3636, %v3638
        %v3640 = vrot.slane %v3626, %v3639
        %v3641 = vcombine.low %v3608, %v3624
        %v3642 = vcombine.high %v3608, %v3624
        %v3644 = vunpack.c.l.s4 1934713408
        %v3645 = vunpack.c.0.s8 %v3644
        %v3646 = vlaneseq
        %v3647 = vshrl.u32 %v3646, 7
        %v3648 = vsub.s32 %v3645, %v3647
        %v3649 = vrot.slane %v3641, %v3648
        %v3651 = vunpack.c.l.s4 1934713408
        %v3652 = vunpack.c.0.s8 %v3651
        %v3653 = vlaneseq
        %v3654 = vshrl.u32 %v3653, 7
        %v3655 = vsub.s32 %v3652, %v3654
        %v3656 = vrot.slane %v3642, %v3655
        %v3657 = vcombine.high %v3633, 0.0
        %v3658 = vcombine.high %v3640, 0.0
        %v3659 = vcombine.high %v3649, 0.0
        %v3660 = vcombine.high %v3656, 0.0
        %v3661 = vcombine.low %v3633, %v3640
        %v3663 = vunpack.c.l.s4 1983009808
        %v3664 = vunpack.c.0.s8 %v3663
        %v3665 = vlaneseq
        %v3666 = vshrl.u32 %v3665, 7
        %v3667 = vsub.s32 %v3664, %v3666
        %v3668 = vrot.slane %v3661, %v3667
        %v3669 = vcombine.low %v3657, %v3658
        %v3671 = vunpack.c.l.s4 1983009808
        %v3672 = vunpack.c.0.s8 %v3671
        %v3673 = vlaneseq
        %v3674 = vshrl.u32 %v3673, 7
        %v3675 = vsub.s32 %v3672, %v3674
        %v3676 = vrot.slane %v3669, %v3675
        %v3677 = vcombine.low %v3649, %v3656
        %v3679 = vunpack.c.l.s4 1983009808
        %v3680 = vunpack.c.0.s8 %v3679
        %v3681 = vlaneseq
        %v3682 = vshrl.u32 %v3681, 7
        %v3683 = vsub.s32 %v3680, %v3682
        %v3684 = vrot.slane %v3677, %v3683
        %v3685 = vcombine.low %v3659, %v3660
        %v3687 = vunpack.c.l.s4 1983009808
        %v3688 = vunpack.c.0.s8 %v3687
        %v3689 = vlaneseq
        %v3690 = vshrl.u32 %v3689, 7
        %v3691 = vsub.s32 %v3688, %v3690
        %v3692 = vrot.slane %v3685, %v3691
        %v3693 = vcombine.low %v3668, %v3676
        %v3694 = vcombine.high %v3668, %v3676
        %v3696 = vunpack.c.l.s4 1934713408
        %v3697 = vunpack.c.0.s8 %v3696
        %v3698 = vlaneseq
        %v3699 = vshrl.u32 %v3698, 7
        %v3700 = vsub.s32 %v3697, %v3699
        %v3701 = vrot.slane %v3693, %v3700
        %v3703 = vunpack.c.l.s4 1934713408
        %v3704 = vunpack.c.0.s8 %v3703
        %v3705 = vlaneseq
        %v3706 = vshrl.u32 %v3705, 7
        %v3707 = vsub.s32 %v3704, %v3706
        %v3708 = vrot.slane %v3694, %v3707
        %v3709 = vcombine.low %v3684, %v3692
        %v3710 = vcombine.high %v3684, %v3692
        %v3712 = vunpack.c.l.s4 1934713408
        %v3713 = vunpack.c.0.s8 %v3712
        %v3714 = vlaneseq
        %v3715 = vshrl.u32 %v3714, 7
        %v3716 = vsub.s32 %v3713, %v3715
        %v3717 = vrot.slane %v3709, %v3716
        %v3719 = vunpack.c.l.s4 1934713408
        %v3720 = vunpack.c.0.s8 %v3719
        %v3721 = vlaneseq
        %v3722 = vshrl.u32 %v3721, 7
        %v3723 = vsub.s32 %v3720, %v3722
        %v3724 = vrot.slane %v3710, %v3723
        %v3725 = vcombine.low %v3701, %v3717
        %v3726 = vcombine.high %v3701, %v3717
        %v3727 = vcombine.low %v3708, %v3724
        %v3728 = vcombine.high %v3708, %v3724
        %3730 = vrot.lane.b32.xlu0 %v3434, 120
        %v3731 = vpop.permute.xlu0 %3730
        %3733 = vrot.lane.b32.xlu0 %v3434, 112
        %v3734 = vpop.permute.xlu0 %3733
        %3736 = vrot.lane.b32.xlu0 %v3434, 104
        %v3737 = vpop.permute.xlu0 %3736
        %v3739 = vcombine.low %v3434, %v3734
        %v3740 = vcombine.high %v3434, %v3734
        %v3742 = vunpack.c.l.s4 1983009808
        %v3743 = vunpack.c.0.s8 %v3742
        %v3744 = vlaneseq
        %v3745 = vshrl.u32 %v3744, 7
        %v3746 = vsub.s32 %v3743, %v3745
        %v3747 = vrot.slane %v3739, %v3746
        %v3749 = vunpack.c.l.s4 1983009808
        %v3750 = vunpack.c.0.s8 %v3749
        %v3751 = vlaneseq
        %v3752 = vshrl.u32 %v3751, 7
        %v3753 = vsub.s32 %v3750, %v3752
        %v3754 = vrot.slane %v3740, %v3753
        %v3755 = vcombine.low %v3731, %v3737
        %v3756 = vcombine.high %v3731, %v3737
        %v3758 = vunpack.c.l.s4 1983009808
        %v3759 = vunpack.c.0.s8 %v3758
        %v3760 = vlaneseq
        %v3761 = vshrl.u32 %v3760, 7
        %v3762 = vsub.s32 %v3759, %v3761
        %v3763 = vrot.slane %v3755, %v3762
        %v3765 = vunpack.c.l.s4 1983009808
        %v3766 = vunpack.c.0.s8 %v3765
        %v3767 = vlaneseq
        %v3768 = vshrl.u32 %v3767, 7
        %v3769 = vsub.s32 %v3766, %v3768
        %v3770 = vrot.slane %v3756, %v3769
        %v3771 = vcombine.low %v3747, %v3763
        %v3772 = vcombine.high %v3747, %v3763
        %v3774 = vunpack.c.l.s4 1934713408
        %v3775 = vunpack.c.0.s8 %v3774
        %v3776 = vlaneseq
        %v3777 = vshrl.u32 %v3776, 7
        %v3778 = vsub.s32 %v3775, %v3777
        %v3779 = vrot.slane %v3771, %v3778
        %v3781 = vunpack.c.l.s4 1934713408
        %v3782 = vunpack.c.0.s8 %v3781
        %v3783 = vlaneseq
        %v3784 = vshrl.u32 %v3783, 7
        %v3785 = vsub.s32 %v3782, %v3784
        %v3786 = vrot.slane %v3772, %v3785
        %v3787 = vcombine.low %v3754, %v3770
        %v3788 = vcombine.high %v3754, %v3770
        %v3790 = vunpack.c.l.s4 1934713408
        %v3791 = vunpack.c.0.s8 %v3790
        %v3792 = vlaneseq
        %v3793 = vshrl.u32 %v3792, 7
        %v3794 = vsub.s32 %v3791, %v3793
        %v3795 = vrot.slane %v3787, %v3794
        %v3797 = vunpack.c.l.s4 1934713408
        %v3798 = vunpack.c.0.s8 %v3797
        %v3799 = vlaneseq
        %v3800 = vshrl.u32 %v3799, 7
        %v3801 = vsub.s32 %v3798, %v3800
        %v3802 = vrot.slane %v3788, %v3801
        %v3803 = vcombine.high %v3779, 0.0
        %v3804 = vcombine.high %v3786, 0.0
        %v3805 = vcombine.high %v3795, 0.0
        %v3806 = vcombine.high %v3802, 0.0
        %v3807 = vcombine.low %v3779, %v3786
        %v3809 = vunpack.c.l.s4 1983009808
        %v3810 = vunpack.c.0.s8 %v3809
        %v3811 = vlaneseq
        %v3812 = vshrl.u32 %v3811, 7
        %v3813 = vsub.s32 %v3810, %v3812
        %v3814 = vrot.slane %v3807, %v3813
        %v3815 = vcombine.low %v3803, %v3804
        %v3817 = vunpack.c.l.s4 1983009808
        %v3818 = vunpack.c.0.s8 %v3817
        %v3819 = vlaneseq
        %v3820 = vshrl.u32 %v3819, 7
        %v3821 = vsub.s32 %v3818, %v3820
        %v3822 = vrot.slane %v3815, %v3821
        %v3823 = vcombine.low %v3795, %v3802
        %v3825 = vunpack.c.l.s4 1983009808
        %v3826 = vunpack.c.0.s8 %v3825
        %v3827 = vlaneseq
        %v3828 = vshrl.u32 %v3827, 7
        %v3829 = vsub.s32 %v3826, %v3828
        %v3830 = vrot.slane %v3823, %v3829
        %v3831 = vcombine.low %v3805, %v3806
        %v3833 = vunpack.c.l.s4 1983009808
        %v3834 = vunpack.c.0.s8 %v3833
        %v3835 = vlaneseq
        %v3836 = vshrl.u32 %v3835, 7
        %v3837 = vsub.s32 %v3834, %v3836
        %v3838 = vrot.slane %v3831, %v3837
        %v3839 = vcombine.low %v3814, %v3822
        %v3840 = vcombine.high %v3814, %v3822
        %v3842 = vunpack.c.l.s4 1934713408
        %v3843 = vunpack.c.0.s8 %v3842
        %v3844 = vlaneseq
        %v3845 = vshrl.u32 %v3844, 7
        %v3846 = vsub.s32 %v3843, %v3845
        %v3847 = vrot.slane %v3839, %v3846
        %v3849 = vunpack.c.l.s4 1934713408
        %v3850 = vunpack.c.0.s8 %v3849
        %v3851 = vlaneseq
        %v3852 = vshrl.u32 %v3851, 7
        %v3853 = vsub.s32 %v3850, %v3852
        %v3854 = vrot.slane %v3840, %v3853
        %v3855 = vcombine.low %v3830, %v3838
        %v3856 = vcombine.high %v3830, %v3838
        %v3858 = vunpack.c.l.s4 1934713408
        %v3859 = vunpack.c.0.s8 %v3858
        %v3860 = vlaneseq
        %v3861 = vshrl.u32 %v3860, 7
        %v3862 = vsub.s32 %v3859, %v3861
        %v3863 = vrot.slane %v3855, %v3862
        %v3865 = vunpack.c.l.s4 1934713408
        %v3866 = vunpack.c.0.s8 %v3865
        %v3867 = vlaneseq
        %v3868 = vshrl.u32 %v3867, 7
        %v3869 = vsub.s32 %v3866, %v3868
        %v3870 = vrot.slane %v3856, %v3869
        %v3871 = vcombine.low %v3847, %v3863
        %v3872 = vcombine.high %v3847, %v3863
        %v3873 = vcombine.low %v3854, %v3870
        %v3874 = vcombine.high %v3854, %v3870
        %v3876 = vlaneseq
        %v3877 = vshrl.u32 %v3876, 7
        %v3878 = vsub.s32 0, %v3877
        %v3879 = vrot.slane %v3182, %v3878
        %v3882 = vsel %vm2278, %v3579, 0
        %v3885 = vsel %vm2278, %v3725, 0
        %3887 = vmatprep.subr.mxu0 0.0
        %3888 = vmatpush1.xpose.msra.mxu0 %v3885
        %3889 = vmatprep.subr.mxu0 0.0
        %3890 = vmatpush1.xpose.msra.mxu0 0.0
        %3891 = vmatprep.subr.mxu0 0.0
        %3892 = vmatpush1.xpose.msra.mxu0 0.0
        %3893 = vmatprep.subr.mxu0 0.0
        %3894 = vmatpush1.xpose.msra.mxu0 0.0
        %3895 = vmatprep.subr.mxu0 0.0
        %3896 = vmatpush1.xpose.msra.mxu0 0.0
        %3897 = vmatprep.subr.mxu0 0.0
        %3898 = vmatpush1.xpose.msra.mxu0 0.0
        %3899 = vmatprep.subr.mxu0 0.0
        %3900 = vmatpush1.xpose.msra.mxu0 0.0
        %3901 = vmatprep.subr.mxu0 0.0
        %3902 = vmatpush1.xpose.msra.mxu0 0.0
        %3903 = vmatprep.subr.mxu0 0.0
        %3904 = vmatpush1.xpose.msra.mxu0 0.0
        %3905 = vmatprep.subr.mxu0 0.0
        %3906 = vmatpush1.xpose.msra.mxu0 0.0
        %3907 = vmatprep.subr.mxu0 0.0
        %3908 = vmatpush1.xpose.msra.mxu0 0.0
        %3909 = vmatprep.subr.mxu0 0.0
        %3910 = vmatpush1.xpose.msra.mxu0 0.0
        %3911 = vmatprep.subr.mxu0 0.0
        %3912 = vmatpush1.xpose.msra.mxu0 0.0
        %3913 = vmatprep.subr.mxu0 0.0
        %3914 = vmatpush1.xpose.msra.mxu0 0.0
        %3915 = vmatprep.subr.mxu0 0.0
        %3916 = vmatpush1.xpose.msra.mxu0 0.0
        %3917 = vmatprep.subr.mxu0 0.0
        %3918 = vmatpush1.xpose.msra.mxu0 0.0
        %3919 = vmatprep.subr.mxu0 0.0
        %3920 = vmatpush1.xpose.msra.mxu0 0.0
        %3921 = vmatprep.subr.mxu0 0.0
        %3922 = vmatpush1.xpose.msra.mxu0 0.0
        %3923 = vmatprep.subr.mxu0 0.0
        %3924 = vmatpush1.xpose.msra.mxu0 0.0
        %3925 = vmatprep.subr.mxu0 0.0
        %3926 = vmatpush1.xpose.msra.mxu0 0.0
        %3927 = vmatprep.subr.mxu0 0.0
        %3928 = vmatpush1.xpose.msra.mxu0 0.0
        %3929 = vmatprep.subr.mxu0 0.0
        %3930 = vmatpush1.xpose.msra.mxu0 0.0
        %3931 = vmatprep.subr.mxu0 0.0
        %3932 = vmatpush1.xpose.msra.mxu0 0.0
        %3933 = vmatprep.subr.mxu0 0.0
        %3934 = vmatpush1.xpose.msra.mxu0 0.0
        %3935 = vmatprep.subr.mxu0 0.0
        %3936 = vmatpush1.xpose.msra.mxu0 0.0
        %3937 = vmatprep.subr.mxu0 0.0
        %3938 = vmatpush1.xpose.msra.mxu0 0.0
        %3939 = vmatprep.subr.mxu0 0.0
        %3940 = vmatpush1.xpose.msra.mxu0 0.0
        %3941 = vmatprep.subr.mxu0 0.0
        %3942 = vmatpush1.xpose.msra.mxu0 0.0
        %3943 = vmatprep.subr.mxu0 0.0
        %3944 = vmatpush1.xpose.msra.mxu0 0.0
        %3945 = vmatprep.subr.mxu0 0.0
        %3946 = vmatpush1.xpose.msra.mxu0 0.0
        %3947 = vmatprep.subr.mxu0 0.0
        %3948 = vmatpush1.xpose.msra.mxu0 0.0
        %3949 = vmatprep.subr.mxu0 0.0
        %3950 = vmatpush1.xpose.msra.mxu0 0.0
        %3951 = vmatprep.mubr.f32.mxu0 0.0
        %3952 = vmatmul.mubr.f32.gmra.mrb[0].mxu0 %v3882
        %v3953 = vpop.f32.mrb[0].mxu0
        %v3954 = vadd.f32 %v3879, %v3953
        %v3955 = vpop.f32.mrb[0].mxu0
        %3956 = vdwg.mxu0
        %v3958 = vsel %vm2278, %v3580, 0
        %v3961 = vsel %vm2278, %v3726, 0
        %3963 = vmatprep.subr.mxu0 0.0
        %3964 = vmatpush1.xpose.msra.mxu0 %v3961
        %3965 = vmatprep.subr.mxu0 0.0
        %3966 = vmatpush1.xpose.msra.mxu0 0.0
        %3967 = vmatprep.subr.mxu0 0.0
        %3968 = vmatpush1.xpose.msra.mxu0 0.0
        %3969 = vmatprep.subr.mxu0 0.0
        %3970 = vmatpush1.xpose.msra.mxu0 0.0
        %3971 = vmatprep.subr.mxu0 0.0
        %3972 = vmatpush1.xpose.msra.mxu0 0.0
        %3973 = vmatprep.subr.mxu0 0.0
        %3974 = vmatpush1.xpose.msra.mxu0 0.0
        %3975 = vmatprep.subr.mxu0 0.0
        %3976 = vmatpush1.xpose.msra.mxu0 0.0
        %3977 = vmatprep.subr.mxu0 0.0
        %3978 = vmatpush1.xpose.msra.mxu0 0.0
        %3979 = vmatprep.subr.mxu0 0.0
        %3980 = vmatpush1.xpose.msra.mxu0 0.0
        %3981 = vmatprep.subr.mxu0 0.0
        %3982 = vmatpush1.xpose.msra.mxu0 0.0
        %3983 = vmatprep.subr.mxu0 0.0
        %3984 = vmatpush1.xpose.msra.mxu0 0.0
        %3985 = vmatprep.subr.mxu0 0.0
        %3986 = vmatpush1.xpose.msra.mxu0 0.0
        %3987 = vmatprep.subr.mxu0 0.0
        %3988 = vmatpush1.xpose.msra.mxu0 0.0
        %3989 = vmatprep.subr.mxu0 0.0
        %3990 = vmatpush1.xpose.msra.mxu0 0.0
        %3991 = vmatprep.subr.mxu0 0.0
        %3992 = vmatpush1.xpose.msra.mxu0 0.0
        %3993 = vmatprep.subr.mxu0 0.0
        %3994 = vmatpush1.xpose.msra.mxu0 0.0
        %3995 = vmatprep.subr.mxu0 0.0
        %3996 = vmatpush1.xpose.msra.mxu0 0.0
        %3997 = vmatprep.subr.mxu0 0.0
        %3998 = vmatpush1.xpose.msra.mxu0 0.0
        %3999 = vmatprep.subr.mxu0 0.0
        %4000 = vmatpush1.xpose.msra.mxu0 0.0
        %4001 = vmatprep.subr.mxu0 0.0
        %4002 = vmatpush1.xpose.msra.mxu0 0.0
        %4003 = vmatprep.subr.mxu0 0.0
        %4004 = vmatpush1.xpose.msra.mxu0 0.0
        %4005 = vmatprep.subr.mxu0 0.0
        %4006 = vmatpush1.xpose.msra.mxu0 0.0
        %4007 = vmatprep.subr.mxu0 0.0
        %4008 = vmatpush1.xpose.msra.mxu0 0.0
        %4009 = vmatprep.subr.mxu0 0.0
        %4010 = vmatpush1.xpose.msra.mxu0 0.0
        %4011 = vmatprep.subr.mxu0 0.0
        %4012 = vmatpush1.xpose.msra.mxu0 0.0
        %4013 = vmatprep.subr.mxu0 0.0
        %4014 = vmatpush1.xpose.msra.mxu0 0.0
        %4015 = vmatprep.subr.mxu0 0.0
        %4016 = vmatpush1.xpose.msra.mxu0 0.0
        %4017 = vmatprep.subr.mxu0 0.0
        %4018 = vmatpush1.xpose.msra.mxu0 0.0
        %4019 = vmatprep.subr.mxu0 0.0
        %4020 = vmatpush1.xpose.msra.mxu0 0.0
        %4021 = vmatprep.subr.mxu0 0.0
        %4022 = vmatpush1.xpose.msra.mxu0 0.0
        %4023 = vmatprep.subr.mxu0 0.0
        %4024 = vmatpush1.xpose.msra.mxu0 0.0
        %4025 = vmatprep.subr.mxu0 0.0
        %4026 = vmatpush1.xpose.msra.mxu0 0.0
        %4027 = vmatprep.mubr.f32.mxu0 0.0
        %4028 = vmatmul.mubr.f32.gmra.mrb[0].mxu0 %v3958
        %v4029 = vpop.f32.mrb[0].mxu0
        %v4030 = vadd.f32 %v3879, %v4029
        %v4031 = vpop.f32.mrb[0].mxu0
        %4032 = vdwg.mxu0
        %v4034 = vsel %vm2278, %v3581, 0
        %v4037 = vsel %vm2278, %v3727, 0
        %4039 = vmatprep.subr.mxu0 0.0
        %4040 = vmatpush1.xpose.msra.mxu0 %v4037
        %4041 = vmatprep.subr.mxu0 0.0
        %4042 = vmatpush1.xpose.msra.mxu0 0.0
        %4043 = vmatprep.subr.mxu0 0.0
        %4044 = vmatpush1.xpose.msra.mxu0 0.0
        %4045 = vmatprep.subr.mxu0 0.0
        %4046 = vmatpush1.xpose.msra.mxu0 0.0
        %4047 = vmatprep.subr.mxu0 0.0
        %4048 = vmatpush1.xpose.msra.mxu0 0.0
        %4049 = vmatprep.subr.mxu0 0.0
        %4050 = vmatpush1.xpose.msra.mxu0 0.0
        %4051 = vmatprep.subr.mxu0 0.0
        %4052 = vmatpush1.xpose.msra.mxu0 0.0
        %4053 = vmatprep.subr.mxu0 0.0
        %4054 = vmatpush1.xpose.msra.mxu0 0.0
        %4055 = vmatprep.subr.mxu0 0.0
        %4056 = vmatpush1.xpose.msra.mxu0 0.0
        %4057 = vmatprep.subr.mxu0 0.0
        %4058 = vmatpush1.xpose.msra.mxu0 0.0
        %4059 = vmatprep.subr.mxu0 0.0
        %4060 = vmatpush1.xpose.msra.mxu0 0.0
        %4061 = vmatprep.subr.mxu0 0.0
        %4062 = vmatpush1.xpose.msra.mxu0 0.0
        %4063 = vmatprep.subr.mxu0 0.0
        %4064 = vmatpush1.xpose.msra.mxu0 0.0
        %4065 = vmatprep.subr.mxu0 0.0
        %4066 = vmatpush1.xpose.msra.mxu0 0.0
        %4067 = vmatprep.subr.mxu0 0.0
        %4068 = vmatpush1.xpose.msra.mxu0 0.0
        %4069 = vmatprep.subr.mxu0 0.0
        %4070 = vmatpush1.xpose.msra.mxu0 0.0
        %4071 = vmatprep.subr.mxu0 0.0
        %4072 = vmatpush1.xpose.msra.mxu0 0.0
        %4073 = vmatprep.subr.mxu0 0.0
        %4074 = vmatpush1.xpose.msra.mxu0 0.0
        %4075 = vmatprep.subr.mxu0 0.0
        %4076 = vmatpush1.xpose.msra.mxu0 0.0
        %4077 = vmatprep.subr.mxu0 0.0
        %4078 = vmatpush1.xpose.msra.mxu0 0.0
        %4079 = vmatprep.subr.mxu0 0.0
        %4080 = vmatpush1.xpose.msra.mxu0 0.0
        %4081 = vmatprep.subr.mxu0 0.0
        %4082 = vmatpush1.xpose.msra.mxu0 0.0
        %4083 = vmatprep.subr.mxu0 0.0
        %4084 = vmatpush1.xpose.msra.mxu0 0.0
        %4085 = vmatprep.subr.mxu0 0.0
        %4086 = vmatpush1.xpose.msra.mxu0 0.0
        %4087 = vmatprep.subr.mxu0 0.0
        %4088 = vmatpush1.xpose.msra.mxu0 0.0
        %4089 = vmatprep.subr.mxu0 0.0
        %4090 = vmatpush1.xpose.msra.mxu0 0.0
        %4091 = vmatprep.subr.mxu0 0.0
        %4092 = vmatpush1.xpose.msra.mxu0 0.0
        %4093 = vmatprep.subr.mxu0 0.0
        %4094 = vmatpush1.xpose.msra.mxu0 0.0
        %4095 = vmatprep.subr.mxu0 0.0
        %4096 = vmatpush1.xpose.msra.mxu0 0.0
        %4097 = vmatprep.subr.mxu0 0.0
        %4098 = vmatpush1.xpose.msra.mxu0 0.0
        %4099 = vmatprep.subr.mxu0 0.0
        %4100 = vmatpush1.xpose.msra.mxu0 0.0
        %4101 = vmatprep.subr.mxu0 0.0
        %4102 = vmatpush1.xpose.msra.mxu0 0.0
        %4103 = vmatprep.mubr.f32.mxu0 0.0
        %4104 = vmatmul.mubr.f32.gmra.mrb[0].mxu0 %v4034
        %v4105 = vpop.f32.mrb[0].mxu0
        %v4106 = vadd.f32 %v3879, %v4105
        %v4107 = vpop.f32.mrb[0].mxu0
        %4108 = vdwg.mxu0
        %v4110 = vsel %vm2278, %v3582, 0
        %v4113 = vsel %vm2278, %v3728, 0
        %4115 = vmatprep.subr.mxu0 0.0
        %4116 = vmatpush1.xpose.msra.mxu0 %v4113
        %4117 = vmatprep.subr.mxu0 0.0
        %4118 = vmatpush1.xpose.msra.mxu0 0.0
        %4119 = vmatprep.subr.mxu0 0.0
        %4120 = vmatpush1.xpose.msra.mxu0 0.0
        %4121 = vmatprep.subr.mxu0 0.0
        %4122 = vmatpush1.xpose.msra.mxu0 0.0
        %4123 = vmatprep.subr.mxu0 0.0
        %4124 = vmatpush1.xpose.msra.mxu0 0.0
        %4125 = vmatprep.subr.mxu0 0.0
        %4126 = vmatpush1.xpose.msra.mxu0 0.0
        %4127 = vmatprep.subr.mxu0 0.0
        %4128 = vmatpush1.xpose.msra.mxu0 0.0
        %4129 = vmatprep.subr.mxu0 0.0
        %4130 = vmatpush1.xpose.msra.mxu0 0.0
        %4131 = vmatprep.subr.mxu0 0.0
        %4132 = vmatpush1.xpose.msra.mxu0 0.0
        %4133 = vmatprep.subr.mxu0 0.0
        %4134 = vmatpush1.xpose.msra.mxu0 0.0
        %4135 = vmatprep.subr.mxu0 0.0
        %4136 = vmatpush1.xpose.msra.mxu0 0.0
        %4137 = vmatprep.subr.mxu0 0.0
        %4138 = vmatpush1.xpose.msra.mxu0 0.0
        %4139 = vmatprep.subr.mxu0 0.0
        %4140 = vmatpush1.xpose.msra.mxu0 0.0
        %4141 = vmatprep.subr.mxu0 0.0
        %4142 = vmatpush1.xpose.msra.mxu0 0.0
        %4143 = vmatprep.subr.mxu0 0.0
        %4144 = vmatpush1.xpose.msra.mxu0 0.0
        %4145 = vmatprep.subr.mxu0 0.0
        %4146 = vmatpush1.xpose.msra.mxu0 0.0
        %4147 = vmatprep.subr.mxu0 0.0
        %4148 = vmatpush1.xpose.msra.mxu0 0.0
        %4149 = vmatprep.subr.mxu0 0.0
        %4150 = vmatpush1.xpose.msra.mxu0 0.0
        %4151 = vmatprep.subr.mxu0 0.0
        %4152 = vmatpush1.xpose.msra.mxu0 0.0
        %4153 = vmatprep.subr.mxu0 0.0
        %4154 = vmatpush1.xpose.msra.mxu0 0.0
        %4155 = vmatprep.subr.mxu0 0.0
        %4156 = vmatpush1.xpose.msra.mxu0 0.0
        %4157 = vmatprep.subr.mxu0 0.0
        %4158 = vmatpush1.xpose.msra.mxu0 0.0
        %4159 = vmatprep.subr.mxu0 0.0
        %4160 = vmatpush1.xpose.msra.mxu0 0.0
        %4161 = vmatprep.subr.mxu0 0.0
        %4162 = vmatpush1.xpose.msra.mxu0 0.0
        %4163 = vmatprep.subr.mxu0 0.0
        %4164 = vmatpush1.xpose.msra.mxu0 0.0
        %4165 = vmatprep.subr.mxu0 0.0
        %4166 = vmatpush1.xpose.msra.mxu0 0.0
        %4167 = vmatprep.subr.mxu0 0.0
        %4168 = vmatpush1.xpose.msra.mxu0 0.0
        %4169 = vmatprep.subr.mxu0 0.0
        %4170 = vmatpush1.xpose.msra.mxu0 0.0
        %4171 = vmatprep.subr.mxu0 0.0
        %4172 = vmatpush1.xpose.msra.mxu0 0.0
        %4173 = vmatprep.subr.mxu0 0.0
        %4174 = vmatpush1.xpose.msra.mxu0 0.0
        %4175 = vmatprep.subr.mxu0 0.0
        %4176 = vmatpush1.xpose.msra.mxu0 0.0
        %4177 = vmatprep.subr.mxu0 0.0
        %4178 = vmatpush1.xpose.msra.mxu0 0.0
        %4179 = vmatprep.mubr.f32.mxu0 0.0
        %4180 = vmatmul.mubr.f32.gmra.mrb[0].mxu0 %v4110
        %v4181 = vpop.f32.mrb[0].mxu0
        %v4182 = vadd.f32 %v3879, %v4181
        %v4183 = vpop.f32.mrb[0].mxu0
        %4184 = vdwg.mxu0
        %v4185 = vsel %vm2278, %v3954, -inf
        %4186 = vmax.xlane.f32.xlu0 %v4185
        %v4187 = vpop.xlane.xlu0 %4186
        %v4188 = vsel %vm2278, %v4030, -inf
        %4189 = vmax.xlane.f32.xlu0 %v4188
        %v4190 = vpop.xlane.xlu0 %4189
        %v4191 = vsel %vm2278, %v4106, -inf
        %4192 = vmax.xlane.f32.xlu0 %v4191
        %v4193 = vpop.xlane.xlu0 %4192
        %v4194 = vsel %vm2278, %v4182, -inf
        %4195 = vmax.xlane.f32.xlu0 %v4194
        %v4196 = vpop.xlane.xlu0 %4195
        %v4197 = vsub.f32 %v3954, %v4187
        %v4198 = vsub.f32 %v4030, %v4190
        %v4199 = vsub.f32 %v4106, %v4193
        %v4200 = vsub.f32 %v4182, %v4196
        %v4201 = vmul.f32 %v4197, 1.442695
        %v4202 = vpow.pop %v4201
        %v4203 = vmul.f32 %v4198, 1.442695
        %v4204 = vpow.pop %v4203
        %v4205 = vmul.f32 %v4199, 1.442695
        %v4206 = vpow.pop %v4205
        %v4207 = vmul.f32 %v4200, 1.442695
        %v4208 = vpow.pop %v4207
        %v4209 = vsel %vm2278, %v4202, 0.0
        %4210 = vadd.xlane.f32.xlu0 %v4209
        %v4211 = vpop.xlane.xlu0 %4210
        %v4212 = vsel %vm2278, %v4204, 0.0
        %4213 = vadd.xlane.f32.xlu0 %v4212
        %v4214 = vpop.xlane.xlu0 %4213
        %v4215 = vsel %vm2278, %v4206, 0.0
        %4216 = vadd.xlane.f32.xlu0 %v4215
        %v4217 = vpop.xlane.xlu0 %4216
        %v4218 = vsel %vm2278, %v4208, 0.0
        %4219 = vadd.xlane.f32.xlu0 %v4218
        %v4220 = vpop.xlane.xlu0 %4219
        %v4221 = vrcp.pop %v4211
        %v4222 = vrcp.pop %v4214
        %v4223 = vrcp.pop %v4217
        %v4224 = vrcp.pop %v4220
        %v4225 = vmul.f32 %v4202, %v4221
        %v4226 = vmul.f32 %v4204, %v4222
        %v4227 = vmul.f32 %v4206, %v4223
        %v4228 = vmul.f32 %v4208, %v4224
        %v4230 = vsel %vm2278, %v4225, 0
        %4232 = vmatprep.subr.mxu0 0.0
        %4233 = vmatpush1.msra.mxu0 %v3871
        %4234 = vmatprep.subr.mxu0 0.0
        %4235 = vmatpush1.msra.mxu0 0.0
        %4236 = vmatprep.subr.mxu0 0.0
        %4237 = vmatpush1.msra.mxu0 0.0
        %4238 = vmatprep.subr.mxu0 0.0
        %4239 = vmatpush1.msra.mxu0 0.0
        %4240 = vmatprep.subr.mxu0 0.0
        %4241 = vmatpush1.msra.mxu0 0.0
        %4242 = vmatprep.subr.mxu0 0.0
        %4243 = vmatpush1.msra.mxu0 0.0
        %4244 = vmatprep.subr.mxu0 0.0
        %4245 = vmatpush1.msra.mxu0 0.0
        %4246 = vmatprep.subr.mxu0 0.0
        %4247 = vmatpush1.msra.mxu0 0.0
        %4248 = vmatprep.subr.mxu0 0.0
        %4249 = vmatpush1.msra.mxu0 0.0
        %4250 = vmatprep.subr.mxu0 0.0
        %4251 = vmatpush1.msra.mxu0 0.0
        %4252 = vmatprep.subr.mxu0 0.0
        %4253 = vmatpush1.msra.mxu0 0.0
        %4254 = vmatprep.subr.mxu0 0.0
        %4255 = vmatpush1.msra.mxu0 0.0
        %4256 = vmatprep.subr.mxu0 0.0
        %4257 = vmatpush1.msra.mxu0 0.0
        %4258 = vmatprep.subr.mxu0 0.0
        %4259 = vmatpush1.msra.mxu0 0.0
        %4260 = vmatprep.subr.mxu0 0.0
        %4261 = vmatpush1.msra.mxu0 0.0
        %4262 = vmatprep.subr.mxu0 0.0
        %4263 = vmatpush1.msra.mxu0 0.0
        %4264 = vmatprep.subr.mxu0 0.0
        %4265 = vmatpush1.msra.mxu0 0.0
        %4266 = vmatprep.subr.mxu0 0.0
        %4267 = vmatpush1.msra.mxu0 0.0
        %4268 = vmatprep.subr.mxu0 0.0
        %4269 = vmatpush1.msra.mxu0 0.0
        %4270 = vmatprep.subr.mxu0 0.0
        %4271 = vmatpush1.msra.mxu0 0.0
        %4272 = vmatprep.subr.mxu0 0.0
        %4273 = vmatpush1.msra.mxu0 0.0
        %4274 = vmatprep.subr.mxu0 0.0
        %4275 = vmatpush1.msra.mxu0 0.0
        %4276 = vmatprep.subr.mxu0 0.0
        %4277 = vmatpush1.msra.mxu0 0.0
        %4278 = vmatprep.subr.mxu0 0.0
        %4279 = vmatpush1.msra.mxu0 0.0
        %4280 = vmatprep.subr.mxu0 0.0
        %4281 = vmatpush1.msra.mxu0 0.0
        %4282 = vmatprep.subr.mxu0 0.0
        %4283 = vmatpush1.msra.mxu0 0.0
        %4284 = vmatprep.subr.mxu0 0.0
        %4285 = vmatpush1.msra.mxu0 0.0
        %4286 = vmatprep.subr.mxu0 0.0
        %4287 = vmatpush1.msra.mxu0 0.0
        %4288 = vmatprep.subr.mxu0 0.0
        %4289 = vmatpush1.msra.mxu0 0.0
        %4290 = vmatprep.subr.mxu0 0.0
        %4291 = vmatpush1.msra.mxu0 0.0
        %4292 = vmatprep.subr.mxu0 0.0
        %4293 = vmatpush1.msra.mxu0 0.0
        %4294 = vmatprep.subr.mxu0 0.0
        %4295 = vmatpush1.msra.mxu0 0.0
        %4296 = vmatprep.mubr.f32.mxu0 0.0
        %4297 = vmatmul.mubr.f32.gmra.mrb[0].mxu0 %v4230
        %v4298 = vpop.f32.mrb[0].mxu0
        %v4299 = vadd.f32 0.0, %v4298
        %v4300 = vpop.f32.mrb[0].mxu0
        %4301 = vdwg.mxu0
        %v4303 = vsel %vm2278, %v4226, 0
        %4305 = vmatprep.subr.mxu0 0.0
        %4306 = vmatpush1.msra.mxu0 %v3872
        %4307 = vmatprep.subr.mxu0 0.0
        %4308 = vmatpush1.msra.mxu0 0.0
        %4309 = vmatprep.subr.mxu0 0.0
        %4310 = vmatpush1.msra.mxu0 0.0
        %4311 = vmatprep.subr.mxu0 0.0
        %4312 = vmatpush1.msra.mxu0 0.0
        %4313 = vmatprep.subr.mxu0 0.0
        %4314 = vmatpush1.msra.mxu0 0.0
        %4315 = vmatprep.subr.mxu0 0.0
        %4316 = vmatpush1.msra.mxu0 0.0
        %4317 = vmatprep.subr.mxu0 0.0
        %4318 = vmatpush1.msra.mxu0 0.0
        %4319 = vmatprep.subr.mxu0 0.0
        %4320 = vmatpush1.msra.mxu0 0.0
        %4321 = vmatprep.subr.mxu0 0.0
        %4322 = vmatpush1.msra.mxu0 0.0
        %4323 = vmatprep.subr.mxu0 0.0
        %4324 = vmatpush1.msra.mxu0 0.0
        %4325 = vmatprep.subr.mxu0 0.0
        %4326 = vmatpush1.msra.mxu0 0.0
        %4327 = vmatprep.subr.mxu0 0.0
        %4328 = vmatpush1.msra.mxu0 0.0
        %4329 = vmatprep.subr.mxu0 0.0
        %4330 = vmatpush1.msra.mxu0 0.0
        %4331 = vmatprep.subr.mxu0 0.0
        %4332 = vmatpush1.msra.mxu0 0.0
        %4333 = vmatprep.subr.mxu0 0.0
        %4334 = vmatpush1.msra.mxu0 0.0
        %4335 = vmatprep.subr.mxu0 0.0
        %4336 = vmatpush1.msra.mxu0 0.0
        %4337 = vmatprep.subr.mxu0 0.0
        %4338 = vmatpush1.msra.mxu0 0.0
        %4339 = vmatprep.subr.mxu0 0.0
        %4340 = vmatpush1.msra.mxu0 0.0
        %4341 = vmatprep.subr.mxu0 0.0
        %4342 = vmatpush1.msra.mxu0 0.0
        %4343 = vmatprep.subr.mxu0 0.0
        %4344 = vmatpush1.msra.mxu0 0.0
        %4345 = vmatprep.subr.mxu0 0.0
        %4346 = vmatpush1.msra.mxu0 0.0
        %4347 = vmatprep.subr.mxu0 0.0
        %4348 = vmatpush1.msra.mxu0 0.0
        %4349 = vmatprep.subr.mxu0 0.0
        %4350 = vmatpush1.msra.mxu0 0.0
        %4351 = vmatprep.subr.mxu0 0.0
        %4352 = vmatpush1.msra.mxu0 0.0
        %4353 = vmatprep.subr.mxu0 0.0
        %4354 = vmatpush1.msra.mxu0 0.0
        %4355 = vmatprep.subr.mxu0 0.0
        %4356 = vmatpush1.msra.mxu0 0.0
        %4357 = vmatprep.subr.mxu0 0.0
        %4358 = vmatpush1.msra.mxu0 0.0
        %4359 = vmatprep.subr.mxu0 0.0
        %4360 = vmatpush1.msra.mxu0 0.0
        %4361 = vmatprep.subr.mxu0 0.0
        %4362 = vmatpush1.msra.mxu0 0.0
        %4363 = vmatprep.subr.mxu0 0.0
        %4364 = vmatpush1.msra.mxu0 0.0
        %4365 = vmatprep.subr.mxu0 0.0
        %4366 = vmatpush1.msra.mxu0 0.0
        %4367 = vmatprep.subr.mxu0 0.0
        %4368 = vmatpush1.msra.mxu0 0.0
        %4369 = vmatprep.mubr.f32.mxu0 0.0
        %4370 = vmatmul.mubr.f32.gmra.mrb[0].mxu0 %v4303
        %v4371 = vpop.f32.mrb[0].mxu0
        %v4372 = vadd.f32 0.0, %v4371
        %v4373 = vpop.f32.mrb[0].mxu0
        %4374 = vdwg.mxu0
        %v4376 = vsel %vm2278, %v4227, 0
        %4378 = vmatprep.subr.mxu0 0.0
        %4379 = vmatpush1.msra.mxu0 %v3873
        %4380 = vmatprep.subr.mxu0 0.0
        %4381 = vmatpush1.msra.mxu0 0.0
        %4382 = vmatprep.subr.mxu0 0.0
        %4383 = vmatpush1.msra.mxu0 0.0
        %4384 = vmatprep.subr.mxu0 0.0
        %4385 = vmatpush1.msra.mxu0 0.0
        %4386 = vmatprep.subr.mxu0 0.0
        %4387 = vmatpush1.msra.mxu0 0.0
        %4388 = vmatprep.subr.mxu0 0.0
        %4389 = vmatpush1.msra.mxu0 0.0
        %4390 = vmatprep.subr.mxu0 0.0
        %4391 = vmatpush1.msra.mxu0 0.0
        %4392 = vmatprep.subr.mxu0 0.0
        %4393 = vmatpush1.msra.mxu0 0.0
        %4394 = vmatprep.subr.mxu0 0.0
        %4395 = vmatpush1.msra.mxu0 0.0
        %4396 = vmatprep.subr.mxu0 0.0
        %4397 = vmatpush1.msra.mxu0 0.0
        %4398 = vmatprep.subr.mxu0 0.0
        %4399 = vmatpush1.msra.mxu0 0.0
        %4400 = vmatprep.subr.mxu0 0.0
        %4401 = vmatpush1.msra.mxu0 0.0
        %4402 = vmatprep.subr.mxu0 0.0
        %4403 = vmatpush1.msra.mxu0 0.0
        %4404 = vmatprep.subr.mxu0 0.0
        %4405 = vmatpush1.msra.mxu0 0.0
        %4406 = vmatprep.subr.mxu0 0.0
        %4407 = vmatpush1.msra.mxu0 0.0
        %4408 = vmatprep.subr.mxu0 0.0
        %4409 = vmatpush1.msra.mxu0 0.0
        %4410 = vmatprep.subr.mxu0 0.0
        %4411 = vmatpush1.msra.mxu0 0.0
        %4412 = vmatprep.subr.mxu0 0.0
        %4413 = vmatpush1.msra.mxu0 0.0
        %4414 = vmatprep.subr.mxu0 0.0
        %4415 = vmatpush1.msra.mxu0 0.0
        %4416 = vmatprep.subr.mxu0 0.0
        %4417 = vmatpush1.msra.mxu0 0.0
        %4418 = vmatprep.subr.mxu0 0.0
        %4419 = vmatpush1.msra.mxu0 0.0
        %4420 = vmatprep.subr.mxu0 0.0
        %4421 = vmatpush1.msra.mxu0 0.0
        %4422 = vmatprep.subr.mxu0 0.0
        %4423 = vmatpush1.msra.mxu0 0.0
        %4424 = vmatprep.subr.mxu0 0.0
        %4425 = vmatpush1.msra.mxu0 0.0
        %4426 = vmatprep.subr.mxu0 0.0
        %4427 = vmatpush1.msra.mxu0 0.0
        %4428 = vmatprep.subr.mxu0 0.0
        %4429 = vmatpush1.msra.mxu0 0.0
        %4430 = vmatprep.subr.mxu0 0.0
        %4431 = vmatpush1.msra.mxu0 0.0
        %4432 = vmatprep.subr.mxu0 0.0
        %4433 = vmatpush1.msra.mxu0 0.0
        %4434 = vmatprep.subr.mxu0 0.0
        %4435 = vmatpush1.msra.mxu0 0.0
        %4436 = vmatprep.subr.mxu0 0.0
        %4437 = vmatpush1.msra.mxu0 0.0
        %4438 = vmatprep.subr.mxu0 0.0
        %4439 = vmatpush1.msra.mxu0 0.0
        %4440 = vmatprep.subr.mxu0 0.0
        %4441 = vmatpush1.msra.mxu0 0.0
        %4442 = vmatprep.mubr.f32.mxu0 0.0
        %4443 = vmatmul.mubr.f32.gmra.mrb[0].mxu0 %v4376
        %v4444 = vpop.f32.mrb[0].mxu0
        %v4445 = vadd.f32 0.0, %v4444
        %v4446 = vpop.f32.mrb[0].mxu0
        %4447 = vdwg.mxu0
        %v4449 = vsel %vm2278, %v4228, 0
        %4451 = vmatprep.subr.mxu0 0.0
        %4452 = vmatpush1.msra.mxu0 %v3874
        %4453 = vmatprep.subr.mxu0 0.0
        %4454 = vmatpush1.msra.mxu0 0.0
        %4455 = vmatprep.subr.mxu0 0.0
        %4456 = vmatpush1.msra.mxu0 0.0
        %4457 = vmatprep.subr.mxu0 0.0
        %4458 = vmatpush1.msra.mxu0 0.0
        %4459 = vmatprep.subr.mxu0 0.0
        %4460 = vmatpush1.msra.mxu0 0.0
        %4461 = vmatprep.subr.mxu0 0.0
        %4462 = vmatpush1.msra.mxu0 0.0
        %4463 = vmatprep.subr.mxu0 0.0
        %4464 = vmatpush1.msra.mxu0 0.0
        %4465 = vmatprep.subr.mxu0 0.0
        %4466 = vmatpush1.msra.mxu0 0.0
        %4467 = vmatprep.subr.mxu0 0.0
        %4468 = vmatpush1.msra.mxu0 0.0
        %4469 = vmatprep.subr.mxu0 0.0
        %4470 = vmatpush1.msra.mxu0 0.0
        %4471 = vmatprep.subr.mxu0 0.0
        %4472 = vmatpush1.msra.mxu0 0.0
        %4473 = vmatprep.subr.mxu0 0.0
        %4474 = vmatpush1.msra.mxu0 0.0
        %4475 = vmatprep.subr.mxu0 0.0
        %4476 = vmatpush1.msra.mxu0 0.0
        %4477 = vmatprep.subr.mxu0 0.0
        %4478 = vmatpush1.msra.mxu0 0.0
        %4479 = vmatprep.subr.mxu0 0.0
        %4480 = vmatpush1.msra.mxu0 0.0
        %4481 = vmatprep.subr.mxu0 0.0
        %4482 = vmatpush1.msra.mxu0 0.0
        %4483 = vmatprep.subr.mxu0 0.0
        %4484 = vmatpush1.msra.mxu0 0.0
        %4485 = vmatprep.subr.mxu0 0.0
        %4486 = vmatpush1.msra.mxu0 0.0
        %4487 = vmatprep.subr.mxu0 0.0
        %4488 = vmatpush1.msra.mxu0 0.0
        %4489 = vmatprep.subr.mxu0 0.0
        %4490 = vmatpush1.msra.mxu0 0.0
        %4491 = vmatprep.subr.mxu0 0.0
        %4492 = vmatpush1.msra.mxu0 0.0
        %4493 = vmatprep.subr.mxu0 0.0
        %4494 = vmatpush1.msra.mxu0 0.0
        %4495 = vmatprep.subr.mxu0 0.0
        %4496 = vmatpush1.msra.mxu0 0.0
        %4497 = vmatprep.subr.mxu0 0.0
        %4498 = vmatpush1.msra.mxu0 0.0
        %4499 = vmatprep.subr.mxu0 0.0
        %4500 = vmatpush1.msra.mxu0 0.0
        %4501 = vmatprep.subr.mxu0 0.0
        %4502 = vmatpush1.msra.mxu0 0.0
        %4503 = vmatprep.subr.mxu0 0.0
        %4504 = vmatpush1.msra.mxu0 0.0
        %4505 = vmatprep.subr.mxu0 0.0
        %4506 = vmatpush1.msra.mxu0 0.0
        %4507 = vmatprep.subr.mxu0 0.0
        %4508 = vmatpush1.msra.mxu0 0.0
        %4509 = vmatprep.subr.mxu0 0.0
        %4510 = vmatpush1.msra.mxu0 0.0
        %4511 = vmatprep.subr.mxu0 0.0
        %4512 = vmatpush1.msra.mxu0 0.0
        %4513 = vmatprep.subr.mxu0 0.0
        %4514 = vmatpush1.msra.mxu0 0.0
        %4515 = vmatprep.mubr.f32.mxu0 0.0
        %4516 = vmatmul.mubr.f32.gmra.mrb[0].mxu0 %v4449
        %v4517 = vpop.f32.mrb[0].mxu0
        %v4518 = vadd.f32 0.0, %v4517
        %v4519 = vpop.f32.mrb[0].mxu0
        %4520 = vdwg.mxu0
        %v4521 = vcombine.low %v4299, %v4445
        %v4522 = vcombine.high %v4299, %v4445
        %v4524 = vunpack.c.l.s4 1983009808
        %v4525 = vunpack.c.0.s8 %v4524
        %v4526 = vlaneseq
        %v4527 = vshrl.u32 %v4526, 7
        %v4528 = vsub.s32 %v4525, %v4527
        %v4529 = vrot.slane %v4521, %v4528
        %v4531 = vunpack.c.l.s4 1983009808
        %v4532 = vunpack.c.0.s8 %v4531
        %v4533 = vlaneseq
        %v4534 = vshrl.u32 %v4533, 7
        %v4535 = vsub.s32 %v4532, %v4534
        %v4536 = vrot.slane %v4522, %v4535
        %v4537 = vcombine.low %v4372, %v4518
        %v4538 = vcombine.high %v4372, %v4518
        %v4540 = vunpack.c.l.s4 1983009808
        %v4541 = vunpack.c.0.s8 %v4540
        %v4542 = vlaneseq
        %v4543 = vshrl.u32 %v4542, 7
        %v4544 = vsub.s32 %v4541, %v4543
        %v4545 = vrot.slane %v4537, %v4544
        %v4547 = vunpack.c.l.s4 1983009808
        %v4548 = vunpack.c.0.s8 %v4547
        %v4549 = vlaneseq
        %v4550 = vshrl.u32 %v4549, 7
        %v4551 = vsub.s32 %v4548, %v4550
        %v4552 = vrot.slane %v4538, %v4551
        %v4553 = vcombine.low %v4529, %v4545
        %v4554 = vcombine.high %v4529, %v4545
        %v4556 = vunpack.c.l.s4 1934713408
        %v4557 = vunpack.c.0.s8 %v4556
        %v4558 = vlaneseq
        %v4559 = vshrl.u32 %v4558, 7
        %v4560 = vsub.s32 %v4557, %v4559
        %v4561 = vrot.slane %v4553, %v4560
        %v4563 = vunpack.c.l.s4 1934713408
        %v4564 = vunpack.c.0.s8 %v4563
        %v4565 = vlaneseq
        %v4566 = vshrl.u32 %v4565, 7
        %v4567 = vsub.s32 %v4564, %v4566
        %v4568 = vrot.slane %v4554, %v4567
        %v4569 = vcombine.low %v4536, %v4552
        %v4570 = vcombine.high %v4536, %v4552
        %v4572 = vunpack.c.l.s4 1934713408
        %v4573 = vunpack.c.0.s8 %v4572
        %v4574 = vlaneseq
        %v4575 = vshrl.u32 %v4574, 7
        %v4576 = vsub.s32 %v4573, %v4575
        %v4577 = vrot.slane %v4569, %v4576
        %v4579 = vunpack.c.l.s4 1934713408
        %v4580 = vunpack.c.0.s8 %v4579
        %v4581 = vlaneseq
        %v4582 = vshrl.u32 %v4581, 7
        %v4583 = vsub.s32 %v4580, %v4582
        %v4584 = vrot.slane %v4570, %v4583
        %v4585 = vcombine.high %v4561, 0.0
        %v4586 = vcombine.high %v4568, 0.0
        %v4587 = vcombine.high %v4577, 0.0
        %v4588 = vcombine.high %v4584, 0.0
        %v4589 = vcombine.low %v4561, %v4568
        %v4591 = vunpack.c.l.s4 1983009808
        %v4592 = vunpack.c.0.s8 %v4591
        %v4593 = vlaneseq
        %v4594 = vshrl.u32 %v4593, 7
        %v4595 = vsub.s32 %v4592, %v4594
        %v4596 = vrot.slane %v4589, %v4595
        %v4597 = vcombine.low %v4585, %v4586
        %v4599 = vunpack.c.l.s4 1983009808
        %v4600 = vunpack.c.0.s8 %v4599
        %v4601 = vlaneseq
        %v4602 = vshrl.u32 %v4601, 7
        %v4603 = vsub.s32 %v4600, %v4602
        %v4604 = vrot.slane %v4597, %v4603
        %v4605 = vcombine.low %v4577, %v4584
        %v4607 = vunpack.c.l.s4 1983009808
        %v4608 = vunpack.c.0.s8 %v4607
        %v4609 = vlaneseq
        %v4610 = vshrl.u32 %v4609, 7
        %v4611 = vsub.s32 %v4608, %v4610
        %v4612 = vrot.slane %v4605, %v4611
        %v4613 = vcombine.low %v4587, %v4588
        %v4615 = vunpack.c.l.s4 1983009808
        %v4616 = vunpack.c.0.s8 %v4615
        %v4617 = vlaneseq
        %v4618 = vshrl.u32 %v4617, 7
        %v4619 = vsub.s32 %v4616, %v4618
        %v4620 = vrot.slane %v4613, %v4619
        %v4621 = vcombine.low %v4596, %v4604
        %v4622 = vcombine.high %v4596, %v4604
        %v4624 = vunpack.c.l.s4 1934713408
        %v4625 = vunpack.c.0.s8 %v4624
        %v4626 = vlaneseq
        %v4627 = vshrl.u32 %v4626, 7
        %v4628 = vsub.s32 %v4625, %v4627
        %v4629 = vrot.slane %v4621, %v4628
        %v4631 = vunpack.c.l.s4 1934713408
        %v4632 = vunpack.c.0.s8 %v4631
        %v4633 = vlaneseq
        %v4634 = vshrl.u32 %v4633, 7
        %v4635 = vsub.s32 %v4632, %v4634
        %v4636 = vrot.slane %v4622, %v4635
        %v4637 = vcombine.low %v4612, %v4620
        %v4638 = vcombine.high %v4612, %v4620
        %v4640 = vunpack.c.l.s4 1934713408
        %v4641 = vunpack.c.0.s8 %v4640
        %v4642 = vlaneseq
        %v4643 = vshrl.u32 %v4642, 7
        %v4644 = vsub.s32 %v4641, %v4643
        %v4645 = vrot.slane %v4637, %v4644
        %v4647 = vunpack.c.l.s4 1934713408
        %v4648 = vunpack.c.0.s8 %v4647
        %v4649 = vlaneseq
        %v4650 = vshrl.u32 %v4649, 7
        %v4651 = vsub.s32 %v4648, %v4650
        %v4652 = vrot.slane %v4638, %v4651
        %v4653 = vcombine.low %v4629, %v4645
        %v4654 = vcombine.high %v4629, %v4645
        %v4655 = vcombine.low %v4636, %v4652
        %v4656 = vcombine.high %v4636, %v4652
        %4658 = vrot.lane.b32.xlu0 %v4654, 8
        %v4659 = vpop.permute.xlu0 %4658
        %4662 = vrot.lane.b32.xlu0 %v4655, 16
        %v4663 = vpop.permute.xlu0 %4662
        %4666 = vrot.lane.b32.xlu0 %v4656, 24
        %v4667 = vpop.permute.xlu0 %4666
        %v4669 = vsel %vm2278, %v4653, %v4659
        %v4670 = vsel %vm3068, %v4669, %v4663
        %v4671 = vsel %vm3070, %v4670, %v4667
        %v4673 = vlaneseq
        %v4674 = vshrl.u32 %v4673, 7
        %v4675 = vsub.s32 0, %v4674
        %v4676 = vrot.slane %v3202, %v4675
        %v4679 = vsel %vm1614, %v4671, 0
        %4681 = vmatprep.subr.mxu0 0.0
        %4682 = vmatpush1.msra.mxu0 %v3198
        %4683 = vmatprep.subr.mxu0 0.0
        %4684 = vmatpush1.msra.mxu0 %v3199
        %4685 = vmatprep.subr.mxu0 0.0
        %4686 = vmatpush1.msra.mxu0 %v3200
        %4687 = vmatprep.subr.mxu0 0.0
        %4688 = vmatpush1.msra.mxu0 %v3201
        %4689 = vmatprep.subr.mxu0 0.0
        %4690 = vmatpush1.msra.mxu0 0.0
        %4691 = vmatprep.subr.mxu0 0.0
        %4692 = vmatpush1.msra.mxu0 0.0
        %4693 = vmatprep.subr.mxu0 0.0
        %4694 = vmatpush1.msra.mxu0 0.0
        %4695 = vmatprep.subr.mxu0 0.0
        %4696 = vmatpush1.msra.mxu0 0.0
        %4697 = vmatprep.subr.mxu0 0.0
        %4698 = vmatpush1.msra.mxu0 0.0
        %4699 = vmatprep.subr.mxu0 0.0
        %4700 = vmatpush1.msra.mxu0 0.0
        %4701 = vmatprep.subr.mxu0 0.0
        %4702 = vmatpush1.msra.mxu0 0.0
        %4703 = vmatprep.subr.mxu0 0.0
        %4704 = vmatpush1.msra.mxu0 0.0
        %4705 = vmatprep.subr.mxu0 0.0
        %4706 = vmatpush1.msra.mxu0 0.0
        %4707 = vmatprep.subr.mxu0 0.0
        %4708 = vmatpush1.msra.mxu0 0.0
        %4709 = vmatprep.subr.mxu0 0.0
        %4710 = vmatpush1.msra.mxu0 0.0
        %4711 = vmatprep.subr.mxu0 0.0
        %4712 = vmatpush1.msra.mxu0 0.0
        %4713 = vmatprep.subr.mxu0 0.0
        %4714 = vmatpush1.msra.mxu0 0.0
        %4715 = vmatprep.subr.mxu0 0.0
        %4716 = vmatpush1.msra.mxu0 0.0
        %4717 = vmatprep.subr.mxu0 0.0
        %4718 = vmatpush1.msra.mxu0 0.0
        %4719 = vmatprep.subr.mxu0 0.0
        %4720 = vmatpush1.msra.mxu0 0.0
        %4721 = vmatprep.subr.mxu0 0.0
        %4722 = vmatpush1.msra.mxu0 0.0
        %4723 = vmatprep.subr.mxu0 0.0
        %4724 = vmatpush1.msra.mxu0 0.0
        %4725 = vmatprep.subr.mxu0 0.0
        %4726 = vmatpush1.msra.mxu0 0.0
        %4727 = vmatprep.subr.mxu0 0.0
        %4728 = vmatpush1.msra.mxu0 0.0
        %4729 = vmatprep.subr.mxu0 0.0
        %4730 = vmatpush1.msra.mxu0 0.0
        %4731 = vmatprep.subr.mxu0 0.0
        %4732 = vmatpush1.msra.mxu0 0.0
        %4733 = vmatprep.subr.mxu0 0.0
        %4734 = vmatpush1.msra.mxu0 0.0
        %4735 = vmatprep.subr.mxu0 0.0
        %4736 = vmatpush1.msra.mxu0 0.0
        %4737 = vmatprep.subr.mxu0 0.0
        %4738 = vmatpush1.msra.mxu0 0.0
        %4739 = vmatprep.subr.mxu0 0.0
        %4740 = vmatpush1.msra.mxu0 0.0
        %4741 = vmatprep.subr.mxu0 0.0
        %4742 = vmatpush1.msra.mxu0 0.0
        %4743 = vmatprep.subr.mxu0 0.0
        %4744 = vmatpush1.msra.mxu0 0.0
        %4745 = vmatprep.mubr.f32.mxu0 0.0
        %4746 = vmatmul.mubr.f32.gmra.mrb[0].mxu0 %v4679
        %v4747 = vpop.f32.mrb[0].mxu0
        %v4748 = vadd.f32 %v4676, %v4747
        %v4749 = vpop.f32.mrb[0].mxu0
        %4750 = vdwg.mxu0
        %v4751 = vadd.f32 %v3181, %v4748
        %v4752 = vld [vmem:[%s1557] sm:$0x1]
        %v4753 = vld [vmem:[%s1560] sm:$0x1]
        %v4754 = vsel %vm1614, %v4751, 0.0
        %4755 = vadd.xlane.f32.xlu0 %v4754
        %v4756 = vpop.xlane.xlu0 %4755
        %v4757 = vmul.f32 %v4756, %v3157
        %v4758 = vsub.f32 %v4751, %v4757
        %v4759 = vmul.f32 %v4758, %v4758
        %v4760 = vsel %vm1614, %v4759, 0.0
        %4761 = vadd.xlane.f32.xlu0 %v4760
        %v4762 = vpop.xlane.xlu0 %4761
        %v4763 = vmul.f32 %v4762, %v3157
        %v4764 = vadd.f32 %v4763, 1e-05
        %v4765 = vrsqrt.pop %v4764
        %v4766 = vmul.f32 %v4758, %v4765
        %v4768 = vlaneseq
        %v4769 = vshrl.u32 %v4768, 7
        %v4770 = vsub.s32 0, %v4769
        %v4771 = vrot.slane %v4752, %v4770
        %v4773 = vmul.f32 %v4766, %v4771
        %v4775 = vlaneseq
        %v4776 = vshrl.u32 %v4775, 7
        %v4777 = vsub.s32 0, %v4776
        %v4778 = vrot.slane %v4753, %v4777
        %v4780 = vadd.f32 %v4773, %v4778
        %v4781 = vld [vmem:[%s1319] sm:$0xff]
        %v4782 = vld [vmem:[%s1319 + $0x8] sm:$0xff]
        %v4783 = vld [vmem:[%s1319 + $0x10] sm:$0xff]
        %v4784 = vld [vmem:[%s1319 + $0x18] sm:$0xff]
        %v4785 = vld [vmem:[%s1563] sm:$0x1]
        %v4787 = vlaneseq
        %v4788 = vshrl.u32 %v4787, 7
        %v4789 = vsub.s32 0, %v4788
        %v4790 = vrot.slane %v4785, %v4789
        %v4793 = vsel %vm1614, %v4780, 0
        %4795 = vmatprep.subr.mxu0 0.0
        %4796 = vmatpush1.msra.mxu0 %v4781
        %4797 = vmatprep.subr.mxu0 0.0
        %4798 = vmatpush1.msra.mxu0 %v4782
        %4799 = vmatprep.subr.mxu0 0.0
        %4800 = vmatpush1.msra.mxu0 %v4783
        %4801 = vmatprep.subr.mxu0 0.0
        %4802 = vmatpush1.msra.mxu0 %v4784
        %4803 = vmatprep.subr.mxu0 0.0
        %4804 = vmatpush1.msra.mxu0 0.0
        %4805 = vmatprep.subr.mxu0 0.0
        %4806 = vmatpush1.msra.mxu0 0.0
        %4807 = vmatprep.subr.mxu0 0.0
        %4808 = vmatpush1.msra.mxu0 0.0
        %4809 = vmatprep.subr.mxu0 0.0
        %4810 = vmatpush1.msra.mxu0 0.0
        %4811 = vmatprep.subr.mxu0 0.0
        %4812 = vmatpush1.msra.mxu0 0.0
        %4813 = vmatprep.subr.mxu0 0.0
        %4814 = vmatpush1.msra.mxu0 0.0
        %4815 = vmatprep.subr.mxu0 0.0
        %4816 = vmatpush1.msra.mxu0 0.0
        %4817 = vmatprep.subr.mxu0 0.0
        %4818 = vmatpush1.msra.mxu0 0.0
        %4819 = vmatprep.subr.mxu0 0.0
        %4820 = vmatpush1.msra.mxu0 0.0
        %4821 = vmatprep.subr.mxu0 0.0
        %4822 = vmatpush1.msra.mxu0 0.0
        %4823 = vmatprep.subr.mxu0 0.0
        %4824 = vmatpush1.msra.mxu0 0.0
        %4825 = vmatprep.subr.mxu0 0.0
        %4826 = vmatpush1.msra.mxu0 0.0
        %4827 = vmatprep.subr.mxu0 0.0
        %4828 = vmatpush1.msra.mxu0 0.0
        %4829 = vmatprep.subr.mxu0 0.0
        %4830 = vmatpush1.msra.mxu0 0.0
        %4831 = vmatprep.subr.mxu0 0.0
        %4832 = vmatpush1.msra.mxu0 0.0
        %4833 = vmatprep.subr.mxu0 0.0
        %4834 = vmatpush1.msra.mxu0 0.0
        %4835 = vmatprep.subr.mxu0 0.0
        %4836 = vmatpush1.msra.mxu0 0.0
        %4837 = vmatprep.subr.mxu0 0.0
        %4838 = vmatpush1.msra.mxu0 0.0
        %4839 = vmatprep.subr.mxu0 0.0
        %4840 = vmatpush1.msra.mxu0 0.0
        %4841 = vmatprep.subr.mxu0 0.0
        %4842 = vmatpush1.msra.mxu0 0.0
        %4843 = vmatprep.subr.mxu0 0.0
        %4844 = vmatpush1.msra.mxu0 0.0
        %4845 = vmatprep.subr.mxu0 0.0
        %4846 = vmatpush1.msra.mxu0 0.0
        %4847 = vmatprep.subr.mxu0 0.0
        %4848 = vmatpush1.msra.mxu0 0.0
        %4849 = vmatprep.subr.mxu0 0.0
        %4850 = vmatpush1.msra.mxu0 0.0
        %4851 = vmatprep.subr.mxu0 0.0
        %4852 = vmatpush1.msra.mxu0 0.0
        %4853 = vmatprep.subr.mxu0 0.0
        %4854 = vmatpush1.msra.mxu0 0.0
        %4855 = vmatprep.subr.mxu0 0.0
        %4856 = vmatpush1.msra.mxu0 0.0
        %4857 = vmatprep.subr.mxu0 0.0
        %4858 = vmatpush1.msra.mxu0 0.0
        %4859 = vmatprep.mubr.f32.mxu0 0.0
        %4860 = vmatmul.mubr.f32.gmra.mrb[0].mxu0 %v4793
        %v4861 = vpop.f32.mrb[0].mxu0
        %v4862 = vadd.f32 %v4790, %v4861
        %v4863 = vpop.f32.mrb[0].mxu0
        %4864 = vdwg.mxu0
        %v4865 = vmax.f32 %v4862, 0.0
        %v4866 = vld [vmem:[%s1568] sm:$0xff]
        %v4867 = vld [vmem:[%s1568 + $0x8] sm:$0xff]
        %v4868 = vld [vmem:[%s1568 + $0x10] sm:$0xff]
        %v4869 = vld [vmem:[%s1568 + $0x18] sm:$0xff]
        %v4870 = vld [vmem:[%s1568 + $0x20] sm:$0xff]
        %v4871 = vld [vmem:[%s1568 + $0x28] sm:$0xff]
        %v4872 = vld [vmem:[%s1568 + $0x30] sm:$0xff]
        %v4873 = vld [vmem:[%s1568 + $0x38] sm:$0xff]
        %v4874 = vld [vmem:[%s1571] sm:$0x1]
        %v4876 = vlaneseq
        %v4877 = vshrl.u32 %v4876, 7
        %v4878 = vsub.s32 0, %v4877
        %v4879 = vrot.slane %v4874, %v4878
        %vm4881 = vcmask 523264
        %v4883 = vsel %vm4881, %v4865, 0
        %4885 = vmatprep.subr.mxu0 0.0
        %4886 = vmatpush1.msra.mxu0 %v4866
        %4887 = vmatprep.subr.mxu0 0.0
        %4888 = vmatpush1.msra.mxu0 %v4867
        %4889 = vmatprep.subr.mxu0 0.0
        %4890 = vmatpush1.msra.mxu0 %v4868
        %4891 = vmatprep.subr.mxu0 0.0
        %4892 = vmatpush1.msra.mxu0 %v4869
        %4893 = vmatprep.subr.mxu0 0.0
        %4894 = vmatpush1.msra.mxu0 %v4870
        %4895 = vmatprep.subr.mxu0 0.0
        %4896 = vmatpush1.msra.mxu0 %v4871
        %4897 = vmatprep.subr.mxu0 0.0
        %4898 = vmatpush1.msra.mxu0 %v4872
        %4899 = vmatprep.subr.mxu0 0.0
        %4900 = vmatpush1.msra.mxu0 %v4873
        %4901 = vmatprep.subr.mxu0 0.0
        %4902 = vmatpush1.msra.mxu0 0.0
        %4903 = vmatprep.subr.mxu0 0.0
        %4904 = vmatpush1.msra.mxu0 0.0
        %4905 = vmatprep.subr.mxu0 0.0
        %4906 = vmatpush1.msra.mxu0 0.0
        %4907 = vmatprep.subr.mxu0 0.0
        %4908 = vmatpush1.msra.mxu0 0.0
        %4909 = vmatprep.subr.mxu0 0.0
        %4910 = vmatpush1.msra.mxu0 0.0
        %4911 = vmatprep.subr.mxu0 0.0
        %4912 = vmatpush1.msra.mxu0 0.0
        %4913 = vmatprep.subr.mxu0 0.0
        %4914 = vmatpush1.msra.mxu0 0.0
        %4915 = vmatprep.subr.mxu0 0.0
        %4916 = vmatpush1.msra.mxu0 0.0
        %4917 = vmatprep.subr.mxu0 0.0
        %4918 = vmatpush1.msra.mxu0 0.0
        %4919 = vmatprep.subr.mxu0 0.0
        %4920 = vmatpush1.msra.mxu0 0.0
        %4921 = vmatprep.subr.mxu0 0.0
        %4922 = vmatpush1.msra.mxu0 0.0
        %4923 = vmatprep.subr.mxu0 0.0
        %4924 = vmatpush1.msra.mxu0 0.0
        %4925 = vmatprep.subr.mxu0 0.0
        %4926 = vmatpush1.msra.mxu0 0.0
        %4927 = vmatprep.subr.mxu0 0.0
        %4928 = vmatpush1.msra.mxu0 0.0
        %4929 = vmatprep.subr.mxu0 0.0
        %4930 = vmatpush1.msra.mxu0 0.0
        %4931 = vmatprep.subr.mxu0 0.0
        %4932 = vmatpush1.msra.mxu0 0.0
        %4933 = vmatprep.subr.mxu0 0.0
        %4934 = vmatpush1.msra.mxu0 0.0
        %4935 = vmatprep.subr.mxu0 0.0
        %4936 = vmatpush1.msra.mxu0 0.0
        %4937 = vmatprep.subr.mxu0 0.0
        %4938 = vmatpush1.msra.mxu0 0.0
        %4939 = vmatprep.subr.mxu0 0.0
        %4940 = vmatpush1.msra.mxu0 0.0
        %4941 = vmatprep.subr.mxu0 0.0
        %4942 = vmatpush1.msra.mxu0 0.0
        %4943 = vmatprep.subr.mxu0 0.0
        %4944 = vmatpush1.msra.mxu0 0.0
        %4945 = vmatprep.subr.mxu0 0.0
        %4946 = vmatpush1.msra.mxu0 0.0
        %4947 = vmatprep.subr.mxu0 0.0
        %4948 = vmatpush1.msra.mxu0 0.0
        %4949 = vmatprep.mubr.f32.mxu0 0.0
        %4950 = vmatmul.mubr.f32.gmra.mrb[0].mxu0 %v4883
        %v4951 = vpop.f32.mrb[0].mxu0
        %v4952 = vadd.f32 %v4879, %v4951
        %v4953 = vpop.f32.mrb[0].mxu0
        %4954 = vdwg.mxu0
        %v4955 = vadd.f32 %v4780, %v4952
        %v4956 = vld [vmem:[%s1574] sm:$0x1]
        %v4957 = vld [vmem:[%s1577] sm:$0x1]
        %v4958 = vsel %vm1614, %v4955, 0.0
        %4959 = vadd.xlane.f32.xlu0 %v4958
        %v4960 = vpop.xlane.xlu0 %4959
        %v4961 = vmul.f32 %v4960, %v3157
        %v4962 = vsub.f32 %v4955, %v4961
        %v4963 = vmul.f32 %v4962, %v4962
        %v4964 = vsel %vm1614, %v4963, 0.0
        %4965 = vadd.xlane.f32.xlu0 %v4964
        %v4966 = vpop.xlane.xlu0 %4965
        %v4967 = vmul.f32 %v4966, %v3157
        %v4968 = vadd.f32 %v4967, 1e-05
        %v4969 = vrsqrt.pop %v4968
        %v4970 = vmul.f32 %v4962, %v4969
        %v4972 = vlaneseq
        %v4973 = vshrl.u32 %v4972, 7
        %v4974 = vsub.s32 0, %v4973
        %v4975 = vrot.slane %v4956, %v4974
        %v4977 = vmul.f32 %v4970, %v4975
        %v4979 = vlaneseq
        %v4980 = vshrl.u32 %v4979, 7
        %v4981 = vsub.s32 0, %v4980
        %v4982 = vrot.slane %v4957, %v4981
        %v4984 = vadd.f32 %v4977, %v4982
        %4985 = vst.msk [vmem:[%s1506] sm:$0xff] %vm1614, %v4984
        %s4986 = sand.u32 %s890, 1
        %s4987 = scalar_lea.sflag [#allocation4], %s4986
        %s4988 = sand.u32 %s890, 1
        %s4989 = smul.addr %s4988, 8
        %s4990 = scalar_lea.vmem [#allocation17], %s4989
        // Predicated region
        $region181: #{tpu_custom_call.1} parent=139 // pred_check
          %p4991 = pneg %p900
        $region182: #{tpu_custom_call.1} parent=139 // pred_check_branch
          %4993 = sbr.rel (%p4991) target = $region184
        $region183: #{tpu_custom_call.1} parent=139 // pred_region
          %s4995 = ssub.s32 128, 128
          %4996 = vsyncadd %s4987, %s4995
          %s4997 = smul.addr %s94, 128
          %s4998 = scalar_lea.hbm %s61, %s4997
          %s5000 = sshll.u32 %s4990, 4
          %s5001 = int_to_ptr.vmem [resolvable:$true] %s5000
          %5003 = dma.vmem_to_hbm [thread:$0]  %s5001, 128, %s4998, %s4987
        $region184: #{tpu_custom_call.1} parent=139 // pred_fallthru
          _
      $region140: #{tpu_custom_call.1} parent=5 // pred_fallthru
        _
      %p5004 = scmp.le.s32.totalorder 2, %s85
      // Predicated region
      $region185: #{tpu_custom_call.1} parent=5 // pred_check
        %p5005 = pneg %p5004
      $region186: #{tpu_custom_call.1} parent=5 // pred_check_branch
        %5007 = sbr.rel (%p5005) target = $region188
      $region187: #{tpu_custom_call.1} parent=5 // pred_region
        %s5008 = ssub.s32 %s85, 2
        // Predicated region
        $region189: #{tpu_custom_call.1} parent=187 // pred_check
          %p5009 = pneg %p906
        $region190: #{tpu_custom_call.1} parent=187 // pred_check_branch
          %5011 = sbr.rel (%p5009) target = $region192
        $region191: #{tpu_custom_call.1} parent=187 // pred_region
          %s5012 = sand.u32 %s891, 1
          %s5013 = scalar_lea.sflag [#allocation4], %s5012
          %s5014 = sand.u32 %s891, 1
          %s5015 = smul.addr %s5014, 8
          %s5016 = scalar_lea.vmem [#allocation17], %s5015
          %5017 = dma.done %s5013, 128
        $region192: #{tpu_custom_call.1} parent=187 // pred_fallthru
          _
      $region188: #{tpu_custom_call.1} parent=5 // pred_fallthru
        _
    $region6: #{tpu_custom_call.1} parent=1 // loop_footer
      %s89 = sadd.s32 1, %s85
    $region7: #{tpu_custom_call.1} parent=1 // loop_footer_branch
      %84 = sbr.rel target = $region3
    $region8: #{tpu_custom_call.1} parent=1 // loop_exit
      _
    %5018 = vsyncpa [#allocation3], 1
    %s5019 = scalar_lea.sflag [#allocation3], 1
    %5020 = vsyncpa %s5019, 1
    %5021 = vsyncpa [#allocation6], 1
    %s5022 = scalar_lea.sflag [#allocation6], 1
    %5023 = vsyncpa %s5022, 1
    %5024 = vsyncpa [#allocation9], 1
    %s5025 = scalar_lea.sflag [#allocation9], 1
    %5026 = vsyncpa %s5025, 1
    %5027 = vsyncpa [#allocation12], 1
    %s5028 = scalar_lea.sflag [#allocation12], 1
    %5029 = vsyncpa %s5028, 1
    %5030 = vsyncpa [#allocation15], 1
    %s5031 = scalar_lea.sflag [#allocation15], 1
    %5032 = vsyncpa %s5031, 1
    %5033 = vsyncpa [#allocation4], 1
    %s5034 = scalar_lea.sflag [#allocation4], 1
    %5035 = vsyncpa %s5034, 1

</llo_original>
